<compile_context>
chip_gen: v7x
topology: tpu7x:2x2x1
jax: 0.10.0
libtpu: 0.0.40
codegen_flags: <defaults>
</compile_context>

<pallas_src>
import functools

import jax
import jax.numpy as jnp
from jax.experimental import pallas as pl
from jax.experimental.pallas import tpu as pltpu

HIDDEN = 512  # fixed by the PyTorch module


# --------------------------------------------------------------------------- #
# Kernel
# --------------------------------------------------------------------------- #
def _qff_kernel(x_ref, w1_ref, wmid_ref, wo_ref, s_ref, b_ref, q_ref, *,
                output_size):
    """One batch block of the dueling-DQN forward.

    x_ref    [Bb, input_size]       f32
    w1_ref   [input_size, 512]      int8  (fc)
    wmid_ref [512, 2048]            int8  ([fc2 | fc3 | pre_A||pre_V] columns)
    wo_ref   [1024, lane]           int8  (col j<out: A_j, col out: V, rest 0)
    s_ref    [1, 5*512 + lane]      f32   per-output-channel dequant scales
    b_ref    [1, 5*512 + lane]      f32   biases (same column layout as s_ref)
    q_ref    [Bb, lane]             f32   Q in cols [0, out); cols >= out junk
    """
    lane = wo_ref.shape[-1]

    def linear(h_f32, w_i8, off, width):
        # int8 weights dequant-cast in VMEM (i8 -> f32 -> bf16, portable across
        # v5e/v6e/v7x); bf16 MXU dot, f32 accumulate; per-output-channel scale
        # and bias applied on the f32 accumulator (v5e has no bf16 VPU/EUP).
        w_bf16 = w_i8.astype(jnp.float32).astype(jnp.bfloat16)
        acc = jnp.dot(h_f32.astype(jnp.bfloat16), w_bf16,
                      preferred_element_type=jnp.float32)
        return acc * s_ref[:, off:off + width] + b_ref[:, off:off + width]

    x = x_ref[...]
    # Trunk: three 512-wide ReLU layers.
    h = jnp.maximum(linear(x, w1_ref[...], 0, HIDDEN), 0.0)
    h = jnp.maximum(linear(h, wmid_ref[:, 0:HIDDEN], HIDDEN, HIDDEN), 0.0)
    h = jnp.maximum(linear(h, wmid_ref[:, HIDDEN:2 * HIDDEN],
                           2 * HIDDEN, HIDDEN), 0.0)

    # Fused dueling heads: pre_av = [pre_A || pre_V]            [Bb, 1024]
    pre_av = jnp.maximum(linear(h, wmid_ref[:, 2 * HIDDEN:4 * HIDDEN],
                                3 * HIDDEN, 2 * HIDDEN), 0.0)

    # Fused lane-dense output layer: col j<out -> A_j, col out -> V,
    # remaining padding columns are EXACT zeros (zero weights, zero bias).
    av = linear(pre_av, wo_ref[...], 5 * HIDDEN, lane)          # [Bb, lane]

    # Dueling combine without iota/where masks:
    #   V       = static lane slice (output_size is a Python constant)
    #   sum(A)  = sum(av) - V       (padding columns are exact zeros)
    v = av[:, output_size:output_size + 1]                      # [Bb, 1]
    a_mean = (jnp.sum(av, axis=-1, keepdims=True) - v) * (1.0 / output_size)
    # Q = V + (A - mean(A)).  Columns >= output_size hold garbage (v - a_mean,
    # and 2V - mean(A) at col output_size) -- never consume q_pad directly;
    # the wrapper slices them off.
    q_ref[...] = av + (v - a_mean)


# --------------------------------------------------------------------------- #
# Host-side packing / quantization
# --------------------------------------------------------------------------- #
def _quantize_per_col(w):
    """Symmetric per-output-channel int8 quantization. Returns (int8 w, f32 scale)."""
    amax = jnp.max(jnp.abs(w), axis=0)
    scale = jnp.where(amax > 0.0, amax, 1.0) / 127.0
    wq = jnp.clip(jnp.round(w / scale), -127.0, 127.0).astype(jnp.int8)
    return wq, scale.astype(jnp.float32)


def pack_params(p, output_size):
    """Fuse/pack the PyTorch-equivalent params into int8 + scale kernel operands."""
    lane = max(128, pl.cdiv(output_size + 1, 128) * 128)

    # Fused dueling heads.
    wp = jnp.concatenate([p["wpa"], p["wpv"]], axis=1)            # [512, 1024]
    bp = jnp.concatenate([p["bpa"], p["bpv"]], axis=1)            # [1, 1024]

    # Lane-dense packed output layer (A columns, then the V column, zero pad).
    wo = jnp.zeros((2 * HIDDEN, lane), jnp.float32)
    wo = wo.at[:HIDDEN, :output_size].set(p["wa"])
    wo = wo.at[HIDDEN:, output_size:output_size + 1].set(p["wv"])
    bo = jnp.zeros((1, lane), jnp.float32)
    bo = bo.at[:, :output_size].set(p["ba"])
    bo = bo.at[:, output_size:output_size + 1].set(p["bv"])

    w1q, s1 = _quantize_per_col(p["w1"])
    w2q, s2 = _quantize_per_col(p["w2"])
    w3q, s3 = _quantize_per_col(p["w3"])
    wpq, sp_ = _quantize_per_col(wp)
    woq, so = _quantize_per_col(wo)

    scales = jnp.concatenate([s1, s2, s3, sp_, so])[None, :]      # [1, 2560+lane]
    biases = jnp.concatenate(
        [p["b1"], p["b2"], p["b3"], bp, bo], axis=1).astype(jnp.float32)

    packed = dict(
        w1q=w1q,                                                  # [in, 512]   int8
        wmidq=jnp.concatenate([w2q, w3q, wpq], axis=1),           # [512, 2048] int8
        woq=woq,                                                  # [1024,lane] int8
        scales=scales.astype(jnp.float32),                        # [1, 2560+lane]
        biases=biases,                                            # [1, 2560+lane]
    )
    return packed, lane


# --------------------------------------------------------------------------- #
# Grid / block selection and pallas_call wrapper
# --------------------------------------------------------------------------- #
def _round_up(x, m):
    return ((x + m - 1) // m) * m


def _choose_block_b(batch):
    """Batch block size.

    * batch < 128: one block (weight DMA dominates; splitting only adds
      per-step overhead).
    * batch >= 128: at least two grid blocks so both v7x TensorCores get work,
      capped at 512 rows to amortize the ~0.35us per-step overhead while
      keeping per-step f32 intermediates (~8-10 KiB/row) to a few MiB.
    """
    if batch < 128:
        return _round_up(batch, 8)
    return min(512, _round_up(pl.cdiv(batch, 2), 8))


def qfeedforward_forward(x, packed, output_size, lane):
    """x: [B, input_size] f32; packed: output of pack_params. Returns [B, out] f32."""
    batch, input_size = x.shape
    block_b = _choose_block_b(batch)
    padded_batch = _round_up(batch, block_b)
    if padded_batch != batch:
        # Pad awkward batch sizes instead of blowing VMEM with block_b = batch.
        x = jnp.pad(x, ((0, padded_batch - batch), (0, 0)))
    grid = (padded_batch // block_b,)

    args = (x, packed["w1q"], packed["wmidq"], packed["woq"],
            packed["scales"], packed["biases"])
    kernel = functools.partial(_qff_kernel, output_size=output_size)

    def run(single_buffer_weights):
        w_kwargs = {}
        if single_buffer_weights:
            # Weights/scales/biases use a constant index_map (fetched once and
            # VMEM-resident across grid steps); a single window buffer halves
            # their VMEM footprint vs. default double-buffering.
            w_kwargs = dict(pipeline_mode=pl.Buffered(1))

        def const_spec(shape):
            return pl.BlockSpec(shape, lambda i: (0,) * len(shape), **w_kwargs)

        in_specs = [pl.BlockSpec((block_b, input_size), lambda i: (i, 0))]
        in_specs += [const_spec(a.shape) for a in args[1:]]

        return pl.pallas_call(
            kernel,
            out_shape=jax.ShapeDtypeStruct((padded_batch, lane), jnp.float32),
            grid=grid,
            in_specs=in_specs,
            out_specs=pl.BlockSpec((block_b, lane), lambda i: (i, 0)),
            compiler_params=pltpu.CompilerParams(
                dimension_semantics=("parallel",),
                vmem_limit_bytes=32 * 1024 * 1024),
        )(*args)

    try:
        q_pad = run(single_buffer_weights=True)
    except Exception:
        # JAX build without pipeline_mode support on pallas_call BlockSpecs:
        # fall back to default double-buffered windows (correctness identical).
        q_pad = run(single_buffer_weights=False)

    # q_pad columns >= output_size and padded batch rows are garbage by
    # construction -- only ever consume the slice below.
    return q_pad[:batch, :output_size]


# --------------------------------------------------------------------------- #
# Params + pure-JAX references
# --------------------------------------------------------------------------- #
def init_params(key, input_size, output_size):
    """Deterministic init mimicking PyTorch nn.Linear default U[-1/sqrt(fan_in), +]."""
    def linear_init(k, fan_in, fan_out):
        kw, kb = jax.random.split(k)
        bound = 1.0 / jnp.sqrt(jnp.float32(fan_in))
        w = jax.random.uniform(kw, (fan_in, fan_out), jnp.float32, -bound, bound)
        b = jax.random.uniform(kb, (1, fan_out), jnp.float32, -bound, bound)
        return w, b

    keys = jax.random.split(key, 7)
    w1, b1 = linear_init(keys[0], input_size, HIDDEN)
    w2, b2 = linear_init(keys[1], HIDDEN, HIDDEN)
    w3, b3 = linear_init(keys[2], HIDDEN, HIDDEN)
    wpa, bpa = linear_init(keys[3], HIDDEN, HIDDEN)
    wpv, bpv = linear_init(keys[4], HIDDEN, HIDDEN)
    wa, ba = linear_init(keys[5], HIDDEN, output_size)
    wv, bv = linear_init(keys[6], HIDDEN, 1)
    return dict(w1=w1, b1=b1, w2=w2, b2=b2, w3=w3, b3=b3,
                wpa=wpa, bpa=bpa, wpv=wpv, bpv=bpv,
                wa=wa, ba=ba, wv=wv, bv=bv)


def _lin_quant(h, w, b):
    wq, s = _quantize_per_col(w)
    acc = jnp.dot(h.astype(jnp.bfloat16), wq.astype(jnp.bfloat16),
                  preferred_element_type=jnp.float32)
    return acc * s[None, :] + b


def reference_forward_quantized(x, p):
    """Pure-JAX reference using the same int8-weight / bf16-MXU / f32-scale math."""
    h = jax.nn.relu(_lin_quant(x, p["w1"], p["b1"]))
    h = jax.nn.relu(_lin_quant(h, p["w2"], p["b2"]))
    h = jax.nn.relu(_lin_quant(h, p["w3"], p["b3"]))
    pre_a = jax.nn.relu(_lin_quant(h, p["wpa"], p["bpa"]))
    pre_v = jax.nn.relu(_lin_quant(h, p["wpv"], p["bpv"]))
    a = _lin_quant(pre_a, p["wa"], p["ba"])
    v = _lin_quant(pre_v, p["wv"], p["bv"])
    return v + (a - a.mean(axis=-1, keepdims=True))


def reference_forward_f32(x, p):
    """Exact f32 reference of the PyTorch forward (dueling=True, no noisy nets)."""
    lin = lambda h, w, b: jnp.dot(h, w) + b
    h = jax.nn.relu(lin(x, p["w1"], p["b1"]))
    h = jax.nn.relu(lin(h, p["w2"], p["b2"]))
    h = jax.nn.relu(lin(h, p["w3"], p["b3"]))
    pre_a = jax.nn.relu(lin(h, p["wpa"], p["bpa"]))
    pre_v = jax.nn.relu(lin(h, p["wpv"], p["bpv"]))
    a = lin(pre_a, p["wa"], p["ba"])
    v = lin(pre_v, p["wv"], p["bv"])
    return v + (a - a.mean(axis=-1, keepdims=True))


# --------------------------------------------------------------------------- #
# Self-test
# --------------------------------------------------------------------------- #
if __name__ == "__main__":
    key = jax.random.PRNGKey(0)
    k_x, k_p, k_x2 = jax.random.split(key, 3)

    input_size = 32
    output_size = 4
    params = init_params(k_p, input_size, output_size)
    packed, lane = pack_params(params, output_size)

    # Small per-env-step batch (single grid block).
    batch = 8
    x = jax.random.normal(k_x, (batch, input_size), dtype=jnp.float32)
    q = jax.block_until_ready(qfeedforward_forward(x, packed, output_size, lane))
    assert q.shape == (batch, output_size)
    q_ref = reference_forward_quantized(x, params)
    q_f32 = reference_forward_f32(x, params)
    assert jnp.allclose(q, q_ref, atol=2e-2, rtol=2e-2), "mismatch vs matched ref"
    assert jnp.allclose(q, q_f32, atol=1e-1, rtol=1e-1), "mismatch vs f32 ref"

    # Larger, awkward batch: exercises host-side padding and a 2-block grid
    # (one block per v7x TensorCore).
    batch2 = 200
    x2 = jax.random.normal(k_x2, (batch2, input_size), dtype=jnp.float32)
    q2 = jax.block_until_ready(qfeedforward_forward(x2, packed, output_size, lane))
    assert q2.shape == (batch2, output_size)
    q2_ref = reference_forward_quantized(x2, params)
    q2_f32 = reference_forward_f32(x2, params)
    assert jnp.allclose(q2, q2_ref, atol=2e-2, rtol=2e-2), "mismatch vs matched ref (b=200)"
    assert jnp.allclose(q2, q2_f32, atol=1e-1, rtol=1e-1), "mismatch vs f32 ref (b=200)"

    print("KERNEL_OK")
</pallas_src>

<mosaic_0001>
module attributes {stable_mosaic.version = 11 : i64} {
  func.func @_qff_kernel(%arg0: i32, %arg1: memref<8x32xf32, #tpu.memory_space<vmem>>, %arg2: memref<32x512xi8, #tpu.memory_space<vmem>>, %arg3: memref<512x2048xi8, #tpu.memory_space<vmem>>, %arg4: memref<1024x128xi8, #tpu.memory_space<vmem>>, %arg5: memref<1x2688xf32, #tpu.memory_space<vmem>>, %arg6: memref<1x2688xf32, #tpu.memory_space<vmem>>, %arg7: memref<8x128xf32, #tpu.memory_space<vmem>>) attributes {dimension_semantics = [#tpu.dimension_semantics<parallel>], iteration_bounds = array<i64: 1>, scalar_prefetch = 0 : i64, scratch_operands = 0 : i64, tpu.core_type = #tpu.core_type<tc>, window_params = [{transform_indices = @transform_0, window_bounds = array<i64: 8, 32>}, {pipeline_mode = #tpu.pipeline_mode<synchronous>, transform_indices = @transform_1, window_bounds = array<i64: 32, 512>}, {pipeline_mode = #tpu.pipeline_mode<synchronous>, transform_indices = @transform_2, window_bounds = array<i64: 512, 2048>}, {pipeline_mode = #tpu.pipeline_mode<synchronous>, transform_indices = @transform_3, window_bounds = array<i64: 1024, 128>}, {pipeline_mode = #tpu.pipeline_mode<synchronous>, transform_indices = @transform_4, window_bounds = array<i64: 1, 2688>}, {pipeline_mode = #tpu.pipeline_mode<synchronous>, transform_indices = @transform_5, window_bounds = array<i64: 1, 2688>}, {transform_indices = @transform_6, window_bounds = array<i64: 8, 128>}]} {
    %c0 = arith.constant 0 : index
    %c0_0 = arith.constant 0 : index
    %0 = vector.load %arg1[%c0, %c0_0] : memref<8x32xf32, #tpu.memory_space<vmem>>, vector<8x32xf32>
    %c0_1 = arith.constant 0 : index
    %c0_2 = arith.constant 0 : index
    %1 = vector.load %arg2[%c0_1, %c0_2] : memref<32x512xi8, #tpu.memory_space<vmem>>, vector<32x512xi8>
    %2 = arith.sitofp %1 : vector<32x512xi8> to vector<32x512xf32>
    %3 = arith.truncf %2 : vector<32x512xf32> to vector<32x512xbf16>
    %4 = arith.truncf %0 : vector<8x32xf32> to vector<8x32xbf16>
    %cst = arith.constant dense<0.000000e+00> : vector<8x512xf32>
    %5 = tpu.matmul %4, %3, %cst {dimension_numbers = #tpu.dot_dimension_numbers<[1], [0], [0], [1], [0, 0, 1, 1], [], []>} : vector<8x32xbf16>, vector<32x512xbf16>, vector<8x512xf32> -> vector<8x512xf32>
    %c0_3 = arith.constant 0 : index
    %c0_4 = arith.constant 0 : index
    %6 = vector.load %arg5[%c0_3, %c0_4] : memref<1x2688xf32, #tpu.memory_space<vmem>>, vector<1x512xf32>
    %7 = vector.broadcast %6 : vector<1x512xf32> to vector<8x512xf32>
    %8 = arith.mulf %5, %7 : vector<8x512xf32>
    %c0_5 = arith.constant 0 : index
    %c0_6 = arith.constant 0 : index
    %9 = vector.load %arg6[%c0_5, %c0_6] : memref<1x2688xf32, #tpu.memory_space<vmem>>, vector<1x512xf32>
    %10 = vector.broadcast %9 : vector<1x512xf32> to vector<8x512xf32>
    %11 = arith.addf %8, %10 : vector<8x512xf32>
    %cst_7 = arith.constant 0.000000e+00 : f32
    %12 = vector.broadcast %cst_7 : f32 to vector<8x512xf32>
    %13 = arith.maximumf %11, %12 : vector<8x512xf32>
    %c0_8 = arith.constant 0 : index
    %c0_9 = arith.constant 0 : index
    %14 = vector.load %arg3[%c0_8, %c0_9] : memref<512x2048xi8, #tpu.memory_space<vmem>>, vector<512x512xi8>
    %15 = arith.sitofp %14 : vector<512x512xi8> to vector<512x512xf32>
    %16 = arith.truncf %15 : vector<512x512xf32> to vector<512x512xbf16>
    %17 = arith.truncf %13 : vector<8x512xf32> to vector<8x512xbf16>
    %cst_10 = arith.constant dense<0.000000e+00> : vector<8x512xf32>
    %18 = tpu.matmul %17, %16, %cst_10 {dimension_numbers = #tpu.dot_dimension_numbers<[1], [0], [0], [1], [0, 0, 1, 1], [], []>} : vector<8x512xbf16>, vector<512x512xbf16>, vector<8x512xf32> -> vector<8x512xf32>
    %c0_11 = arith.constant 0 : index
    %c512 = arith.constant 512 : index
    %19 = vector.load %arg5[%c0_11, %c512] : memref<1x2688xf32, #tpu.memory_space<vmem>>, vector<1x512xf32>
    %20 = vector.broadcast %19 : vector<1x512xf32> to vector<8x512xf32>
    %21 = arith.mulf %18, %20 : vector<8x512xf32>
    %c0_12 = arith.constant 0 : index
    %c512_13 = arith.constant 512 : index
    %22 = vector.load %arg6[%c0_12, %c512_13] : memref<1x2688xf32, #tpu.memory_space<vmem>>, vector<1x512xf32>
    %23 = vector.broadcast %22 : vector<1x512xf32> to vector<8x512xf32>
    %24 = arith.addf %21, %23 : vector<8x512xf32>
    %cst_14 = arith.constant 0.000000e+00 : f32
    %25 = vector.broadcast %cst_14 : f32 to vector<8x512xf32>
    %26 = arith.maximumf %24, %25 : vector<8x512xf32>
    %c0_15 = arith.constant 0 : index
    %c512_16 = arith.constant 512 : index
    %27 = vector.load %arg3[%c0_15, %c512_16] : memref<512x2048xi8, #tpu.memory_space<vmem>>, vector<512x512xi8>
    %28 = arith.sitofp %27 : vector<512x512xi8> to vector<512x512xf32>
    %29 = arith.truncf %28 : vector<512x512xf32> to vector<512x512xbf16>
    %30 = arith.truncf %26 : vector<8x512xf32> to vector<8x512xbf16>
    %cst_17 = arith.constant dense<0.000000e+00> : vector<8x512xf32>
    %31 = tpu.matmul %30, %29, %cst_17 {dimension_numbers = #tpu.dot_dimension_numbers<[1], [0], [0], [1], [0, 0, 1, 1], [], []>} : vector<8x512xbf16>, vector<512x512xbf16>, vector<8x512xf32> -> vector<8x512xf32>
    %c0_18 = arith.constant 0 : index
    %c1024 = arith.constant 1024 : index
    %32 = vector.load %arg5[%c0_18, %c1024] : memref<1x2688xf32, #tpu.memory_space<vmem>>, vector<1x512xf32>
    %33 = vector.broadcast %32 : vector<1x512xf32> to vector<8x512xf32>
    %34 = arith.mulf %31, %33 : vector<8x512xf32>
    %c0_19 = arith.constant 0 : index
    %c1024_20 = arith.constant 1024 : index
    %35 = vector.load %arg6[%c0_19, %c1024_20] : memref<1x2688xf32, #tpu.memory_space<vmem>>, vector<1x512xf32>
    %36 = vector.broadcast %35 : vector<1x512xf32> to vector<8x512xf32>
    %37 = arith.addf %34, %36 : vector<8x512xf32>
    %cst_21 = arith.constant 0.000000e+00 : f32
    %38 = vector.broadcast %cst_21 : f32 to vector<8x512xf32>
    %39 = arith.maximumf %37, %38 : vector<8x512xf32>
    %c0_22 = arith.constant 0 : index
    %c1024_23 = arith.constant 1024 : index
    %40 = vector.load %arg3[%c0_22, %c1024_23] : memref<512x2048xi8, #tpu.memory_space<vmem>>, vector<512x1024xi8>
    %41 = arith.sitofp %40 : vector<512x1024xi8> to vector<512x1024xf32>
    %42 = arith.truncf %41 : vector<512x1024xf32> to vector<512x1024xbf16>
    %43 = arith.truncf %39 : vector<8x512xf32> to vector<8x512xbf16>
    %cst_24 = arith.constant dense<0.000000e+00> : vector<8x1024xf32>
    %44 = tpu.matmul %43, %42, %cst_24 {dimension_numbers = #tpu.dot_dimension_numbers<[1], [0], [0], [1], [0, 0, 1, 1], [], []>} : vector<8x512xbf16>, vector<512x1024xbf16>, vector<8x1024xf32> -> vector<8x1024xf32>
    %c0_25 = arith.constant 0 : index
    %c1536 = arith.constant 1536 : index
    %45 = vector.load %arg5[%c0_25, %c1536] : memref<1x2688xf32, #tpu.memory_space<vmem>>, vector<1x1024xf32>
    %46 = vector.broadcast %45 : vector<1x1024xf32> to vector<8x1024xf32>
    %47 = arith.mulf %44, %46 : vector<8x1024xf32>
    %c0_26 = arith.constant 0 : index
    %c1536_27 = arith.constant 1536 : index
    %48 = vector.load %arg6[%c0_26, %c1536_27] : memref<1x2688xf32, #tpu.memory_space<vmem>>, vector<1x1024xf32>
    %49 = vector.broadcast %48 : vector<1x1024xf32> to vector<8x1024xf32>
    %50 = arith.addf %47, %49 : vector<8x1024xf32>
    %cst_28 = arith.constant 0.000000e+00 : f32
    %51 = vector.broadcast %cst_28 : f32 to vector<8x1024xf32>
    %52 = arith.maximumf %50, %51 : vector<8x1024xf32>
    %c0_29 = arith.constant 0 : index
    %c0_30 = arith.constant 0 : index
    %53 = vector.load %arg4[%c0_29, %c0_30] : memref<1024x128xi8, #tpu.memory_space<vmem>>, vector<1024x128xi8>
    %54 = arith.sitofp %53 : vector<1024x128xi8> to vector<1024x128xf32>
    %55 = arith.truncf %54 : vector<1024x128xf32> to vector<1024x128xbf16>
    %56 = arith.truncf %52 : vector<8x1024xf32> to vector<8x1024xbf16>
    %cst_31 = arith.constant dense<0.000000e+00> : vector<8x128xf32>
    %57 = tpu.matmul %56, %55, %cst_31 {dimension_numbers = #tpu.dot_dimension_numbers<[1], [0], [0], [1], [0, 0, 1, 1], [], []>} : vector<8x1024xbf16>, vector<1024x128xbf16>, vector<8x128xf32> -> vector<8x128xf32>
    %c0_32 = arith.constant 0 : index
    %c2560 = arith.constant 2560 : index
    %58 = vector.load %arg5[%c0_32, %c2560] : memref<1x2688xf32, #tpu.memory_space<vmem>>, vector<1x128xf32>
    %59 = vector.broadcast %58 : vector<1x128xf32> to vector<8x128xf32>
    %60 = arith.mulf %57, %59 : vector<8x128xf32>
    %c0_33 = arith.constant 0 : index
    %c2560_34 = arith.constant 2560 : index
    %61 = vector.load %arg6[%c0_33, %c2560_34] : memref<1x2688xf32, #tpu.memory_space<vmem>>, vector<1x128xf32>
    %62 = vector.broadcast %61 : vector<1x128xf32> to vector<8x128xf32>
    %63 = arith.addf %60, %62 : vector<8x128xf32>
    %64 = vector.extract_strided_slice %63 {offsets = [0, 4], sizes = [8, 1], strides = [1, 1]} : vector<8x128xf32> to vector<8x1xf32>
    %cst_35 = arith.constant dense<0.000000e+00> : vector<8xf32>
    %65 = vector.multi_reduction <add>, %63, %cst_35 [1] : vector<8x128xf32> to vector<8xf32>
    %66 = vector.shape_cast %65 : vector<8xf32> to vector<8x1xf32>
    %67 = arith.subf %66, %64 : vector<8x1xf32>
    %cst_36 = arith.constant 2.500000e-01 : f32
    %68 = vector.broadcast %cst_36 : f32 to vector<8x1xf32>
    %69 = arith.mulf %67, %68 : vector<8x1xf32>
    %70 = arith.subf %64, %69 : vector<8x1xf32>
    %71 = vector.broadcast %70 : vector<8x1xf32> to vector<8x128xf32>
    %72 = arith.addf %63, %71 : vector<8x128xf32>
    %c0_37 = arith.constant 0 : index
    %c0_38 = arith.constant 0 : index
    %73 = vector.load %arg7[%c0_37, %c0_38] : memref<8x128xf32, #tpu.memory_space<vmem>>, vector<8x128xf32>
    tpu.vector_store %arg7[%c0_37, %c0_38], %72 {strides = array<i32>} : memref<8x128xf32, #tpu.memory_space<vmem>>, vector<8x128xf32>,
    return
  }
  func.func @transform_0(%arg0: i32) -> (i32, i32) {
    %c0_i32 = arith.constant 0 : i32
    %c0_i32_0 = arith.constant 0 : i32
    return %arg0, %c0_i32 : i32, i32
  }
  func.func @transform_1(%arg0: i32) -> (i32, i32) {
    %c0_i32 = arith.constant 0 : i32
    %c0_i32_0 = arith.constant 0 : i32
    %c0_i32_1 = arith.constant 0 : i32
    return %c0_i32, %c0_i32_0 : i32, i32
  }
  func.func @transform_2(%arg0: i32) -> (i32, i32) {
    %c0_i32 = arith.constant 0 : i32
    %c0_i32_0 = arith.constant 0 : i32
    %c0_i32_1 = arith.constant 0 : i32
    return %c0_i32, %c0_i32_0 : i32, i32
  }
  func.func @transform_3(%arg0: i32) -> (i32, i32) {
    %c0_i32 = arith.constant 0 : i32
    %c0_i32_0 = arith.constant 0 : i32
    %c0_i32_1 = arith.constant 0 : i32
    return %c0_i32, %c0_i32_0 : i32, i32
  }
  func.func @transform_4(%arg0: i32) -> (i32, i32) {
    %c0_i32 = arith.constant 0 : i32
    %c0_i32_0 = arith.constant 0 : i32
    %c0_i32_1 = arith.constant 0 : i32
    return %c0_i32, %c0_i32_0 : i32, i32
  }
  func.func @transform_5(%arg0: i32) -> (i32, i32) {
    %c0_i32 = arith.constant 0 : i32
    %c0_i32_0 = arith.constant 0 : i32
    %c0_i32_1 = arith.constant 0 : i32
    return %c0_i32, %c0_i32_0 : i32, i32
  }
  func.func @transform_6(%arg0: i32) -> (i32, i32) {
    %c0_i32 = arith.constant 0 : i32
    %c0_i32_0 = arith.constant 0 : i32
    return %arg0, %c0_i32 : i32, i32
  }
}

module attributes {stable_mosaic.version = 11 : i64} {
  func.func @_qff_kernel(%arg0: i32, %arg1: memref<8x32xf32, #tpu.memory_space<vmem>>, %arg2: memref<32x512xi8, #tpu.memory_space<vmem>>, %arg3: memref<512x2048xi8, #tpu.memory_space<vmem>>, %arg4: memref<1024x128xi8, #tpu.memory_space<vmem>>, %arg5: memref<1x2688xf32, #tpu.memory_space<vmem>>, %arg6: memref<1x2688xf32, #tpu.memory_space<vmem>>, %arg7: memref<8x128xf32, #tpu.memory_space<vmem>>) attributes {dimension_semantics = [#tpu.dimension_semantics<parallel>], iteration_bounds = array<i64: 1>, scalar_prefetch = 0 : i64, scratch_operands = 0 : i64, tpu.core_type = #tpu.core_type<tc>, window_params = [{transform_indices = @transform_0, window_bounds = array<i64: 8, 32>}, {pipeline_mode = #tpu.pipeline_mode<synchronous>, transform_indices = @transform_1, window_bounds = array<i64: 32, 512>}, {pipeline_mode = #tpu.pipeline_mode<synchronous>, transform_indices = @transform_2, window_bounds = array<i64: 512, 2048>}, {pipeline_mode = #tpu.pipeline_mode<synchronous>, transform_indices = @transform_3, window_bounds = array<i64: 1024, 128>}, {pipeline_mode = #tpu.pipeline_mode<synchronous>, transform_indices = @transform_4, window_bounds = array<i64: 1, 2688>}, {pipeline_mode = #tpu.pipeline_mode<synchronous>, transform_indices = @transform_5, window_bounds = array<i64: 1, 2688>}, {transform_indices = @transform_6, window_bounds = array<i64: 8, 128>}]} {
    %c0 = arith.constant 0 : index
    %c0_0 = arith.constant 0 : index
    %0 = vector.load %arg1[%c0, %c0_0] : memref<8x32xf32, #tpu.memory_space<vmem>>, vector<8x32xf32>
    %c0_1 = arith.constant 0 : index
    %c0_2 = arith.constant 0 : index
    %1 = vector.load %arg2[%c0_1, %c0_2] : memref<32x512xi8, #tpu.memory_space<vmem>>, vector<32x512xi8>
    %2 = arith.sitofp %1 : vector<32x512xi8> to vector<32x512xf32>
    %3 = arith.truncf %2 : vector<32x512xf32> to vector<32x512xbf16>
    %4 = arith.truncf %0 : vector<8x32xf32> to vector<8x32xbf16>
    %cst = arith.constant dense<0.000000e+00> : vector<8x512xf32>
    %5 = tpu.matmul %4, %3, %cst {dimension_numbers = #tpu.dot_dimension_numbers<[1], [0], [0], [1], [0, 0, 1, 1], [], []>} : vector<8x32xbf16>, vector<32x512xbf16>, vector<8x512xf32> -> vector<8x512xf32>
    %c0_3 = arith.constant 0 : index
    %c0_4 = arith.constant 0 : index
    %6 = vector.load %arg5[%c0_3, %c0_4] : memref<1x2688xf32, #tpu.memory_space<vmem>>, vector<1x512xf32>
    %7 = vector.broadcast %6 : vector<1x512xf32> to vector<8x512xf32>
    %8 = arith.mulf %5, %7 : vector<8x512xf32>
    %c0_5 = arith.constant 0 : index
    %c0_6 = arith.constant 0 : index
    %9 = vector.load %arg6[%c0_5, %c0_6] : memref<1x2688xf32, #tpu.memory_space<vmem>>, vector<1x512xf32>
    %10 = vector.broadcast %9 : vector<1x512xf32> to vector<8x512xf32>
    %11 = arith.addf %8, %10 : vector<8x512xf32>
    %cst_7 = arith.constant 0.000000e+00 : f32
    %12 = vector.broadcast %cst_7 : f32 to vector<8x512xf32>
    %13 = arith.maximumf %11, %12 : vector<8x512xf32>
    %c0_8 = arith.constant 0 : index
    %c0_9 = arith.constant 0 : index
    %14 = vector.load %arg3[%c0_8, %c0_9] : memref<512x2048xi8, #tpu.memory_space<vmem>>, vector<512x512xi8>
    %15 = arith.sitofp %14 : vector<512x512xi8> to vector<512x512xf32>
    %16 = arith.truncf %15 : vector<512x512xf32> to vector<512x512xbf16>
    %17 = arith.truncf %13 : vector<8x512xf32> to vector<8x512xbf16>
    %cst_10 = arith.constant dense<0.000000e+00> : vector<8x512xf32>
    %18 = tpu.matmul %17, %16, %cst_10 {dimension_numbers = #tpu.dot_dimension_numbers<[1], [0], [0], [1], [0, 0, 1, 1], [], []>} : vector<8x512xbf16>, vector<512x512xbf16>, vector<8x512xf32> -> vector<8x512xf32>
    %c0_11 = arith.constant 0 : index
    %c512 = arith.constant 512 : index
    %19 = vector.load %arg5[%c0_11, %c512] : memref<1x2688xf32, #tpu.memory_space<vmem>>, vector<1x512xf32>
    %20 = vector.broadcast %19 : vector<1x512xf32> to vector<8x512xf32>
    %21 = arith.mulf %18, %20 : vector<8x512xf32>
    %c0_12 = arith.constant 0 : index
    %c512_13 = arith.constant 512 : index
    %22 = vector.load %arg6[%c0_12, %c512_13] : memref<1x2688xf32, #tpu.memory_space<vmem>>, vector<1x512xf32>
    %23 = vector.broadcast %22 : vector<1x512xf32> to vector<8x512xf32>
    %24 = arith.addf %21, %23 : vector<8x512xf32>
    %cst_14 = arith.constant 0.000000e+00 : f32
    %25 = vector.broadcast %cst_14 : f32 to vector<8x512xf32>
    %26 = arith.maximumf %24, %25 : vector<8x512xf32>
    %c0_15 = arith.constant 0 : index
    %c512_16 = arith.constant 512 : index
    %27 = vector.load %arg3[%c0_15, %c512_16] : memref<512x2048xi8, #tpu.memory_space<vmem>>, vector<512x512xi8>
    %28 = arith.sitofp %27 : vector<512x512xi8> to vector<512x512xf32>
    %29 = arith.truncf %28 : vector<512x512xf32> to vector<512x512xbf16>
    %30 = arith.truncf %26 : vector<8x512xf32> to vector<8x512xbf16>
    %cst_17 = arith.constant dense<0.000000e+00> : vector<8x512xf32>
    %31 = tpu.matmul %30, %29, %cst_17 {dimension_numbers = #tpu.dot_dimension_numbers<[1], [0], [0], [1], [0, 0, 1, 1], [], []>} : vector<8x512xbf16>, vector<512x512xbf16>, vector<8x512xf32> -> vector<8x512xf32>
    %c0_18 = arith.constant 0 : index
    %c1024 = arith.constant 1024 : index
    %32 = vector.load %arg5[%c0_18, %c1024] : memref<1x2688xf32, #tpu.memory_space<vmem>>, vector<1x512xf32>
    %33 = vector.broadcast %32 : vector<1x512xf32> to vector<8x512xf32>
    %34 = arith.mulf %31, %33 : vector<8x512xf32>
    %c0_19 = arith.constant 0 : index
    %c1024_20 = arith.constant 1024 : index
    %35 = vector.load %arg6[%c0_19, %c1024_20] : memref<1x2688xf32, #tpu.memory_space<vmem>>, vector<1x512xf32>
    %36 = vector.broadcast %35 : vector<1x512xf32> to vector<8x512xf32>
    %37 = arith.addf %34, %36 : vector<8x512xf32>
    %cst_21 = arith.constant 0.000000e+00 : f32
    %38 = vector.broadcast %cst_21 : f32 to vector<8x512xf32>
    %39 = arith.maximumf %37, %38 : vector<8x512xf32>
    %c0_22 = arith.constant 0 : index
    %c1024_23 = arith.constant 1024 : index
    %40 = vector.load %arg3[%c0_22, %c1024_23] : memref<512x2048xi8, #tpu.memory_space<vmem>>, vector<512x1024xi8>
    %41 = arith.sitofp %40 : vector<512x1024xi8> to vector<512x1024xf32>
    %42 = arith.truncf %41 : vector<512x1024xf32> to vector<512x1024xbf16>
    %43 = arith.truncf %39 : vector<8x512xf32> to vector<8x512xbf16>
    %cst_24 = arith.constant dense<0.000000e+00> : vector<8x1024xf32>
    %44 = tpu.matmul %43, %42, %cst_24 {dimension_numbers = #tpu.dot_dimension_numbers<[1], [0], [0], [1], [0, 0, 1, 1], [], []>} : vector<8x512xbf16>, vector<512x1024xbf16>, vector<8x1024xf32> -> vector<8x1024xf32>
    %c0_25 = arith.constant 0 : index
    %c1536 = arith.constant 1536 : index
    %45 = vector.load %arg5[%c0_25, %c1536] : memref<1x2688xf32, #tpu.memory_space<vmem>>, vector<1x1024xf32>
    %46 = vector.broadcast %45 : vector<1x1024xf32> to vector<8x1024xf32>
    %47 = arith.mulf %44, %46 : vector<8x1024xf32>
    %c0_26 = arith.constant 0 : index
    %c1536_27 = arith.constant 1536 : index
    %48 = vector.load %arg6[%c0_26, %c1536_27] : memref<1x2688xf32, #tpu.memory_space<vmem>>, vector<1x1024xf32>
    %49 = vector.broadcast %48 : vector<1x1024xf32> to vector<8x1024xf32>
    %50 = arith.addf %47, %49 : vector<8x1024xf32>
    %cst_28 = arith.constant 0.000000e+00 : f32
    %51 = vector.broadcast %cst_28 : f32 to vector<8x1024xf32>
    %52 = arith.maximumf %50, %51 : vector<8x1024xf32>
    %c0_29 = arith.constant 0 : index
    %c0_30 = arith.constant 0 : index
    %53 = vector.load %arg4[%c0_29, %c0_30] : memref<1024x128xi8, #tpu.memory_space<vmem>>, vector<1024x128xi8>
    %54 = arith.sitofp %53 : vector<1024x128xi8> to vector<1024x128xf32>
    %55 = arith.truncf %54 : vector<1024x128xf32> to vector<1024x128xbf16>
    %56 = arith.truncf %52 : vector<8x1024xf32> to vector<8x1024xbf16>
    %cst_31 = arith.constant dense<0.000000e+00> : vector<8x128xf32>
    %57 = tpu.matmul %56, %55, %cst_31 {dimension_numbers = #tpu.dot_dimension_numbers<[1], [0], [0], [1], [0, 0, 1, 1], [], []>} : vector<8x1024xbf16>, vector<1024x128xbf16>, vector<8x128xf32> -> vector<8x128xf32>
    %c0_32 = arith.constant 0 : index
    %c2560 = arith.constant 2560 : index
    %58 = vector.load %arg5[%c0_32, %c2560] : memref<1x2688xf32, #tpu.memory_space<vmem>>, vector<1x128xf32>
    %59 = vector.broadcast %58 : vector<1x128xf32> to vector<8x128xf32>
    %60 = arith.mulf %57, %59 : vector<8x128xf32>
    %c0_33 = arith.constant 0 : index
    %c2560_34 = arith.constant 2560 : index
    %61 = vector.load %arg6[%c0_33, %c2560_34] : memref<1x2688xf32, #tpu.memory_space<vmem>>, vector<1x128xf32>
    %62 = vector.broadcast %61 : vector<1x128xf32> to vector<8x128xf32>
    %63 = arith.addf %60, %62 : vector<8x128xf32>
    %64 = vector.extract_strided_slice %63 {offsets = [0, 4], sizes = [8, 1], strides = [1, 1]} : vector<8x128xf32> to vector<8x1xf32>
    %cst_35 = arith.constant dense<0.000000e+00> : vector<8xf32>
    %65 = vector.multi_reduction <add>, %63, %cst_35 [1] : vector<8x128xf32> to vector<8xf32>
    %66 = vector.shape_cast %65 : vector<8xf32> to vector<8x1xf32>
    %67 = arith.subf %66, %64 : vector<8x1xf32>
    %cst_36 = arith.constant 2.500000e-01 : f32
    %68 = vector.broadcast %cst_36 : f32 to vector<8x1xf32>
    %69 = arith.mulf %67, %68 : vector<8x1xf32>
    %70 = arith.subf %64, %69 : vector<8x1xf32>
    %71 = vector.broadcast %70 : vector<8x1xf32> to vector<8x128xf32>
    %72 = arith.addf %63, %71 : vector<8x128xf32>
    %c0_37 = arith.constant 0 : index
    %c0_38 = arith.constant 0 : index
    %73 = vector.load %arg7[%c0_37, %c0_38] : memref<8x128xf32, #tpu.memory_space<vmem>>, vector<8x128xf32>
    tpu.vector_store %arg7[%c0_37, %c0_38], %72 {strides = array<i32>} : memref<8x128xf32, #tpu.memory_space<vmem>>, vector<8x128xf32>,
    return
  }
  func.func @transform_0(%arg0: i32) -> (i32, i32) {
    %c0_i32 = arith.constant 0 : i32
    %c0_i32_0 = arith.constant 0 : i32
    return %arg0, %c0_i32 : i32, i32
  }
  func.func @transform_1(%arg0: i32) -> (i32, i32) {
    %c0_i32 = arith.constant 0 : i32
    %c0_i32_0 = arith.constant 0 : i32
    %c0_i32_1 = arith.constant 0 : i32
    return %c0_i32, %c0_i32_0 : i32, i32
  }
  func.func @transform_2(%arg0: i32) -> (i32, i32) {
    %c0_i32 = arith.constant 0 : i32
    %c0_i32_0 = arith.constant 0 : i32
    %c0_i32_1 = arith.constant 0 : i32
    return %c0_i32, %c0_i32_0 : i32, i32
  }
  func.func @transform_3(%arg0: i32) -> (i32, i32) {
    %c0_i32 = arith.constant 0 : i32
    %c0_i32_0 = arith.constant 0 : i32
    %c0_i32_1 = arith.constant 0 : i32
    return %c0_i32, %c0_i32_0 : i32, i32
  }
  func.func @transform_4(%arg0: i32) -> (i32, i32) {
    %c0_i32 = arith.constant 0 : i32
    %c0_i32_0 = arith.constant 0 : i32
    %c0_i32_1 = arith.constant 0 : i32
    return %c0_i32, %c0_i32_0 : i32, i32
  }
  func.func @transform_5(%arg0: i32) -> (i32, i32) {
    %c0_i32 = arith.constant 0 : i32
    %c0_i32_0 = arith.constant 0 : i32
    %c0_i32_1 = arith.constant 0 : i32
    return %c0_i32, %c0_i32_0 : i32, i32
  }
  func.func @transform_6(%arg0: i32) -> (i32, i32) {
    %c0_i32 = arith.constant 0 : i32
    %c0_i32_0 = arith.constant 0 : i32
    return %arg0, %c0_i32 : i32, i32
  }
}

</mosaic_0001>

<llo_original>
// kernel: tpu_custom_call.1
$region0: #{tpu_custom_call.1}
  #allocation0 [shape = 'u32[]', space=smem, size = 0x4, offset = 0x4, fixed_abs, tag = 'smem constant byte address 0x4 - core index']
  #allocation1 [shape = 'u32[144,128]{1,0:T(1,128)}', space=vmem, size = 0x12000, scoped, tag = 'internal scratch']
  %s0 = inlined_call_operand.hbm [shape: f32[8,32], index: 0, kind: input, shape index: {}]
  %s1 = inlined_call_operand.hbm [shape: s8[32,512], index: 1, kind: input, shape index: {}]
  %s2 = inlined_call_operand.hbm [shape: s8[512,2048], index: 2, kind: input, shape index: {}]
  %s3 = inlined_call_operand.hbm [shape: s8[1024,128], index: 3, kind: input, shape index: {}]
  %s4 = inlined_call_operand.hbm [shape: f32[1,2688], index: 4, kind: input, shape index: {}]
  %s5 = inlined_call_operand.hbm [shape: f32[1,2688], index: 5, kind: input, shape index: {}]
  %s6 = inlined_call_operand.hbm [shape: f32[8,128], index: 6, kind: output, shape index: {}]
  %s7 = sld [smem:[#allocation0]]
  $region58: #{tpu_custom_call.1} parent=0
    _
  %s9 = ssub.s32 1, %s7
  %s10 = scalar_select 0, %s9, %s7
  $region1: #{tpu_custom_call.1} parent=0
    #allocation2 [shape = 'u8[4096]{0}', space=vmem, size = 0x1000, scoped, tag = 'input window, operand 0, single buffered']
    #allocation3 [shape = 's32[1]{0}', space=sflag, size = 0x4, scoped, tag = 'scoped memory for tpu_custom_call.1']
    #allocation4 [shape = 's32[1]{0}', space=sflag, size = 0x4, scoped, tag = 'scoped memory for tpu_custom_call.1']
    #allocation5 [shape = 'u8[16384]{0}', space=vmem, size = 0x4000, scoped, tag = 'input window, operand 1, single buffered']
    #allocation6 [shape = 's32[1]{0}', space=sflag, size = 0x4, scoped, tag = 'scoped memory for tpu_custom_call.1']
    #allocation7 [shape = 'u8[1048576]{0}', space=vmem, size = 0x100000, scoped, tag = 'input window, operand 2, single buffered']
    #allocation8 [shape = 'u8[131072]{0}', space=vmem, size = 0x20000, scoped, tag = 'input window, operand 3, single buffered']
    #allocation9 [shape = 's32[1]{0}', space=sflag, size = 0x4, scoped, tag = 'scoped memory for tpu_custom_call.1']
    #allocation10 [shape = 'u8[10752]{0}', space=vmem, size = 0x2c00, scoped, tag = 'input window, operand 4, single buffered']
    #allocation11 [shape = 'u8[10752]{0}', space=vmem, size = 0x2c00, scoped, tag = 'input window, operand 5, single buffered']
    #allocation12 [shape = 's32[1]{0}', space=sflag, size = 0x4, scoped, tag = 'scoped memory for tpu_custom_call.1']
    #allocation13 [shape = 'u8[4096]{0}', space=vmem, size = 0x1000, scoped, tag = 'output window, operand 0, single buffered']
    %11 = vsyncpa [#allocation3], 0
    %12 = vsyncpa [#allocation6], 0
    %13 = vsyncpa [#allocation9], 0
    %14 = vsyncpa [#allocation12], 0
    %15 = vsyncpa [#allocation4], 0
    // Predicated region
    $region2: #{tpu_custom_call.1} parent=1 // pred_check
      _
    $region3: #{tpu_custom_call.1} parent=1 // pred_check_branch
      %17 = sbr.rel (0) target = $region5
    $region4: #{tpu_custom_call.1} parent=1 // pred_region
      %s19 = ssub.s32 128, 128
      %20 = vsyncadd [#allocation3], %s19
      %s22 = sshll.u32 [#allocation2], 4
      %s23 = int_to_ptr.vmem [resolvable:$true] %s22
      %25 = dma.hbm_to_vmem [thread:$0]  %s0, 128, %s23, [#allocation3]
    $region5: #{tpu_custom_call.1} parent=1 // pred_fallthru
      _
    // Predicated region
    $region6: #{tpu_custom_call.1} parent=1 // pred_check
      _
    $region7: #{tpu_custom_call.1} parent=1 // pred_check_branch
      %27 = sbr.rel (0) target = $region9
    $region8: #{tpu_custom_call.1} parent=1 // pred_region
      %s29 = ssub.s32 512, 512
      %30 = vsyncadd [#allocation6], %s29
      %s32 = sshll.u32 [#allocation5], 4
      %s33 = int_to_ptr.vmem [resolvable:$true] %s32
      %35 = dma.hbm_to_vmem [thread:$0]  %s1, 512, %s33, [#allocation6]
    $region9: #{tpu_custom_call.1} parent=1 // pred_fallthru
      _
    // Predicated region
    $region10: #{tpu_custom_call.1} parent=1 // pred_check
      _
    $region11: #{tpu_custom_call.1} parent=1 // pred_check_branch
      %37 = sbr.rel (0) target = $region13
    $region12: #{tpu_custom_call.1} parent=1 // pred_region
      %s39 = ssub.s32 32768, 32768
      %40 = vsyncadd [#allocation6], %s39
      %s41 = sshll.u32 [#allocation7], 4
      %s42 = int_to_ptr.vmem [resolvable:$true] %s41
      %47 = dma.hbm_to_vmem [thread:$0]  %s2, 32768, %s42, [#allocation6], 2048, 2048, 128
    $region13: #{tpu_custom_call.1} parent=1 // pred_fallthru
      _
    // Predicated region
    $region14: #{tpu_custom_call.1} parent=1 // pred_check
      _
    $region15: #{tpu_custom_call.1} parent=1 // pred_check_branch
      %49 = sbr.rel (0) target = $region17
    $region16: #{tpu_custom_call.1} parent=1 // pred_region
      %s51 = ssub.s32 4096, 4096
      %52 = vsyncadd [#allocation9], %s51
      %s53 = sshll.u32 [#allocation8], 4
      %s54 = int_to_ptr.vmem [resolvable:$true] %s53
      %59 = dma.hbm_to_vmem [thread:$0]  %s3, 4096, %s54, [#allocation9], 128, 128, 8
    $region17: #{tpu_custom_call.1} parent=1 // pred_fallthru
      _
    // Predicated region
    $region18: #{tpu_custom_call.1} parent=1 // pred_check
      _
    $region19: #{tpu_custom_call.1} parent=1 // pred_check_branch
      %61 = sbr.rel (0) target = $region21
    $region20: #{tpu_custom_call.1} parent=1 // pred_region
      %s63 = ssub.s32 336, 336
      %64 = vsyncadd [#allocation9], %s63
      %s66 = sshll.u32 [#allocation10], 4
      %s67 = int_to_ptr.vmem [resolvable:$true] %s66
      %69 = dma.hbm_to_vmem [thread:$0]  %s4, 336, %s67, [#allocation9]
    $region21: #{tpu_custom_call.1} parent=1 // pred_fallthru
      _
    // Predicated region
    $region22: #{tpu_custom_call.1} parent=1 // pred_check
      _
    $region23: #{tpu_custom_call.1} parent=1 // pred_check_branch
      %71 = sbr.rel (0) target = $region25
    $region24: #{tpu_custom_call.1} parent=1 // pred_region
      %s73 = ssub.s32 336, 336
      %74 = vsyncadd [#allocation12], %s73
      %s76 = sshll.u32 [#allocation11], 4
      %s77 = int_to_ptr.vmem [resolvable:$true] %s76
      %79 = dma.hbm_to_vmem [thread:$0]  %s5, 336, %s77, [#allocation12]
    $region25: #{tpu_custom_call.1} parent=1 // pred_fallthru
      _
    // Predicated region
    $region26: #{tpu_custom_call.1} parent=1 // pred_check
      _
    $region27: #{tpu_custom_call.1} parent=1 // pred_check_branch
      %81 = sbr.rel (0) target = $region29
    $region28: #{tpu_custom_call.1} parent=1 // pred_region
      %82 = dma.done [#allocation3], 128
    $region29: #{tpu_custom_call.1} parent=1 // pred_fallthru
      _
    // Predicated region
    $region30: #{tpu_custom_call.1} parent=1 // pred_check
      _
    $region31: #{tpu_custom_call.1} parent=1 // pred_check_branch
      %84 = sbr.rel (0) target = $region33
    $region32: #{tpu_custom_call.1} parent=1 // pred_region
      %85 = dma.done [#allocation6], 512
    $region33: #{tpu_custom_call.1} parent=1 // pred_fallthru
      _
    // Predicated region
    $region34: #{tpu_custom_call.1} parent=1 // pred_check
      _
    $region35: #{tpu_custom_call.1} parent=1 // pred_check_branch
      %87 = sbr.rel (0) target = $region37
    $region36: #{tpu_custom_call.1} parent=1 // pred_region
      %88 = dma.done [#allocation6], 32768
    $region37: #{tpu_custom_call.1} parent=1 // pred_fallthru
      _
    // Predicated region
    $region38: #{tpu_custom_call.1} parent=1 // pred_check
      _
    $region39: #{tpu_custom_call.1} parent=1 // pred_check_branch
      %90 = sbr.rel (0) target = $region41
    $region40: #{tpu_custom_call.1} parent=1 // pred_region
      %91 = dma.done [#allocation9], 4096
    $region41: #{tpu_custom_call.1} parent=1 // pred_fallthru
      _
    // Predicated region
    $region42: #{tpu_custom_call.1} parent=1 // pred_check
      _
    $region43: #{tpu_custom_call.1} parent=1 // pred_check_branch
      %93 = sbr.rel (0) target = $region45
    $region44: #{tpu_custom_call.1} parent=1 // pred_region
      %94 = dma.done [#allocation9], 336
    $region45: #{tpu_custom_call.1} parent=1 // pred_fallthru
      _
    // Predicated region
    $region46: #{tpu_custom_call.1} parent=1 // pred_check
      _
    $region47: #{tpu_custom_call.1} parent=1 // pred_check_branch
      %96 = sbr.rel (0) target = $region49
    $region48: #{tpu_custom_call.1} parent=1 // pred_region
      %97 = dma.done [#allocation12], 336
    $region49: #{tpu_custom_call.1} parent=1 // pred_fallthru
      _
    %v99 = vld [vmem:[#allocation2] sm:$0xff]
    %v100 = vld [vmem:[#allocation5] sm:$0xff]
    %v101 = vld [vmem:[#allocation5 + $0x8] sm:$0xff]
    %v102 = vld [vmem:[#allocation5 + $0x10] sm:$0xff]
    %v103 = vld [vmem:[#allocation5 + $0x18] sm:$0xff]
    %v104 = vunpack.c.l.s8.bf16 %v100
    %v105 = vunpack.c.l.s8.bf16 %v101
    %v106 = vunpack.c.l.s8.bf16 %v102
    %v107 = vunpack.c.l.s8.bf16 %v103
    %v108 = vunpack.c.h.s8.bf16 %v100
    %v109 = vunpack.c.h.s8.bf16 %v101
    %v110 = vunpack.c.h.s8.bf16 %v102
    %v111 = vunpack.c.h.s8.bf16 %v103
    %v112 = vpack.c.bf16 %v99, %v99
    %vm113 = vcmask 261120
    %v115 = vsel %vm113, %v112, 0
    %117 = vmatprep.subr.bf16.mxu0 %v105
    %118 = vmatpush1.bf16.msra.mxu0 %v104
    %119 = vmatprep.subr.bf16.mxu0 %v109
    %120 = vmatpush1.bf16.msra.mxu0 %v108
    %121 = vmatprep.subr.bf16.mxu0 0
    %122 = vmatpush1.bf16.msra.mxu0 0
    %123 = vmatprep.subr.bf16.mxu0 0
    %124 = vmatpush1.bf16.msra.mxu0 0
    %125 = vmatprep.subr.bf16.mxu0 0
    %126 = vmatpush1.bf16.msra.mxu0 0
    %127 = vmatprep.subr.bf16.mxu0 0
    %128 = vmatpush1.bf16.msra.mxu0 0
    %129 = vmatprep.subr.bf16.mxu0 0
    %130 = vmatpush1.bf16.msra.mxu0 0
    %131 = vmatprep.subr.bf16.mxu0 0
    %132 = vmatpush1.bf16.msra.mxu0 0
    %133 = vmatprep.subr.bf16.mxu0 0
    %134 = vmatpush1.bf16.msra.mxu0 0
    %135 = vmatprep.subr.bf16.mxu0 0
    %136 = vmatpush1.bf16.msra.mxu0 0
    %137 = vmatprep.subr.bf16.mxu0 0
    %138 = vmatpush1.bf16.msra.mxu0 0
    %139 = vmatprep.subr.bf16.mxu0 0
    %140 = vmatpush1.bf16.msra.mxu0 0
    %141 = vmatprep.subr.bf16.mxu0 0
    %142 = vmatpush1.bf16.msra.mxu0 0
    %143 = vmatprep.subr.bf16.mxu0 0
    %144 = vmatpush1.bf16.msra.mxu0 0
    %145 = vmatprep.subr.bf16.mxu0 0
    %146 = vmatpush1.bf16.msra.mxu0 0
    %147 = vmatprep.subr.bf16.mxu0 0
    %148 = vmatpush1.bf16.msra.mxu0 0
    %149 = vmatprep.mubr.bf16.mxu0 0
    %150 = vmatmul.mubr.bf16.gmra.mrb[0].mxu0 %v115
    %v151 = vpop.f32.mrb[0].mxu0
    %v152 = vadd.f32 0.0, %v151
    %v153 = vpop.f32.mrb[0].mxu0
    %v154 = vadd.f32 0.0, %v153
    %v155 = vpop.f32.mrb[0].mxu0
    %v156 = vpop.f32.mrb[0].mxu0
    %157 = vdwg.mxu0
    %158 = vmatprep.subr.bf16.mxu0 %v107
    %159 = vmatpush1.bf16.msra.mxu0 %v106
    %160 = vmatprep.subr.bf16.mxu0 %v111
    %161 = vmatpush1.bf16.msra.mxu0 %v110
    %162 = vmatprep.subr.bf16.mxu0 0
    %163 = vmatpush1.bf16.msra.mxu0 0
    %164 = vmatprep.subr.bf16.mxu0 0
    %165 = vmatpush1.bf16.msra.mxu0 0
    %166 = vmatprep.subr.bf16.mxu0 0
    %167 = vmatpush1.bf16.msra.mxu0 0
    %168 = vmatprep.subr.bf16.mxu0 0
    %169 = vmatpush1.bf16.msra.mxu0 0
    %170 = vmatprep.subr.bf16.mxu0 0
    %171 = vmatpush1.bf16.msra.mxu0 0
    %172 = vmatprep.subr.bf16.mxu0 0
    %173 = vmatpush1.bf16.msra.mxu0 0
    %174 = vmatprep.subr.bf16.mxu0 0
    %175 = vmatpush1.bf16.msra.mxu0 0
    %176 = vmatprep.subr.bf16.mxu0 0
    %177 = vmatpush1.bf16.msra.mxu0 0
    %178 = vmatprep.subr.bf16.mxu0 0
    %179 = vmatpush1.bf16.msra.mxu0 0
    %180 = vmatprep.subr.bf16.mxu0 0
    %181 = vmatpush1.bf16.msra.mxu0 0
    %182 = vmatprep.subr.bf16.mxu0 0
    %183 = vmatpush1.bf16.msra.mxu0 0
    %184 = vmatprep.subr.bf16.mxu0 0
    %185 = vmatpush1.bf16.msra.mxu0 0
    %186 = vmatprep.subr.bf16.mxu0 0
    %187 = vmatpush1.bf16.msra.mxu0 0
    %188 = vmatprep.subr.bf16.mxu0 0
    %189 = vmatpush1.bf16.msra.mxu0 0
    %190 = vmatprep.mubr.bf16.mxu0 0
    %191 = vmatmul.mubr.bf16.gmra.mrb[0].mxu0 %v115
    %v192 = vpop.f32.mrb[0].mxu0
    %v193 = vadd.f32 0.0, %v192
    %v194 = vpop.f32.mrb[0].mxu0
    %v195 = vadd.f32 0.0, %v194
    %v196 = vpop.f32.mrb[0].mxu0
    %v197 = vpop.f32.mrb[0].mxu0
    %198 = vdwg.mxu0
    %v199 = vld [vmem:[#allocation10] sm:$0xf]
    %v201 = vlaneseq
    %v202 = vshrl.u32 %v201, 7
    %v203 = vsub.s32 0, %v202
    %v204 = vrot.slane %v199, %v203
    %v205 = vlaneseq
    %v206 = vshrl.u32 %v205, 7
    %v207 = vsub.s32 1, %v206
    %v208 = vrot.slane %v199, %v207
    %v209 = vlaneseq
    %v210 = vshrl.u32 %v209, 7
    %v211 = vsub.s32 2, %v210
    %v212 = vrot.slane %v199, %v211
    %v213 = vlaneseq
    %v214 = vshrl.u32 %v213, 7
    %v215 = vsub.s32 3, %v214
    %v216 = vrot.slane %v199, %v215
    %v221 = vmul.f32 %v152, %v204
    %v222 = vmul.f32 %v154, %v208
    %v223 = vmul.f32 %v193, %v212
    %v224 = vmul.f32 %v195, %v216
    %v225 = vld [vmem:[#allocation11] sm:$0xf]
    %v227 = vlaneseq
    %v228 = vshrl.u32 %v227, 7
    %v229 = vsub.s32 0, %v228
    %v230 = vrot.slane %v225, %v229
    %v231 = vlaneseq
    %v232 = vshrl.u32 %v231, 7
    %v233 = vsub.s32 1, %v232
    %v234 = vrot.slane %v225, %v233
    %v235 = vlaneseq
    %v236 = vshrl.u32 %v235, 7
    %v237 = vsub.s32 2, %v236
    %v238 = vrot.slane %v225, %v237
    %v239 = vlaneseq
    %v240 = vshrl.u32 %v239, 7
    %v241 = vsub.s32 3, %v240
    %v242 = vrot.slane %v225, %v241
    %v247 = vadd.f32 %v221, %v230
    %v248 = vadd.f32 %v222, %v234
    %v249 = vadd.f32 %v223, %v238
    %v250 = vadd.f32 %v224, %v242
    %v251 = vmax.f32 %v247, 0.0
    %v252 = vmax.f32 %v248, 0.0
    %v253 = vmax.f32 %v249, 0.0
    %v254 = vmax.f32 %v250, 0.0
    %v255 = vld [vmem:[#allocation7] sm:$0xff]
    %v256 = vld [vmem:[#allocation7 + $0x8] sm:$0xff]
    %v257 = vld [vmem:[#allocation7 + $0x10] sm:$0xff]
    %v258 = vld [vmem:[#allocation7 + $0x18] sm:$0xff]
    %v259 = vld [vmem:[#allocation7 + $0x80] sm:$0xff]
    %v260 = vld [vmem:[#allocation7 + $0x88] sm:$0xff]
    %v261 = vld [vmem:[#allocation7 + $0x90] sm:$0xff]
    %v262 = vld [vmem:[#allocation7 + $0x98] sm:$0xff]
    %v263 = vld [vmem:[#allocation7 + $0x100] sm:$0xff]
    %v264 = vld [vmem:[#allocation7 + $0x108] sm:$0xff]
    %v265 = vld [vmem:[#allocation7 + $0x110] sm:$0xff]
    %v266 = vld [vmem:[#allocation7 + $0x118] sm:$0xff]
    %v267 = vld [vmem:[#allocation7 + $0x180] sm:$0xff]
    %v268 = vld [vmem:[#allocation7 + $0x188] sm:$0xff]
    %v269 = vld [vmem:[#allocation7 + $0x190] sm:$0xff]
    %v270 = vld [vmem:[#allocation7 + $0x198] sm:$0xff]
    %v271 = vld [vmem:[#allocation7 + $0x200] sm:$0xff]
    %v272 = vld [vmem:[#allocation7 + $0x208] sm:$0xff]
    %v273 = vld [vmem:[#allocation7 + $0x210] sm:$0xff]
    %v274 = vld [vmem:[#allocation7 + $0x218] sm:$0xff]
    %v275 = vld [vmem:[#allocation7 + $0x280] sm:$0xff]
    %v276 = vld [vmem:[#allocation7 + $0x288] sm:$0xff]
    %v277 = vld [vmem:[#allocation7 + $0x290] sm:$0xff]
    %v278 = vld [vmem:[#allocation7 + $0x298] sm:$0xff]
    %v279 = vld [vmem:[#allocation7 + $0x300] sm:$0xff]
    %v280 = vld [vmem:[#allocation7 + $0x308] sm:$0xff]
    %v281 = vld [vmem:[#allocation7 + $0x310] sm:$0xff]
    %v282 = vld [vmem:[#allocation7 + $0x318] sm:$0xff]
    %v283 = vld [vmem:[#allocation7 + $0x380] sm:$0xff]
    %v284 = vld [vmem:[#allocation7 + $0x388] sm:$0xff]
    %v285 = vld [vmem:[#allocation7 + $0x390] sm:$0xff]
    %v286 = vld [vmem:[#allocation7 + $0x398] sm:$0xff]
    %v287 = vld [vmem:[#allocation7 + $0x400] sm:$0xff]
    %v288 = vld [vmem:[#allocation7 + $0x408] sm:$0xff]
    %v289 = vld [vmem:[#allocation7 + $0x410] sm:$0xff]
    %v290 = vld [vmem:[#allocation7 + $0x418] sm:$0xff]
    %v291 = vld [vmem:[#allocation7 + $0x480] sm:$0xff]
    %v292 = vld [vmem:[#allocation7 + $0x488] sm:$0xff]
    %v293 = vld [vmem:[#allocation7 + $0x490] sm:$0xff]
    %v294 = vld [vmem:[#allocation7 + $0x498] sm:$0xff]
    %v295 = vld [vmem:[#allocation7 + $0x500] sm:$0xff]
    %v296 = vld [vmem:[#allocation7 + $0x508] sm:$0xff]
    %v297 = vld [vmem:[#allocation7 + $0x510] sm:$0xff]
    %v298 = vld [vmem:[#allocation7 + $0x518] sm:$0xff]
    %v299 = vld [vmem:[#allocation7 + $0x580] sm:$0xff]
    %v300 = vld [vmem:[#allocation7 + $0x588] sm:$0xff]
    %v301 = vld [vmem:[#allocation7 + $0x590] sm:$0xff]
    %v302 = vld [vmem:[#allocation7 + $0x598] sm:$0xff]
    %v303 = vld [vmem:[#allocation7 + $0x600] sm:$0xff]
    %v304 = vld [vmem:[#allocation7 + $0x608] sm:$0xff]
    %v305 = vld [vmem:[#allocation7 + $0x610] sm:$0xff]
    %v306 = vld [vmem:[#allocation7 + $0x618] sm:$0xff]
    %v307 = vld [vmem:[#allocation7 + $0x680] sm:$0xff]
    %v308 = vld [vmem:[#allocation7 + $0x688] sm:$0xff]
    %v309 = vld [vmem:[#allocation7 + $0x690] sm:$0xff]
    %v310 = vld [vmem:[#allocation7 + $0x698] sm:$0xff]
    %v311 = vld [vmem:[#allocation7 + $0x700] sm:$0xff]
    %v312 = vld [vmem:[#allocation7 + $0x708] sm:$0xff]
    %v313 = vld [vmem:[#allocation7 + $0x710] sm:$0xff]
    %v314 = vld [vmem:[#allocation7 + $0x718] sm:$0xff]
    %v315 = vld [vmem:[#allocation7 + $0x780] sm:$0xff]
    %v316 = vld [vmem:[#allocation7 + $0x788] sm:$0xff]
    %v317 = vld [vmem:[#allocation7 + $0x790] sm:$0xff]
    %v318 = vld [vmem:[#allocation7 + $0x798] sm:$0xff]
    %v319 = vunpack.c.l.s8.bf16 %v255
    %v320 = vunpack.c.l.s8.bf16 %v256
    %v321 = vunpack.c.l.s8.bf16 %v257
    %v322 = vunpack.c.l.s8.bf16 %v258
    %v323 = vunpack.c.h.s8.bf16 %v255
    %v324 = vunpack.c.h.s8.bf16 %v256
    %v325 = vunpack.c.h.s8.bf16 %v257
    %v326 = vunpack.c.h.s8.bf16 %v258
    %v327 = vunpack.c.l.s8.bf16 %v259
    %v328 = vunpack.c.l.s8.bf16 %v260
    %v329 = vunpack.c.l.s8.bf16 %v261
    %v330 = vunpack.c.l.s8.bf16 %v262
    %v331 = vunpack.c.h.s8.bf16 %v259
    %v332 = vunpack.c.h.s8.bf16 %v260
    %v333 = vunpack.c.h.s8.bf16 %v261
    %v334 = vunpack.c.h.s8.bf16 %v262
    %v335 = vunpack.c.l.s8.bf16 %v263
    %v336 = vunpack.c.l.s8.bf16 %v264
    %v337 = vunpack.c.l.s8.bf16 %v265
    %v338 = vunpack.c.l.s8.bf16 %v266
    %v339 = vunpack.c.h.s8.bf16 %v263
    %v340 = vunpack.c.h.s8.bf16 %v264
    %v341 = vunpack.c.h.s8.bf16 %v265
    %v342 = vunpack.c.h.s8.bf16 %v266
    %v343 = vunpack.c.l.s8.bf16 %v267
    %v344 = vunpack.c.l.s8.bf16 %v268
    %v345 = vunpack.c.l.s8.bf16 %v269
    %v346 = vunpack.c.l.s8.bf16 %v270
    %v347 = vunpack.c.h.s8.bf16 %v267
    %v348 = vunpack.c.h.s8.bf16 %v268
    %v349 = vunpack.c.h.s8.bf16 %v269
    %v350 = vunpack.c.h.s8.bf16 %v270
    %v351 = vunpack.c.l.s8.bf16 %v271
    %v352 = vunpack.c.l.s8.bf16 %v272
    %v353 = vunpack.c.l.s8.bf16 %v273
    %v354 = vunpack.c.l.s8.bf16 %v274
    %v355 = vunpack.c.h.s8.bf16 %v271
    %v356 = vunpack.c.h.s8.bf16 %v272
    %v357 = vunpack.c.h.s8.bf16 %v273
    %v358 = vunpack.c.h.s8.bf16 %v274
    %v359 = vunpack.c.l.s8.bf16 %v275
    %v360 = vunpack.c.l.s8.bf16 %v276
    %v361 = vunpack.c.l.s8.bf16 %v277
    %v362 = vunpack.c.l.s8.bf16 %v278
    %v363 = vunpack.c.h.s8.bf16 %v275
    %v364 = vunpack.c.h.s8.bf16 %v276
    %v365 = vunpack.c.h.s8.bf16 %v277
    %v366 = vunpack.c.h.s8.bf16 %v278
    %v367 = vunpack.c.l.s8.bf16 %v279
    %v368 = vunpack.c.l.s8.bf16 %v280
    %v369 = vunpack.c.l.s8.bf16 %v281
    %v370 = vunpack.c.l.s8.bf16 %v282
    %v371 = vunpack.c.h.s8.bf16 %v279
    %v372 = vunpack.c.h.s8.bf16 %v280
    %v373 = vunpack.c.h.s8.bf16 %v281
    %v374 = vunpack.c.h.s8.bf16 %v282
    %v375 = vunpack.c.l.s8.bf16 %v283
    %v376 = vunpack.c.l.s8.bf16 %v284
    %v377 = vunpack.c.l.s8.bf16 %v285
    %v378 = vunpack.c.l.s8.bf16 %v286
    %v379 = vunpack.c.h.s8.bf16 %v283
    %v380 = vunpack.c.h.s8.bf16 %v284
    %v381 = vunpack.c.h.s8.bf16 %v285
    %v382 = vunpack.c.h.s8.bf16 %v286
    %v383 = vunpack.c.l.s8.bf16 %v287
    %v384 = vunpack.c.l.s8.bf16 %v288
    %v385 = vunpack.c.l.s8.bf16 %v289
    %v386 = vunpack.c.l.s8.bf16 %v290
    %v387 = vunpack.c.h.s8.bf16 %v287
    %v388 = vunpack.c.h.s8.bf16 %v288
    %v389 = vunpack.c.h.s8.bf16 %v289
    %v390 = vunpack.c.h.s8.bf16 %v290
    %v391 = vunpack.c.l.s8.bf16 %v291
    %v392 = vunpack.c.l.s8.bf16 %v292
    %v393 = vunpack.c.l.s8.bf16 %v293
    %v394 = vunpack.c.l.s8.bf16 %v294
    %v395 = vunpack.c.h.s8.bf16 %v291
    %v396 = vunpack.c.h.s8.bf16 %v292
    %v397 = vunpack.c.h.s8.bf16 %v293
    %v398 = vunpack.c.h.s8.bf16 %v294
    %v399 = vunpack.c.l.s8.bf16 %v295
    %v400 = vunpack.c.l.s8.bf16 %v296
    %v401 = vunpack.c.l.s8.bf16 %v297
    %v402 = vunpack.c.l.s8.bf16 %v298
    %v403 = vunpack.c.h.s8.bf16 %v295
    %v404 = vunpack.c.h.s8.bf16 %v296
    %v405 = vunpack.c.h.s8.bf16 %v297
    %v406 = vunpack.c.h.s8.bf16 %v298
    %v407 = vunpack.c.l.s8.bf16 %v299
    %v408 = vunpack.c.l.s8.bf16 %v300
    %v409 = vunpack.c.l.s8.bf16 %v301
    %v410 = vunpack.c.l.s8.bf16 %v302
    %v411 = vunpack.c.h.s8.bf16 %v299
    %v412 = vunpack.c.h.s8.bf16 %v300
    %v413 = vunpack.c.h.s8.bf16 %v301
    %v414 = vunpack.c.h.s8.bf16 %v302
    %v415 = vunpack.c.l.s8.bf16 %v303
    %v416 = vunpack.c.l.s8.bf16 %v304
    %v417 = vunpack.c.l.s8.bf16 %v305
    %v418 = vunpack.c.l.s8.bf16 %v306
    %v419 = vunpack.c.h.s8.bf16 %v303
    %v420 = vunpack.c.h.s8.bf16 %v304
    %v421 = vunpack.c.h.s8.bf16 %v305
    %v422 = vunpack.c.h.s8.bf16 %v306
    %v423 = vunpack.c.l.s8.bf16 %v307
    %v424 = vunpack.c.l.s8.bf16 %v308
    %v425 = vunpack.c.l.s8.bf16 %v309
    %v426 = vunpack.c.l.s8.bf16 %v310
    %v427 = vunpack.c.h.s8.bf16 %v307
    %v428 = vunpack.c.h.s8.bf16 %v308
    %v429 = vunpack.c.h.s8.bf16 %v309
    %v430 = vunpack.c.h.s8.bf16 %v310
    %v431 = vunpack.c.l.s8.bf16 %v311
    %v432 = vunpack.c.l.s8.bf16 %v312
    %v433 = vunpack.c.l.s8.bf16 %v313
    %v434 = vunpack.c.l.s8.bf16 %v314
    %v435 = vunpack.c.h.s8.bf16 %v311
    %v436 = vunpack.c.h.s8.bf16 %v312
    %v437 = vunpack.c.h.s8.bf16 %v313
    %v438 = vunpack.c.h.s8.bf16 %v314
    %v439 = vunpack.c.l.s8.bf16 %v315
    %v440 = vunpack.c.l.s8.bf16 %v316
    %v441 = vunpack.c.l.s8.bf16 %v317
    %v442 = vunpack.c.l.s8.bf16 %v318
    %v443 = vunpack.c.h.s8.bf16 %v315
    %v444 = vunpack.c.h.s8.bf16 %v316
    %v445 = vunpack.c.h.s8.bf16 %v317
    %v446 = vunpack.c.h.s8.bf16 %v318
    %v447 = vpack.c.bf16 %v251, %v251
    %v448 = vpack.c.bf16 %v252, %v252
    %v449 = vpack.c.bf16 %v253, %v253
    %v450 = vpack.c.bf16 %v254, %v254
    %451 = vmatprep.subr.bf16.mxu0 %v320
    %452 = vmatpush1.bf16.msra.mxu0 %v319
    %453 = vmatprep.subr.bf16.mxu0 %v324
    %454 = vmatpush1.bf16.msra.mxu0 %v323
    %455 = vmatprep.subr.bf16.mxu0 %v328
    %456 = vmatpush1.bf16.msra.mxu0 %v327
    %457 = vmatprep.subr.bf16.mxu0 %v332
    %458 = vmatpush1.bf16.msra.mxu0 %v331
    %459 = vmatprep.subr.bf16.mxu0 %v336
    %460 = vmatpush1.bf16.msra.mxu0 %v335
    %461 = vmatprep.subr.bf16.mxu0 %v340
    %462 = vmatpush1.bf16.msra.mxu0 %v339
    %463 = vmatprep.subr.bf16.mxu0 %v344
    %464 = vmatpush1.bf16.msra.mxu0 %v343
    %465 = vmatprep.subr.bf16.mxu0 %v348
    %466 = vmatpush1.bf16.msra.mxu0 %v347
    %467 = vmatprep.subr.bf16.mxu0 %v352
    %468 = vmatpush1.bf16.msra.mxu0 %v351
    %469 = vmatprep.subr.bf16.mxu0 %v356
    %470 = vmatpush1.bf16.msra.mxu0 %v355
    %471 = vmatprep.subr.bf16.mxu0 %v360
    %472 = vmatpush1.bf16.msra.mxu0 %v359
    %473 = vmatprep.subr.bf16.mxu0 %v364
    %474 = vmatpush1.bf16.msra.mxu0 %v363
    %475 = vmatprep.subr.bf16.mxu0 %v368
    %476 = vmatpush1.bf16.msra.mxu0 %v367
    %477 = vmatprep.subr.bf16.mxu0 %v372
    %478 = vmatpush1.bf16.msra.mxu0 %v371
    %479 = vmatprep.subr.bf16.mxu0 %v376
    %480 = vmatpush1.bf16.msra.mxu0 %v375
    %481 = vmatprep.subr.bf16.mxu0 %v380
    %482 = vmatpush1.bf16.msra.mxu0 %v379
    %483 = vmatprep.mubr.bf16.mxu0 %v448
    %484 = vmatmul.mubr.bf16.gmra.mrb[0].mxu0 %v447
    %v485 = vpop.f32.mrb[0].mxu0
    %v486 = vadd.f32 0.0, %v485
    %v487 = vpop.f32.mrb[0].mxu0
    %v488 = vadd.f32 0.0, %v487
    %v489 = vpop.f32.mrb[0].mxu0
    %v490 = vpop.f32.mrb[0].mxu0
    %491 = vdwg.mxu0
    %492 = vmatprep.subr.bf16.mxu0 %v384
    %493 = vmatpush1.bf16.msra.mxu0 %v383
    %494 = vmatprep.subr.bf16.mxu0 %v388
    %495 = vmatpush1.bf16.msra.mxu0 %v387
    %496 = vmatprep.subr.bf16.mxu0 %v392
    %497 = vmatpush1.bf16.msra.mxu0 %v391
    %498 = vmatprep.subr.bf16.mxu0 %v396
    %499 = vmatpush1.bf16.msra.mxu0 %v395
    %500 = vmatprep.subr.bf16.mxu0 %v400
    %501 = vmatpush1.bf16.msra.mxu0 %v399
    %502 = vmatprep.subr.bf16.mxu0 %v404
    %503 = vmatpush1.bf16.msra.mxu0 %v403
    %504 = vmatprep.subr.bf16.mxu0 %v408
    %505 = vmatpush1.bf16.msra.mxu0 %v407
    %506 = vmatprep.subr.bf16.mxu0 %v412
    %507 = vmatpush1.bf16.msra.mxu0 %v411
    %508 = vmatprep.subr.bf16.mxu0 %v416
    %509 = vmatpush1.bf16.msra.mxu0 %v415
    %510 = vmatprep.subr.bf16.mxu0 %v420
    %511 = vmatpush1.bf16.msra.mxu0 %v419
    %512 = vmatprep.subr.bf16.mxu0 %v424
    %513 = vmatpush1.bf16.msra.mxu0 %v423
    %514 = vmatprep.subr.bf16.mxu0 %v428
    %515 = vmatpush1.bf16.msra.mxu0 %v427
    %516 = vmatprep.subr.bf16.mxu0 %v432
    %517 = vmatpush1.bf16.msra.mxu0 %v431
    %518 = vmatprep.subr.bf16.mxu0 %v436
    %519 = vmatpush1.bf16.msra.mxu0 %v435
    %520 = vmatprep.subr.bf16.mxu0 %v440
    %521 = vmatpush1.bf16.msra.mxu0 %v439
    %522 = vmatprep.subr.bf16.mxu0 %v444
    %523 = vmatpush1.bf16.msra.mxu0 %v443
    %524 = vmatprep.mubr.bf16.mxu0 %v450
    %525 = vmatmul.mubr.bf16.gmra.mrb[0].mxu0 %v449
    %v526 = vpop.f32.mrb[0].mxu0
    %v527 = vadd.f32 %v486, %v526
    %v528 = vpop.f32.mrb[0].mxu0
    %v529 = vadd.f32 %v488, %v528
    %v530 = vpop.f32.mrb[0].mxu0
    %v531 = vpop.f32.mrb[0].mxu0
    %532 = vdwg.mxu0
    %533 = vmatprep.subr.bf16.mxu0 %v322
    %534 = vmatpush1.bf16.msra.mxu0 %v321
    %535 = vmatprep.subr.bf16.mxu0 %v326
    %536 = vmatpush1.bf16.msra.mxu0 %v325
    %537 = vmatprep.subr.bf16.mxu0 %v330
    %538 = vmatpush1.bf16.msra.mxu0 %v329
    %539 = vmatprep.subr.bf16.mxu0 %v334
    %540 = vmatpush1.bf16.msra.mxu0 %v333
    %541 = vmatprep.subr.bf16.mxu0 %v338
    %542 = vmatpush1.bf16.msra.mxu0 %v337
    %543 = vmatprep.subr.bf16.mxu0 %v342
    %544 = vmatpush1.bf16.msra.mxu0 %v341
    %545 = vmatprep.subr.bf16.mxu0 %v346
    %546 = vmatpush1.bf16.msra.mxu0 %v345
    %547 = vmatprep.subr.bf16.mxu0 %v350
    %548 = vmatpush1.bf16.msra.mxu0 %v349
    %549 = vmatprep.subr.bf16.mxu0 %v354
    %550 = vmatpush1.bf16.msra.mxu0 %v353
    %551 = vmatprep.subr.bf16.mxu0 %v358
    %552 = vmatpush1.bf16.msra.mxu0 %v357
    %553 = vmatprep.subr.bf16.mxu0 %v362
    %554 = vmatpush1.bf16.msra.mxu0 %v361
    %555 = vmatprep.subr.bf16.mxu0 %v366
    %556 = vmatpush1.bf16.msra.mxu0 %v365
    %557 = vmatprep.subr.bf16.mxu0 %v370
    %558 = vmatpush1.bf16.msra.mxu0 %v369
    %559 = vmatprep.subr.bf16.mxu0 %v374
    %560 = vmatpush1.bf16.msra.mxu0 %v373
    %561 = vmatprep.subr.bf16.mxu0 %v378
    %562 = vmatpush1.bf16.msra.mxu0 %v377
    %563 = vmatprep.subr.bf16.mxu0 %v382
    %564 = vmatpush1.bf16.msra.mxu0 %v381
    %565 = vmatprep.mubr.bf16.mxu0 %v448
    %566 = vmatmul.mubr.bf16.gmra.mrb[0].mxu0 %v447
    %v567 = vpop.f32.mrb[0].mxu0
    %v568 = vadd.f32 0.0, %v567
    %v569 = vpop.f32.mrb[0].mxu0
    %v570 = vadd.f32 0.0, %v569
    %v571 = vpop.f32.mrb[0].mxu0
    %v572 = vpop.f32.mrb[0].mxu0
    %573 = vdwg.mxu0
    %574 = vmatprep.subr.bf16.mxu0 %v386
    %575 = vmatpush1.bf16.msra.mxu0 %v385
    %576 = vmatprep.subr.bf16.mxu0 %v390
    %577 = vmatpush1.bf16.msra.mxu0 %v389
    %578 = vmatprep.subr.bf16.mxu0 %v394
    %579 = vmatpush1.bf16.msra.mxu0 %v393
    %580 = vmatprep.subr.bf16.mxu0 %v398
    %581 = vmatpush1.bf16.msra.mxu0 %v397
    %582 = vmatprep.subr.bf16.mxu0 %v402
    %583 = vmatpush1.bf16.msra.mxu0 %v401
    %584 = vmatprep.subr.bf16.mxu0 %v406
    %585 = vmatpush1.bf16.msra.mxu0 %v405
    %586 = vmatprep.subr.bf16.mxu0 %v410
    %587 = vmatpush1.bf16.msra.mxu0 %v409
    %588 = vmatprep.subr.bf16.mxu0 %v414
    %589 = vmatpush1.bf16.msra.mxu0 %v413
    %590 = vmatprep.subr.bf16.mxu0 %v418
    %591 = vmatpush1.bf16.msra.mxu0 %v417
    %592 = vmatprep.subr.bf16.mxu0 %v422
    %593 = vmatpush1.bf16.msra.mxu0 %v421
    %594 = vmatprep.subr.bf16.mxu0 %v426
    %595 = vmatpush1.bf16.msra.mxu0 %v425
    %596 = vmatprep.subr.bf16.mxu0 %v430
    %597 = vmatpush1.bf16.msra.mxu0 %v429
    %598 = vmatprep.subr.bf16.mxu0 %v434
    %599 = vmatpush1.bf16.msra.mxu0 %v433
    %600 = vmatprep.subr.bf16.mxu0 %v438
    %601 = vmatpush1.bf16.msra.mxu0 %v437
    %602 = vmatprep.subr.bf16.mxu0 %v442
    %603 = vmatpush1.bf16.msra.mxu0 %v441
    %604 = vmatprep.subr.bf16.mxu0 %v446
    %605 = vmatpush1.bf16.msra.mxu0 %v445
    %606 = vmatprep.mubr.bf16.mxu0 %v450
    %607 = vmatmul.mubr.bf16.gmra.mrb[0].mxu0 %v449
    %v608 = vpop.f32.mrb[0].mxu0
    %v609 = vadd.f32 %v568, %v608
    %v610 = vpop.f32.mrb[0].mxu0
    %v611 = vadd.f32 %v570, %v610
    %v612 = vpop.f32.mrb[0].mxu0
    %v613 = vpop.f32.mrb[0].mxu0
    %614 = vdwg.mxu0
    %v615 = vld [vmem:[#allocation10 + $0x4] sm:$0xf]
    %v617 = vlaneseq
    %v618 = vshrl.u32 %v617, 7
    %v619 = vsub.s32 0, %v618
    %v620 = vrot.slane %v615, %v619
    %v621 = vlaneseq
    %v622 = vshrl.u32 %v621, 7
    %v623 = vsub.s32 1, %v622
    %v624 = vrot.slane %v615, %v623
    %v625 = vlaneseq
    %v626 = vshrl.u32 %v625, 7
    %v627 = vsub.s32 2, %v626
    %v628 = vrot.slane %v615, %v627
    %v629 = vlaneseq
    %v630 = vshrl.u32 %v629, 7
    %v631 = vsub.s32 3, %v630
    %v632 = vrot.slane %v615, %v631
    %v637 = vmul.f32 %v527, %v620
    %v638 = vmul.f32 %v529, %v624
    %v639 = vmul.f32 %v609, %v628
    %v640 = vmul.f32 %v611, %v632
    %v641 = vld [vmem:[#allocation11 + $0x4] sm:$0xf]
    %v643 = vlaneseq
    %v644 = vshrl.u32 %v643, 7
    %v645 = vsub.s32 0, %v644
    %v646 = vrot.slane %v641, %v645
    %v647 = vlaneseq
    %v648 = vshrl.u32 %v647, 7
    %v649 = vsub.s32 1, %v648
    %v650 = vrot.slane %v641, %v649
    %v651 = vlaneseq
    %v652 = vshrl.u32 %v651, 7
    %v653 = vsub.s32 2, %v652
    %v654 = vrot.slane %v641, %v653
    %v655 = vlaneseq
    %v656 = vshrl.u32 %v655, 7
    %v657 = vsub.s32 3, %v656
    %v658 = vrot.slane %v641, %v657
    %v663 = vadd.f32 %v637, %v646
    %v664 = vadd.f32 %v638, %v650
    %v665 = vadd.f32 %v639, %v654
    %v666 = vadd.f32 %v640, %v658
    %v667 = vmax.f32 %v663, 0.0
    %v668 = vmax.f32 %v664, 0.0
    %v669 = vmax.f32 %v665, 0.0
    %v670 = vmax.f32 %v666, 0.0
    %v671 = vld [vmem:[#allocation7 + $0x20] sm:$0xff]
    %v672 = vld [vmem:[#allocation7 + $0x28] sm:$0xff]
    %v673 = vld [vmem:[#allocation7 + $0x30] sm:$0xff]
    %v674 = vld [vmem:[#allocation7 + $0x38] sm:$0xff]
    %v675 = vld [vmem:[#allocation7 + $0xa0] sm:$0xff]
    %v676 = vld [vmem:[#allocation7 + $0xa8] sm:$0xff]
    %v677 = vld [vmem:[#allocation7 + $0xb0] sm:$0xff]
    %v678 = vld [vmem:[#allocation7 + $0xb8] sm:$0xff]
    %v679 = vld [vmem:[#allocation7 + $0x120] sm:$0xff]
    %v680 = vld [vmem:[#allocation7 + $0x128] sm:$0xff]
    %v681 = vld [vmem:[#allocation7 + $0x130] sm:$0xff]
    %v682 = vld [vmem:[#allocation7 + $0x138] sm:$0xff]
    %v683 = vld [vmem:[#allocation7 + $0x1a0] sm:$0xff]
    %v684 = vld [vmem:[#allocation7 + $0x1a8] sm:$0xff]
    %v685 = vld [vmem:[#allocation7 + $0x1b0] sm:$0xff]
    %v686 = vld [vmem:[#allocation7 + $0x1b8] sm:$0xff]
    %v687 = vld [vmem:[#allocation7 + $0x220] sm:$0xff]
    %v688 = vld [vmem:[#allocation7 + $0x228] sm:$0xff]
    %v689 = vld [vmem:[#allocation7 + $0x230] sm:$0xff]
    %v690 = vld [vmem:[#allocation7 + $0x238] sm:$0xff]
    %v691 = vld [vmem:[#allocation7 + $0x2a0] sm:$0xff]
    %v692 = vld [vmem:[#allocation7 + $0x2a8] sm:$0xff]
    %v693 = vld [vmem:[#allocation7 + $0x2b0] sm:$0xff]
    %v694 = vld [vmem:[#allocation7 + $0x2b8] sm:$0xff]
    %v695 = vld [vmem:[#allocation7 + $0x320] sm:$0xff]
    %v696 = vld [vmem:[#allocation7 + $0x328] sm:$0xff]
    %v697 = vld [vmem:[#allocation7 + $0x330] sm:$0xff]
    %v698 = vld [vmem:[#allocation7 + $0x338] sm:$0xff]
    %v699 = vld [vmem:[#allocation7 + $0x3a0] sm:$0xff]
    %v700 = vld [vmem:[#allocation7 + $0x3a8] sm:$0xff]
    %v701 = vld [vmem:[#allocation7 + $0x3b0] sm:$0xff]
    %v702 = vld [vmem:[#allocation7 + $0x3b8] sm:$0xff]
    %v703 = vld [vmem:[#allocation7 + $0x420] sm:$0xff]
    %v704 = vld [vmem:[#allocation7 + $0x428] sm:$0xff]
    %v705 = vld [vmem:[#allocation7 + $0x430] sm:$0xff]
    %v706 = vld [vmem:[#allocation7 + $0x438] sm:$0xff]
    %v707 = vld [vmem:[#allocation7 + $0x4a0] sm:$0xff]
    %v708 = vld [vmem:[#allocation7 + $0x4a8] sm:$0xff]
    %v709 = vld [vmem:[#allocation7 + $0x4b0] sm:$0xff]
    %v710 = vld [vmem:[#allocation7 + $0x4b8] sm:$0xff]
    %v711 = vld [vmem:[#allocation7 + $0x520] sm:$0xff]
    %v712 = vld [vmem:[#allocation7 + $0x528] sm:$0xff]
    %v713 = vld [vmem:[#allocation7 + $0x530] sm:$0xff]
    %v714 = vld [vmem:[#allocation7 + $0x538] sm:$0xff]
    %v715 = vld [vmem:[#allocation7 + $0x5a0] sm:$0xff]
    %v716 = vld [vmem:[#allocation7 + $0x5a8] sm:$0xff]
    %v717 = vld [vmem:[#allocation7 + $0x5b0] sm:$0xff]
    %v718 = vld [vmem:[#allocation7 + $0x5b8] sm:$0xff]
    %v719 = vld [vmem:[#allocation7 + $0x620] sm:$0xff]
    %v720 = vld [vmem:[#allocation7 + $0x628] sm:$0xff]
    %v721 = vld [vmem:[#allocation7 + $0x630] sm:$0xff]
    %v722 = vld [vmem:[#allocation7 + $0x638] sm:$0xff]
    %v723 = vld [vmem:[#allocation7 + $0x6a0] sm:$0xff]
    %v724 = vld [vmem:[#allocation7 + $0x6a8] sm:$0xff]
    %v725 = vld [vmem:[#allocation7 + $0x6b0] sm:$0xff]
    %v726 = vld [vmem:[#allocation7 + $0x6b8] sm:$0xff]
    %v727 = vld [vmem:[#allocation7 + $0x720] sm:$0xff]
    %v728 = vld [vmem:[#allocation7 + $0x728] sm:$0xff]
    %v729 = vld [vmem:[#allocation7 + $0x730] sm:$0xff]
    %v730 = vld [vmem:[#allocation7 + $0x738] sm:$0xff]
    %v731 = vld [vmem:[#allocation7 + $0x7a0] sm:$0xff]
    %v732 = vld [vmem:[#allocation7 + $0x7a8] sm:$0xff]
    %v733 = vld [vmem:[#allocation7 + $0x7b0] sm:$0xff]
    %v734 = vld [vmem:[#allocation7 + $0x7b8] sm:$0xff]
    %v735 = vunpack.c.l.s8.bf16 %v671
    %v736 = vunpack.c.l.s8.bf16 %v672
    %v737 = vunpack.c.l.s8.bf16 %v673
    %v738 = vunpack.c.l.s8.bf16 %v674
    %v739 = vunpack.c.h.s8.bf16 %v671
    %v740 = vunpack.c.h.s8.bf16 %v672
    %v741 = vunpack.c.h.s8.bf16 %v673
    %v742 = vunpack.c.h.s8.bf16 %v674
    %v743 = vunpack.c.l.s8.bf16 %v675
    %v744 = vunpack.c.l.s8.bf16 %v676
    %v745 = vunpack.c.l.s8.bf16 %v677
    %v746 = vunpack.c.l.s8.bf16 %v678
    %v747 = vunpack.c.h.s8.bf16 %v675
    %v748 = vunpack.c.h.s8.bf16 %v676
    %v749 = vunpack.c.h.s8.bf16 %v677
    %v750 = vunpack.c.h.s8.bf16 %v678
    %v751 = vunpack.c.l.s8.bf16 %v679
    %v752 = vunpack.c.l.s8.bf16 %v680
    %v753 = vunpack.c.l.s8.bf16 %v681
    %v754 = vunpack.c.l.s8.bf16 %v682
    %v755 = vunpack.c.h.s8.bf16 %v679
    %v756 = vunpack.c.h.s8.bf16 %v680
    %v757 = vunpack.c.h.s8.bf16 %v681
    %v758 = vunpack.c.h.s8.bf16 %v682
    %v759 = vunpack.c.l.s8.bf16 %v683
    %v760 = vunpack.c.l.s8.bf16 %v684
    %v761 = vunpack.c.l.s8.bf16 %v685
    %v762 = vunpack.c.l.s8.bf16 %v686
    %v763 = vunpack.c.h.s8.bf16 %v683
    %v764 = vunpack.c.h.s8.bf16 %v684
    %v765 = vunpack.c.h.s8.bf16 %v685
    %v766 = vunpack.c.h.s8.bf16 %v686
    %v767 = vunpack.c.l.s8.bf16 %v687
    %v768 = vunpack.c.l.s8.bf16 %v688
    %v769 = vunpack.c.l.s8.bf16 %v689
    %v770 = vunpack.c.l.s8.bf16 %v690
    %v771 = vunpack.c.h.s8.bf16 %v687
    %v772 = vunpack.c.h.s8.bf16 %v688
    %v773 = vunpack.c.h.s8.bf16 %v689
    %v774 = vunpack.c.h.s8.bf16 %v690
    %v775 = vunpack.c.l.s8.bf16 %v691
    %v776 = vunpack.c.l.s8.bf16 %v692
    %v777 = vunpack.c.l.s8.bf16 %v693
    %v778 = vunpack.c.l.s8.bf16 %v694
    %v779 = vunpack.c.h.s8.bf16 %v691
    %v780 = vunpack.c.h.s8.bf16 %v692
    %v781 = vunpack.c.h.s8.bf16 %v693
    %v782 = vunpack.c.h.s8.bf16 %v694
    %v783 = vunpack.c.l.s8.bf16 %v695
    %v784 = vunpack.c.l.s8.bf16 %v696
    %v785 = vunpack.c.l.s8.bf16 %v697
    %v786 = vunpack.c.l.s8.bf16 %v698
    %v787 = vunpack.c.h.s8.bf16 %v695
    %v788 = vunpack.c.h.s8.bf16 %v696
    %v789 = vunpack.c.h.s8.bf16 %v697
    %v790 = vunpack.c.h.s8.bf16 %v698
    %v791 = vunpack.c.l.s8.bf16 %v699
    %v792 = vunpack.c.l.s8.bf16 %v700
    %v793 = vunpack.c.l.s8.bf16 %v701
    %v794 = vunpack.c.l.s8.bf16 %v702
    %v795 = vunpack.c.h.s8.bf16 %v699
    %v796 = vunpack.c.h.s8.bf16 %v700
    %v797 = vunpack.c.h.s8.bf16 %v701
    %v798 = vunpack.c.h.s8.bf16 %v702
    %v799 = vunpack.c.l.s8.bf16 %v703
    %v800 = vunpack.c.l.s8.bf16 %v704
    %v801 = vunpack.c.l.s8.bf16 %v705
    %v802 = vunpack.c.l.s8.bf16 %v706
    %v803 = vunpack.c.h.s8.bf16 %v703
    %v804 = vunpack.c.h.s8.bf16 %v704
    %v805 = vunpack.c.h.s8.bf16 %v705
    %v806 = vunpack.c.h.s8.bf16 %v706
    %v807 = vunpack.c.l.s8.bf16 %v707
    %v808 = vunpack.c.l.s8.bf16 %v708
    %v809 = vunpack.c.l.s8.bf16 %v709
    %v810 = vunpack.c.l.s8.bf16 %v710
    %v811 = vunpack.c.h.s8.bf16 %v707
    %v812 = vunpack.c.h.s8.bf16 %v708
    %v813 = vunpack.c.h.s8.bf16 %v709
    %v814 = vunpack.c.h.s8.bf16 %v710
    %v815 = vunpack.c.l.s8.bf16 %v711
    %v816 = vunpack.c.l.s8.bf16 %v712
    %v817 = vunpack.c.l.s8.bf16 %v713
    %v818 = vunpack.c.l.s8.bf16 %v714
    %v819 = vunpack.c.h.s8.bf16 %v711
    %v820 = vunpack.c.h.s8.bf16 %v712
    %v821 = vunpack.c.h.s8.bf16 %v713
    %v822 = vunpack.c.h.s8.bf16 %v714
    %v823 = vunpack.c.l.s8.bf16 %v715
    %v824 = vunpack.c.l.s8.bf16 %v716
    %v825 = vunpack.c.l.s8.bf16 %v717
    %v826 = vunpack.c.l.s8.bf16 %v718
    %v827 = vunpack.c.h.s8.bf16 %v715
    %v828 = vunpack.c.h.s8.bf16 %v716
    %v829 = vunpack.c.h.s8.bf16 %v717
    %v830 = vunpack.c.h.s8.bf16 %v718
    %v831 = vunpack.c.l.s8.bf16 %v719
    %v832 = vunpack.c.l.s8.bf16 %v720
    %v833 = vunpack.c.l.s8.bf16 %v721
    %v834 = vunpack.c.l.s8.bf16 %v722
    %v835 = vunpack.c.h.s8.bf16 %v719
    %v836 = vunpack.c.h.s8.bf16 %v720
    %v837 = vunpack.c.h.s8.bf16 %v721
    %v838 = vunpack.c.h.s8.bf16 %v722
    %v839 = vunpack.c.l.s8.bf16 %v723
    %v840 = vunpack.c.l.s8.bf16 %v724
    %v841 = vunpack.c.l.s8.bf16 %v725
    %v842 = vunpack.c.l.s8.bf16 %v726
    %v843 = vunpack.c.h.s8.bf16 %v723
    %v844 = vunpack.c.h.s8.bf16 %v724
    %v845 = vunpack.c.h.s8.bf16 %v725
    %v846 = vunpack.c.h.s8.bf16 %v726
    %v847 = vunpack.c.l.s8.bf16 %v727
    %v848 = vunpack.c.l.s8.bf16 %v728
    %v849 = vunpack.c.l.s8.bf16 %v729
    %v850 = vunpack.c.l.s8.bf16 %v730
    %v851 = vunpack.c.h.s8.bf16 %v727
    %v852 = vunpack.c.h.s8.bf16 %v728
    %v853 = vunpack.c.h.s8.bf16 %v729
    %v854 = vunpack.c.h.s8.bf16 %v730
    %v855 = vunpack.c.l.s8.bf16 %v731
    %v856 = vunpack.c.l.s8.bf16 %v732
    %v857 = vunpack.c.l.s8.bf16 %v733
    %v858 = vunpack.c.l.s8.bf16 %v734
    %v859 = vunpack.c.h.s8.bf16 %v731
    %v860 = vunpack.c.h.s8.bf16 %v732
    %v861 = vunpack.c.h.s8.bf16 %v733
    %v862 = vunpack.c.h.s8.bf16 %v734
    %v863 = vpack.c.bf16 %v667, %v667
    %v864 = vpack.c.bf16 %v668, %v668
    %v865 = vpack.c.bf16 %v669, %v669
    %v866 = vpack.c.bf16 %v670, %v670
    %867 = vmatprep.subr.bf16.mxu0 %v736
    %868 = vmatpush1.bf16.msra.mxu0 %v735
    %869 = vmatprep.subr.bf16.mxu0 %v740
    %870 = vmatpush1.bf16.msra.mxu0 %v739
    %871 = vmatprep.subr.bf16.mxu0 %v744
    %872 = vmatpush1.bf16.msra.mxu0 %v743
    %873 = vmatprep.subr.bf16.mxu0 %v748
    %874 = vmatpush1.bf16.msra.mxu0 %v747
    %875 = vmatprep.subr.bf16.mxu0 %v752
    %876 = vmatpush1.bf16.msra.mxu0 %v751
    %877 = vmatprep.subr.bf16.mxu0 %v756
    %878 = vmatpush1.bf16.msra.mxu0 %v755
    %879 = vmatprep.subr.bf16.mxu0 %v760
    %880 = vmatpush1.bf16.msra.mxu0 %v759
    %881 = vmatprep.subr.bf16.mxu0 %v764
    %882 = vmatpush1.bf16.msra.mxu0 %v763
    %883 = vmatprep.subr.bf16.mxu0 %v768
    %884 = vmatpush1.bf16.msra.mxu0 %v767
    %885 = vmatprep.subr.bf16.mxu0 %v772
    %886 = vmatpush1.bf16.msra.mxu0 %v771
    %887 = vmatprep.subr.bf16.mxu0 %v776
    %888 = vmatpush1.bf16.msra.mxu0 %v775
    %889 = vmatprep.subr.bf16.mxu0 %v780
    %890 = vmatpush1.bf16.msra.mxu0 %v779
    %891 = vmatprep.subr.bf16.mxu0 %v784
    %892 = vmatpush1.bf16.msra.mxu0 %v783
    %893 = vmatprep.subr.bf16.mxu0 %v788
    %894 = vmatpush1.bf16.msra.mxu0 %v787
    %895 = vmatprep.subr.bf16.mxu0 %v792
    %896 = vmatpush1.bf16.msra.mxu0 %v791
    %897 = vmatprep.subr.bf16.mxu0 %v796
    %898 = vmatpush1.bf16.msra.mxu0 %v795
    %899 = vmatprep.mubr.bf16.mxu0 %v864
    %900 = vmatmul.mubr.bf16.gmra.mrb[0].mxu0 %v863
    %v901 = vpop.f32.mrb[0].mxu0
    %v902 = vadd.f32 0.0, %v901
    %v903 = vpop.f32.mrb[0].mxu0
    %v904 = vadd.f32 0.0, %v903
    %v905 = vpop.f32.mrb[0].mxu0
    %v906 = vpop.f32.mrb[0].mxu0
    %907 = vdwg.mxu0
    %908 = vmatprep.subr.bf16.mxu0 %v800
    %909 = vmatpush1.bf16.msra.mxu0 %v799
    %910 = vmatprep.subr.bf16.mxu0 %v804
    %911 = vmatpush1.bf16.msra.mxu0 %v803
    %912 = vmatprep.subr.bf16.mxu0 %v808
    %913 = vmatpush1.bf16.msra.mxu0 %v807
    %914 = vmatprep.subr.bf16.mxu0 %v812
    %915 = vmatpush1.bf16.msra.mxu0 %v811
    %916 = vmatprep.subr.bf16.mxu0 %v816
    %917 = vmatpush1.bf16.msra.mxu0 %v815
    %918 = vmatprep.subr.bf16.mxu0 %v820
    %919 = vmatpush1.bf16.msra.mxu0 %v819
    %920 = vmatprep.subr.bf16.mxu0 %v824
    %921 = vmatpush1.bf16.msra.mxu0 %v823
    %922 = vmatprep.subr.bf16.mxu0 %v828
    %923 = vmatpush1.bf16.msra.mxu0 %v827
    %924 = vmatprep.subr.bf16.mxu0 %v832
    %925 = vmatpush1.bf16.msra.mxu0 %v831
    %926 = vmatprep.subr.bf16.mxu0 %v836
    %927 = vmatpush1.bf16.msra.mxu0 %v835
    %928 = vmatprep.subr.bf16.mxu0 %v840
    %929 = vmatpush1.bf16.msra.mxu0 %v839
    %930 = vmatprep.subr.bf16.mxu0 %v844
    %931 = vmatpush1.bf16.msra.mxu0 %v843
    %932 = vmatprep.subr.bf16.mxu0 %v848
    %933 = vmatpush1.bf16.msra.mxu0 %v847
    %934 = vmatprep.subr.bf16.mxu0 %v852
    %935 = vmatpush1.bf16.msra.mxu0 %v851
    %936 = vmatprep.subr.bf16.mxu0 %v856
    %937 = vmatpush1.bf16.msra.mxu0 %v855
    %938 = vmatprep.subr.bf16.mxu0 %v860
    %939 = vmatpush1.bf16.msra.mxu0 %v859
    %940 = vmatprep.mubr.bf16.mxu0 %v866
    %941 = vmatmul.mubr.bf16.gmra.mrb[0].mxu0 %v865
    %v942 = vpop.f32.mrb[0].mxu0
    %v943 = vadd.f32 %v902, %v942
    %v944 = vpop.f32.mrb[0].mxu0
    %v945 = vadd.f32 %v904, %v944
    %v946 = vpop.f32.mrb[0].mxu0
    %v947 = vpop.f32.mrb[0].mxu0
    %948 = vdwg.mxu0
    %949 = vmatprep.subr.bf16.mxu0 %v738
    %950 = vmatpush1.bf16.msra.mxu0 %v737
    %951 = vmatprep.subr.bf16.mxu0 %v742
    %952 = vmatpush1.bf16.msra.mxu0 %v741
    %953 = vmatprep.subr.bf16.mxu0 %v746
    %954 = vmatpush1.bf16.msra.mxu0 %v745
    %955 = vmatprep.subr.bf16.mxu0 %v750
    %956 = vmatpush1.bf16.msra.mxu0 %v749
    %957 = vmatprep.subr.bf16.mxu0 %v754
    %958 = vmatpush1.bf16.msra.mxu0 %v753
    %959 = vmatprep.subr.bf16.mxu0 %v758
    %960 = vmatpush1.bf16.msra.mxu0 %v757
    %961 = vmatprep.subr.bf16.mxu0 %v762
    %962 = vmatpush1.bf16.msra.mxu0 %v761
    %963 = vmatprep.subr.bf16.mxu0 %v766
    %964 = vmatpush1.bf16.msra.mxu0 %v765
    %965 = vmatprep.subr.bf16.mxu0 %v770
    %966 = vmatpush1.bf16.msra.mxu0 %v769
    %967 = vmatprep.subr.bf16.mxu0 %v774
    %968 = vmatpush1.bf16.msra.mxu0 %v773
    %969 = vmatprep.subr.bf16.mxu0 %v778
    %970 = vmatpush1.bf16.msra.mxu0 %v777
    %971 = vmatprep.subr.bf16.mxu0 %v782
    %972 = vmatpush1.bf16.msra.mxu0 %v781
    %973 = vmatprep.subr.bf16.mxu0 %v786
    %974 = vmatpush1.bf16.msra.mxu0 %v785
    %975 = vmatprep.subr.bf16.mxu0 %v790
    %976 = vmatpush1.bf16.msra.mxu0 %v789
    %977 = vmatprep.subr.bf16.mxu0 %v794
    %978 = vmatpush1.bf16.msra.mxu0 %v793
    %979 = vmatprep.subr.bf16.mxu0 %v798
    %980 = vmatpush1.bf16.msra.mxu0 %v797
    %981 = vmatprep.mubr.bf16.mxu0 %v864
    %982 = vmatmul.mubr.bf16.gmra.mrb[0].mxu0 %v863
    %v983 = vpop.f32.mrb[0].mxu0
    %v984 = vadd.f32 0.0, %v983
    %v985 = vpop.f32.mrb[0].mxu0
    %v986 = vadd.f32 0.0, %v985
    %v987 = vpop.f32.mrb[0].mxu0
    %v988 = vpop.f32.mrb[0].mxu0
    %989 = vdwg.mxu0
    %990 = vmatprep.subr.bf16.mxu0 %v802
    %991 = vmatpush1.bf16.msra.mxu0 %v801
    %992 = vmatprep.subr.bf16.mxu0 %v806
    %993 = vmatpush1.bf16.msra.mxu0 %v805
    %994 = vmatprep.subr.bf16.mxu0 %v810
    %995 = vmatpush1.bf16.msra.mxu0 %v809
    %996 = vmatprep.subr.bf16.mxu0 %v814
    %997 = vmatpush1.bf16.msra.mxu0 %v813
    %998 = vmatprep.subr.bf16.mxu0 %v818
    %999 = vmatpush1.bf16.msra.mxu0 %v817
    %1000 = vmatprep.subr.bf16.mxu0 %v822
    %1001 = vmatpush1.bf16.msra.mxu0 %v821
    %1002 = vmatprep.subr.bf16.mxu0 %v826
    %1003 = vmatpush1.bf16.msra.mxu0 %v825
    %1004 = vmatprep.subr.bf16.mxu0 %v830
    %1005 = vmatpush1.bf16.msra.mxu0 %v829
    %1006 = vmatprep.subr.bf16.mxu0 %v834
    %1007 = vmatpush1.bf16.msra.mxu0 %v833
    %1008 = vmatprep.subr.bf16.mxu0 %v838
    %1009 = vmatpush1.bf16.msra.mxu0 %v837
    %1010 = vmatprep.subr.bf16.mxu0 %v842
    %1011 = vmatpush1.bf16.msra.mxu0 %v841
    %1012 = vmatprep.subr.bf16.mxu0 %v846
    %1013 = vmatpush1.bf16.msra.mxu0 %v845
    %1014 = vmatprep.subr.bf16.mxu0 %v850
    %1015 = vmatpush1.bf16.msra.mxu0 %v849
    %1016 = vmatprep.subr.bf16.mxu0 %v854
    %1017 = vmatpush1.bf16.msra.mxu0 %v853
    %1018 = vmatprep.subr.bf16.mxu0 %v858
    %1019 = vmatpush1.bf16.msra.mxu0 %v857
    %1020 = vmatprep.subr.bf16.mxu0 %v862
    %1021 = vmatpush1.bf16.msra.mxu0 %v861
    %1022 = vmatprep.mubr.bf16.mxu0 %v866
    %1023 = vmatmul.mubr.bf16.gmra.mrb[0].mxu0 %v865
    %v1024 = vpop.f32.mrb[0].mxu0
    %v1025 = vadd.f32 %v984, %v1024
    %v1026 = vpop.f32.mrb[0].mxu0
    %v1027 = vadd.f32 %v986, %v1026
    %v1028 = vpop.f32.mrb[0].mxu0
    %v1029 = vpop.f32.mrb[0].mxu0
    %1030 = vdwg.mxu0
    %v1031 = vld [vmem:[#allocation10 + $0x8] sm:$0xf]
    %v1033 = vlaneseq
    %v1034 = vshrl.u32 %v1033, 7
    %v1035 = vsub.s32 0, %v1034
    %v1036 = vrot.slane %v1031, %v1035
    %v1037 = vlaneseq
    %v1038 = vshrl.u32 %v1037, 7
    %v1039 = vsub.s32 1, %v1038
    %v1040 = vrot.slane %v1031, %v1039
    %v1041 = vlaneseq
    %v1042 = vshrl.u32 %v1041, 7
    %v1043 = vsub.s32 2, %v1042
    %v1044 = vrot.slane %v1031, %v1043
    %v1045 = vlaneseq
    %v1046 = vshrl.u32 %v1045, 7
    %v1047 = vsub.s32 3, %v1046
    %v1048 = vrot.slane %v1031, %v1047
    %v1053 = vmul.f32 %v943, %v1036
    %v1054 = vmul.f32 %v945, %v1040
    %v1055 = vmul.f32 %v1025, %v1044
    %v1056 = vmul.f32 %v1027, %v1048
    %v1057 = vld [vmem:[#allocation11 + $0x8] sm:$0xf]
    %v1059 = vlaneseq
    %v1060 = vshrl.u32 %v1059, 7
    %v1061 = vsub.s32 0, %v1060
    %v1062 = vrot.slane %v1057, %v1061
    %v1063 = vlaneseq
    %v1064 = vshrl.u32 %v1063, 7
    %v1065 = vsub.s32 1, %v1064
    %v1066 = vrot.slane %v1057, %v1065
    %v1067 = vlaneseq
    %v1068 = vshrl.u32 %v1067, 7
    %v1069 = vsub.s32 2, %v1068
    %v1070 = vrot.slane %v1057, %v1069
    %v1071 = vlaneseq
    %v1072 = vshrl.u32 %v1071, 7
    %v1073 = vsub.s32 3, %v1072
    %v1074 = vrot.slane %v1057, %v1073
    %v1079 = vadd.f32 %v1053, %v1062
    %v1080 = vadd.f32 %v1054, %v1066
    %v1081 = vadd.f32 %v1055, %v1070
    %v1082 = vadd.f32 %v1056, %v1074
    %v1083 = vmax.f32 %v1079, 0.0
    %v1084 = vmax.f32 %v1080, 0.0
    %v1085 = vmax.f32 %v1081, 0.0
    %v1086 = vmax.f32 %v1082, 0.0
    %v1087 = vld [vmem:[#allocation7 + $0x40] sm:$0xff]
    %v1088 = vld [vmem:[#allocation7 + $0x48] sm:$0xff]
    %v1089 = vld [vmem:[#allocation7 + $0x50] sm:$0xff]
    %v1090 = vld [vmem:[#allocation7 + $0x58] sm:$0xff]
    %v1091 = vld [vmem:[#allocation7 + $0x60] sm:$0xff]
    %v1092 = vld [vmem:[#allocation7 + $0x68] sm:$0xff]
    %v1093 = vld [vmem:[#allocation7 + $0x70] sm:$0xff]
    %v1094 = vld [vmem:[#allocation7 + $0x78] sm:$0xff]
    %v1095 = vld [vmem:[#allocation7 + $0xc0] sm:$0xff]
    %v1096 = vld [vmem:[#allocation7 + $0xc8] sm:$0xff]
    %v1097 = vld [vmem:[#allocation7 + $0xd0] sm:$0xff]
    %v1098 = vld [vmem:[#allocation7 + $0xd8] sm:$0xff]
    %v1099 = vld [vmem:[#allocation7 + $0xe0] sm:$0xff]
    %v1100 = vld [vmem:[#allocation7 + $0xe8] sm:$0xff]
    %v1101 = vld [vmem:[#allocation7 + $0xf0] sm:$0xff]
    %v1102 = vld [vmem:[#allocation7 + $0xf8] sm:$0xff]
    %v1103 = vld [vmem:[#allocation7 + $0x140] sm:$0xff]
    %v1104 = vld [vmem:[#allocation7 + $0x148] sm:$0xff]
    %v1105 = vld [vmem:[#allocation7 + $0x150] sm:$0xff]
    %v1106 = vld [vmem:[#allocation7 + $0x158] sm:$0xff]
    %v1107 = vld [vmem:[#allocation7 + $0x160] sm:$0xff]
    %v1108 = vld [vmem:[#allocation7 + $0x168] sm:$0xff]
    %v1109 = vld [vmem:[#allocation7 + $0x170] sm:$0xff]
    %v1110 = vld [vmem:[#allocation7 + $0x178] sm:$0xff]
    %v1111 = vld [vmem:[#allocation7 + $0x1c0] sm:$0xff]
    %v1112 = vld [vmem:[#allocation7 + $0x1c8] sm:$0xff]
    %v1113 = vld [vmem:[#allocation7 + $0x1d0] sm:$0xff]
    %v1114 = vld [vmem:[#allocation7 + $0x1d8] sm:$0xff]
    %v1115 = vld [vmem:[#allocation7 + $0x1e0] sm:$0xff]
    %v1116 = vld [vmem:[#allocation7 + $0x1e8] sm:$0xff]
    %v1117 = vld [vmem:[#allocation7 + $0x1f0] sm:$0xff]
    %v1118 = vld [vmem:[#allocation7 + $0x1f8] sm:$0xff]
    %v1119 = vld [vmem:[#allocation7 + $0x240] sm:$0xff]
    %v1120 = vld [vmem:[#allocation7 + $0x248] sm:$0xff]
    %v1121 = vld [vmem:[#allocation7 + $0x250] sm:$0xff]
    %v1122 = vld [vmem:[#allocation7 + $0x258] sm:$0xff]
    %v1123 = vld [vmem:[#allocation7 + $0x260] sm:$0xff]
    %v1124 = vld [vmem:[#allocation7 + $0x268] sm:$0xff]
    %v1125 = vld [vmem:[#allocation7 + $0x270] sm:$0xff]
    %v1126 = vld [vmem:[#allocation7 + $0x278] sm:$0xff]
    %v1127 = vld [vmem:[#allocation7 + $0x2c0] sm:$0xff]
    %v1128 = vld [vmem:[#allocation7 + $0x2c8] sm:$0xff]
    %v1129 = vld [vmem:[#allocation7 + $0x2d0] sm:$0xff]
    %v1130 = vld [vmem:[#allocation7 + $0x2d8] sm:$0xff]
    %v1131 = vld [vmem:[#allocation7 + $0x2e0] sm:$0xff]
    %v1132 = vld [vmem:[#allocation7 + $0x2e8] sm:$0xff]
    %v1133 = vld [vmem:[#allocation7 + $0x2f0] sm:$0xff]
    %v1134 = vld [vmem:[#allocation7 + $0x2f8] sm:$0xff]
    %v1135 = vld [vmem:[#allocation7 + $0x340] sm:$0xff]
    %v1136 = vld [vmem:[#allocation7 + $0x348] sm:$0xff]
    %v1137 = vld [vmem:[#allocation7 + $0x350] sm:$0xff]
    %v1138 = vld [vmem:[#allocation7 + $0x358] sm:$0xff]
    %v1139 = vld [vmem:[#allocation7 + $0x360] sm:$0xff]
    %v1140 = vld [vmem:[#allocation7 + $0x368] sm:$0xff]
    %v1141 = vld [vmem:[#allocation7 + $0x370] sm:$0xff]
    %v1142 = vld [vmem:[#allocation7 + $0x378] sm:$0xff]
    %v1143 = vld [vmem:[#allocation7 + $0x3c0] sm:$0xff]
    %v1144 = vld [vmem:[#allocation7 + $0x3c8] sm:$0xff]
    %v1145 = vld [vmem:[#allocation7 + $0x3d0] sm:$0xff]
    %v1146 = vld [vmem:[#allocation7 + $0x3d8] sm:$0xff]
    %v1147 = vld [vmem:[#allocation7 + $0x3e0] sm:$0xff]
    %v1148 = vld [vmem:[#allocation7 + $0x3e8] sm:$0xff]
    %v1149 = vld [vmem:[#allocation7 + $0x3f0] sm:$0xff]
    %v1150 = vld [vmem:[#allocation7 + $0x3f8] sm:$0xff]
    %v1151 = vld [vmem:[#allocation7 + $0x440] sm:$0xff]
    %v1152 = vld [vmem:[#allocation7 + $0x448] sm:$0xff]
    %v1153 = vld [vmem:[#allocation7 + $0x450] sm:$0xff]
    %v1154 = vld [vmem:[#allocation7 + $0x458] sm:$0xff]
    %v1155 = vld [vmem:[#allocation7 + $0x460] sm:$0xff]
    %v1156 = vld [vmem:[#allocation7 + $0x468] sm:$0xff]
    %v1157 = vld [vmem:[#allocation7 + $0x470] sm:$0xff]
    %v1158 = vld [vmem:[#allocation7 + $0x478] sm:$0xff]
    %v1159 = vld [vmem:[#allocation7 + $0x4c0] sm:$0xff]
    %v1160 = vld [vmem:[#allocation7 + $0x4c8] sm:$0xff]
    %v1161 = vld [vmem:[#allocation7 + $0x4d0] sm:$0xff]
    %v1162 = vld [vmem:[#allocation7 + $0x4d8] sm:$0xff]
    %v1163 = vld [vmem:[#allocation7 + $0x4e0] sm:$0xff]
    %v1164 = vld [vmem:[#allocation7 + $0x4e8] sm:$0xff]
    %v1165 = vld [vmem:[#allocation7 + $0x4f0] sm:$0xff]
    %v1166 = vld [vmem:[#allocation7 + $0x4f8] sm:$0xff]
    %v1167 = vld [vmem:[#allocation7 + $0x540] sm:$0xff]
    %v1168 = vld [vmem:[#allocation7 + $0x548] sm:$0xff]
    %v1169 = vld [vmem:[#allocation7 + $0x550] sm:$0xff]
    %v1170 = vld [vmem:[#allocation7 + $0x558] sm:$0xff]
    %v1171 = vld [vmem:[#allocation7 + $0x560] sm:$0xff]
    %v1172 = vld [vmem:[#allocation7 + $0x568] sm:$0xff]
    %v1173 = vld [vmem:[#allocation7 + $0x570] sm:$0xff]
    %v1174 = vld [vmem:[#allocation7 + $0x578] sm:$0xff]
    %v1175 = vld [vmem:[#allocation7 + $0x5c0] sm:$0xff]
    %v1176 = vld [vmem:[#allocation7 + $0x5c8] sm:$0xff]
    %v1177 = vld [vmem:[#allocation7 + $0x5d0] sm:$0xff]
    %v1178 = vld [vmem:[#allocation7 + $0x5d8] sm:$0xff]
    %v1179 = vld [vmem:[#allocation7 + $0x5e0] sm:$0xff]
    %v1180 = vld [vmem:[#allocation7 + $0x5e8] sm:$0xff]
    %v1181 = vld [vmem:[#allocation7 + $0x5f0] sm:$0xff]
    %v1182 = vld [vmem:[#allocation7 + $0x5f8] sm:$0xff]
    %v1183 = vld [vmem:[#allocation7 + $0x640] sm:$0xff]
    %v1184 = vld [vmem:[#allocation7 + $0x648] sm:$0xff]
    %v1185 = vld [vmem:[#allocation7 + $0x650] sm:$0xff]
    %v1186 = vld [vmem:[#allocation7 + $0x658] sm:$0xff]
    %v1187 = vld [vmem:[#allocation7 + $0x660] sm:$0xff]
    %v1188 = vld [vmem:[#allocation7 + $0x668] sm:$0xff]
    %v1189 = vld [vmem:[#allocation7 + $0x670] sm:$0xff]
    %v1190 = vld [vmem:[#allocation7 + $0x678] sm:$0xff]
    %v1191 = vld [vmem:[#allocation7 + $0x6c0] sm:$0xff]
    %v1192 = vld [vmem:[#allocation7 + $0x6c8] sm:$0xff]
    %v1193 = vld [vmem:[#allocation7 + $0x6d0] sm:$0xff]
    %v1194 = vld [vmem:[#allocation7 + $0x6d8] sm:$0xff]
    %v1195 = vld [vmem:[#allocation7 + $0x6e0] sm:$0xff]
    %v1196 = vld [vmem:[#allocation7 + $0x6e8] sm:$0xff]
    %v1197 = vld [vmem:[#allocation7 + $0x6f0] sm:$0xff]
    %v1198 = vld [vmem:[#allocation7 + $0x6f8] sm:$0xff]
    %v1199 = vld [vmem:[#allocation7 + $0x740] sm:$0xff]
    %v1200 = vld [vmem:[#allocation7 + $0x748] sm:$0xff]
    %v1201 = vld [vmem:[#allocation7 + $0x750] sm:$0xff]
    %v1202 = vld [vmem:[#allocation7 + $0x758] sm:$0xff]
    %v1203 = vld [vmem:[#allocation7 + $0x760] sm:$0xff]
    %v1204 = vld [vmem:[#allocation7 + $0x768] sm:$0xff]
    %v1205 = vld [vmem:[#allocation7 + $0x770] sm:$0xff]
    %v1206 = vld [vmem:[#allocation7 + $0x778] sm:$0xff]
    %v1207 = vld [vmem:[#allocation7 + $0x7c0] sm:$0xff]
    %v1208 = vld [vmem:[#allocation7 + $0x7c8] sm:$0xff]
    %v1209 = vld [vmem:[#allocation7 + $0x7d0] sm:$0xff]
    %v1210 = vld [vmem:[#allocation7 + $0x7d8] sm:$0xff]
    %v1211 = vld [vmem:[#allocation7 + $0x7e0] sm:$0xff]
    %v1212 = vld [vmem:[#allocation7 + $0x7e8] sm:$0xff]
    %v1213 = vld [vmem:[#allocation7 + $0x7f0] sm:$0xff]
    %v1214 = vld [vmem:[#allocation7 + $0x7f8] sm:$0xff]
    %v1215 = vunpack.c.l.s8.bf16 %v1087
    %v1216 = vunpack.c.l.s8.bf16 %v1088
    %v1217 = vunpack.c.l.s8.bf16 %v1089
    %v1218 = vunpack.c.l.s8.bf16 %v1090
    %v1219 = vunpack.c.l.s8.bf16 %v1091
    %v1220 = vunpack.c.l.s8.bf16 %v1092
    %v1221 = vunpack.c.l.s8.bf16 %v1093
    %v1222 = vunpack.c.l.s8.bf16 %v1094
    %v1223 = vunpack.c.h.s8.bf16 %v1087
    %v1224 = vunpack.c.h.s8.bf16 %v1088
    %v1225 = vunpack.c.h.s8.bf16 %v1089
    %v1226 = vunpack.c.h.s8.bf16 %v1090
    %v1227 = vunpack.c.h.s8.bf16 %v1091
    %v1228 = vunpack.c.h.s8.bf16 %v1092
    %v1229 = vunpack.c.h.s8.bf16 %v1093
    %v1230 = vunpack.c.h.s8.bf16 %v1094
    %v1231 = vunpack.c.l.s8.bf16 %v1095
    %v1232 = vunpack.c.l.s8.bf16 %v1096
    %v1233 = vunpack.c.l.s8.bf16 %v1097
    %v1234 = vunpack.c.l.s8.bf16 %v1098
    %v1235 = vunpack.c.l.s8.bf16 %v1099
    %v1236 = vunpack.c.l.s8.bf16 %v1100
    %v1237 = vunpack.c.l.s8.bf16 %v1101
    %v1238 = vunpack.c.l.s8.bf16 %v1102
    %v1239 = vunpack.c.h.s8.bf16 %v1095
    %v1240 = vunpack.c.h.s8.bf16 %v1096
    %v1241 = vunpack.c.h.s8.bf16 %v1097
    %v1242 = vunpack.c.h.s8.bf16 %v1098
    %v1243 = vunpack.c.h.s8.bf16 %v1099
    %v1244 = vunpack.c.h.s8.bf16 %v1100
    %v1245 = vunpack.c.h.s8.bf16 %v1101
    %v1246 = vunpack.c.h.s8.bf16 %v1102
    %v1247 = vunpack.c.l.s8.bf16 %v1103
    %v1248 = vunpack.c.l.s8.bf16 %v1104
    %v1249 = vunpack.c.l.s8.bf16 %v1105
    %v1250 = vunpack.c.l.s8.bf16 %v1106
    %v1251 = vunpack.c.l.s8.bf16 %v1107
    %v1252 = vunpack.c.l.s8.bf16 %v1108
    %v1253 = vunpack.c.l.s8.bf16 %v1109
    %v1254 = vunpack.c.l.s8.bf16 %v1110
    %v1255 = vunpack.c.h.s8.bf16 %v1103
    %v1256 = vunpack.c.h.s8.bf16 %v1104
    %v1257 = vunpack.c.h.s8.bf16 %v1105
    %v1258 = vunpack.c.h.s8.bf16 %v1106
    %v1259 = vunpack.c.h.s8.bf16 %v1107
    %v1260 = vunpack.c.h.s8.bf16 %v1108
    %v1261 = vunpack.c.h.s8.bf16 %v1109
    %v1262 = vunpack.c.h.s8.bf16 %v1110
    %v1263 = vunpack.c.l.s8.bf16 %v1111
    %v1264 = vunpack.c.l.s8.bf16 %v1112
    %v1265 = vunpack.c.l.s8.bf16 %v1113
    %v1266 = vunpack.c.l.s8.bf16 %v1114
    %v1267 = vunpack.c.l.s8.bf16 %v1115
    %v1268 = vunpack.c.l.s8.bf16 %v1116
    %v1269 = vunpack.c.l.s8.bf16 %v1117
    %v1270 = vunpack.c.l.s8.bf16 %v1118
    %v1271 = vunpack.c.h.s8.bf16 %v1111
    %v1272 = vunpack.c.h.s8.bf16 %v1112
    %v1273 = vunpack.c.h.s8.bf16 %v1113
    %v1274 = vunpack.c.h.s8.bf16 %v1114
    %v1275 = vunpack.c.h.s8.bf16 %v1115
    %v1276 = vunpack.c.h.s8.bf16 %v1116
    %v1277 = vunpack.c.h.s8.bf16 %v1117
    %v1278 = vunpack.c.h.s8.bf16 %v1118
    %v1279 = vunpack.c.l.s8.bf16 %v1119
    %v1280 = vunpack.c.l.s8.bf16 %v1120
    %v1281 = vunpack.c.l.s8.bf16 %v1121
    %v1282 = vunpack.c.l.s8.bf16 %v1122
    %v1283 = vunpack.c.l.s8.bf16 %v1123
    %v1284 = vunpack.c.l.s8.bf16 %v1124
    %v1285 = vunpack.c.l.s8.bf16 %v1125
    %v1286 = vunpack.c.l.s8.bf16 %v1126
    %v1287 = vunpack.c.h.s8.bf16 %v1119
    %v1288 = vunpack.c.h.s8.bf16 %v1120
    %v1289 = vunpack.c.h.s8.bf16 %v1121
    %v1290 = vunpack.c.h.s8.bf16 %v1122
    %v1291 = vunpack.c.h.s8.bf16 %v1123
    %v1292 = vunpack.c.h.s8.bf16 %v1124
    %v1293 = vunpack.c.h.s8.bf16 %v1125
    %v1294 = vunpack.c.h.s8.bf16 %v1126
    %v1295 = vunpack.c.l.s8.bf16 %v1127
    %v1296 = vunpack.c.l.s8.bf16 %v1128
    %v1297 = vunpack.c.l.s8.bf16 %v1129
    %v1298 = vunpack.c.l.s8.bf16 %v1130
    %v1299 = vunpack.c.l.s8.bf16 %v1131
    %v1300 = vunpack.c.l.s8.bf16 %v1132
    %v1301 = vunpack.c.l.s8.bf16 %v1133
    %v1302 = vunpack.c.l.s8.bf16 %v1134
    %v1303 = vunpack.c.h.s8.bf16 %v1127
    %v1304 = vunpack.c.h.s8.bf16 %v1128
    %v1305 = vunpack.c.h.s8.bf16 %v1129
    %v1306 = vunpack.c.h.s8.bf16 %v1130
    %v1307 = vunpack.c.h.s8.bf16 %v1131
    %v1308 = vunpack.c.h.s8.bf16 %v1132
    %v1309 = vunpack.c.h.s8.bf16 %v1133
    %v1310 = vunpack.c.h.s8.bf16 %v1134
    %v1311 = vunpack.c.l.s8.bf16 %v1135
    %v1312 = vunpack.c.l.s8.bf16 %v1136
    %v1313 = vunpack.c.l.s8.bf16 %v1137
    %v1314 = vunpack.c.l.s8.bf16 %v1138
    %v1315 = vunpack.c.l.s8.bf16 %v1139
    %v1316 = vunpack.c.l.s8.bf16 %v1140
    %v1317 = vunpack.c.l.s8.bf16 %v1141
    %v1318 = vunpack.c.l.s8.bf16 %v1142
    %v1319 = vunpack.c.h.s8.bf16 %v1135
    %v1320 = vunpack.c.h.s8.bf16 %v1136
    %v1321 = vunpack.c.h.s8.bf16 %v1137
    %v1322 = vunpack.c.h.s8.bf16 %v1138
    %v1323 = vunpack.c.h.s8.bf16 %v1139
    %v1324 = vunpack.c.h.s8.bf16 %v1140
    %v1325 = vunpack.c.h.s8.bf16 %v1141
    %v1326 = vunpack.c.h.s8.bf16 %v1142
    %v1327 = vunpack.c.l.s8.bf16 %v1143
    %v1328 = vunpack.c.l.s8.bf16 %v1144
    %v1329 = vunpack.c.l.s8.bf16 %v1145
    %v1330 = vunpack.c.l.s8.bf16 %v1146
    %v1331 = vunpack.c.l.s8.bf16 %v1147
    %v1332 = vunpack.c.l.s8.bf16 %v1148
    %v1333 = vunpack.c.l.s8.bf16 %v1149
    %v1334 = vunpack.c.l.s8.bf16 %v1150
    %v1335 = vunpack.c.h.s8.bf16 %v1143
    %v1336 = vunpack.c.h.s8.bf16 %v1144
    %v1337 = vunpack.c.h.s8.bf16 %v1145
    %v1338 = vunpack.c.h.s8.bf16 %v1146
    %v1339 = vunpack.c.h.s8.bf16 %v1147
    %v1340 = vunpack.c.h.s8.bf16 %v1148
    %v1341 = vunpack.c.h.s8.bf16 %v1149
    %v1342 = vunpack.c.h.s8.bf16 %v1150
    %v1343 = vunpack.c.l.s8.bf16 %v1151
    %v1344 = vunpack.c.l.s8.bf16 %v1152
    %v1345 = vunpack.c.l.s8.bf16 %v1153
    %v1346 = vunpack.c.l.s8.bf16 %v1154
    %v1347 = vunpack.c.l.s8.bf16 %v1155
    %v1348 = vunpack.c.l.s8.bf16 %v1156
    %v1349 = vunpack.c.l.s8.bf16 %v1157
    %v1350 = vunpack.c.l.s8.bf16 %v1158
    %v1351 = vunpack.c.h.s8.bf16 %v1151
    %v1352 = vunpack.c.h.s8.bf16 %v1152
    %v1353 = vunpack.c.h.s8.bf16 %v1153
    %v1354 = vunpack.c.h.s8.bf16 %v1154
    %v1355 = vunpack.c.h.s8.bf16 %v1155
    %v1356 = vunpack.c.h.s8.bf16 %v1156
    %v1357 = vunpack.c.h.s8.bf16 %v1157
    %v1358 = vunpack.c.h.s8.bf16 %v1158
    %v1359 = vunpack.c.l.s8.bf16 %v1159
    %v1360 = vunpack.c.l.s8.bf16 %v1160
    %v1361 = vunpack.c.l.s8.bf16 %v1161
    %v1362 = vunpack.c.l.s8.bf16 %v1162
    %v1363 = vunpack.c.l.s8.bf16 %v1163
    %v1364 = vunpack.c.l.s8.bf16 %v1164
    %v1365 = vunpack.c.l.s8.bf16 %v1165
    %v1366 = vunpack.c.l.s8.bf16 %v1166
    %v1367 = vunpack.c.h.s8.bf16 %v1159
    %v1368 = vunpack.c.h.s8.bf16 %v1160
    %v1369 = vunpack.c.h.s8.bf16 %v1161
    %v1370 = vunpack.c.h.s8.bf16 %v1162
    %v1371 = vunpack.c.h.s8.bf16 %v1163
    %v1372 = vunpack.c.h.s8.bf16 %v1164
    %v1373 = vunpack.c.h.s8.bf16 %v1165
    %v1374 = vunpack.c.h.s8.bf16 %v1166
    %v1375 = vunpack.c.l.s8.bf16 %v1167
    %v1376 = vunpack.c.l.s8.bf16 %v1168
    %v1377 = vunpack.c.l.s8.bf16 %v1169
    %v1378 = vunpack.c.l.s8.bf16 %v1170
    %v1379 = vunpack.c.l.s8.bf16 %v1171
    %v1380 = vunpack.c.l.s8.bf16 %v1172
    %v1381 = vunpack.c.l.s8.bf16 %v1173
    %v1382 = vunpack.c.l.s8.bf16 %v1174
    %v1383 = vunpack.c.h.s8.bf16 %v1167
    %v1384 = vunpack.c.h.s8.bf16 %v1168
    %v1385 = vunpack.c.h.s8.bf16 %v1169
    %v1386 = vunpack.c.h.s8.bf16 %v1170
    %v1387 = vunpack.c.h.s8.bf16 %v1171
    %v1388 = vunpack.c.h.s8.bf16 %v1172
    %v1389 = vunpack.c.h.s8.bf16 %v1173
    %v1390 = vunpack.c.h.s8.bf16 %v1174
    %v1391 = vunpack.c.l.s8.bf16 %v1175
    %v1392 = vunpack.c.l.s8.bf16 %v1176
    %v1393 = vunpack.c.l.s8.bf16 %v1177
    %v1394 = vunpack.c.l.s8.bf16 %v1178
    %v1395 = vunpack.c.l.s8.bf16 %v1179
    %v1396 = vunpack.c.l.s8.bf16 %v1180
    %v1397 = vunpack.c.l.s8.bf16 %v1181
    %v1398 = vunpack.c.l.s8.bf16 %v1182
    %v1399 = vunpack.c.h.s8.bf16 %v1175
    %v1400 = vunpack.c.h.s8.bf16 %v1176
    %v1401 = vunpack.c.h.s8.bf16 %v1177
    %v1402 = vunpack.c.h.s8.bf16 %v1178
    %v1403 = vunpack.c.h.s8.bf16 %v1179
    %v1404 = vunpack.c.h.s8.bf16 %v1180
    %v1405 = vunpack.c.h.s8.bf16 %v1181
    %v1406 = vunpack.c.h.s8.bf16 %v1182
    %v1407 = vunpack.c.l.s8.bf16 %v1183
    %v1408 = vunpack.c.l.s8.bf16 %v1184
    %v1409 = vunpack.c.l.s8.bf16 %v1185
    %v1410 = vunpack.c.l.s8.bf16 %v1186
    %v1411 = vunpack.c.l.s8.bf16 %v1187
    %v1412 = vunpack.c.l.s8.bf16 %v1188
    %v1413 = vunpack.c.l.s8.bf16 %v1189
    %v1414 = vunpack.c.l.s8.bf16 %v1190
    %v1415 = vunpack.c.h.s8.bf16 %v1183
    %v1416 = vunpack.c.h.s8.bf16 %v1184
    %v1417 = vunpack.c.h.s8.bf16 %v1185
    %v1418 = vunpack.c.h.s8.bf16 %v1186
    %v1419 = vunpack.c.h.s8.bf16 %v1187
    %v1420 = vunpack.c.h.s8.bf16 %v1188
    %v1421 = vunpack.c.h.s8.bf16 %v1189
    %v1422 = vunpack.c.h.s8.bf16 %v1190
    %v1423 = vunpack.c.l.s8.bf16 %v1191
    %v1424 = vunpack.c.l.s8.bf16 %v1192
    %v1425 = vunpack.c.l.s8.bf16 %v1193
    %v1426 = vunpack.c.l.s8.bf16 %v1194
    %v1427 = vunpack.c.l.s8.bf16 %v1195
    %v1428 = vunpack.c.l.s8.bf16 %v1196
    %v1429 = vunpack.c.l.s8.bf16 %v1197
    %v1430 = vunpack.c.l.s8.bf16 %v1198
    %v1431 = vunpack.c.h.s8.bf16 %v1191
    %v1432 = vunpack.c.h.s8.bf16 %v1192
    %v1433 = vunpack.c.h.s8.bf16 %v1193
    %v1434 = vunpack.c.h.s8.bf16 %v1194
    %v1435 = vunpack.c.h.s8.bf16 %v1195
    %v1436 = vunpack.c.h.s8.bf16 %v1196
    %v1437 = vunpack.c.h.s8.bf16 %v1197
    %v1438 = vunpack.c.h.s8.bf16 %v1198
    %v1439 = vunpack.c.l.s8.bf16 %v1199
    %v1440 = vunpack.c.l.s8.bf16 %v1200
    %v1441 = vunpack.c.l.s8.bf16 %v1201
    %v1442 = vunpack.c.l.s8.bf16 %v1202
    %v1443 = vunpack.c.l.s8.bf16 %v1203
    %v1444 = vunpack.c.l.s8.bf16 %v1204
    %v1445 = vunpack.c.l.s8.bf16 %v1205
    %v1446 = vunpack.c.l.s8.bf16 %v1206
    %v1447 = vunpack.c.h.s8.bf16 %v1199
    %v1448 = vunpack.c.h.s8.bf16 %v1200
    %v1449 = vunpack.c.h.s8.bf16 %v1201
    %v1450 = vunpack.c.h.s8.bf16 %v1202
    %v1451 = vunpack.c.h.s8.bf16 %v1203
    %v1452 = vunpack.c.h.s8.bf16 %v1204
    %v1453 = vunpack.c.h.s8.bf16 %v1205
    %v1454 = vunpack.c.h.s8.bf16 %v1206
    %v1455 = vunpack.c.l.s8.bf16 %v1207
    %v1456 = vunpack.c.l.s8.bf16 %v1208
    %v1457 = vunpack.c.l.s8.bf16 %v1209
    %v1458 = vunpack.c.l.s8.bf16 %v1210
    %v1459 = vunpack.c.l.s8.bf16 %v1211
    %v1460 = vunpack.c.l.s8.bf16 %v1212
    %v1461 = vunpack.c.l.s8.bf16 %v1213
    %v1462 = vunpack.c.l.s8.bf16 %v1214
    %v1463 = vunpack.c.h.s8.bf16 %v1207
    %v1464 = vunpack.c.h.s8.bf16 %v1208
    %v1465 = vunpack.c.h.s8.bf16 %v1209
    %v1466 = vunpack.c.h.s8.bf16 %v1210
    %v1467 = vunpack.c.h.s8.bf16 %v1211
    %v1468 = vunpack.c.h.s8.bf16 %v1212
    %v1469 = vunpack.c.h.s8.bf16 %v1213
    %v1470 = vunpack.c.h.s8.bf16 %v1214
    %v1471 = vpack.c.bf16 %v1083, %v1083
    %v1472 = vpack.c.bf16 %v1084, %v1084
    %v1473 = vpack.c.bf16 %v1085, %v1085
    %v1474 = vpack.c.bf16 %v1086, %v1086
    %1475 = vmatprep.subr.bf16.mxu0 %v1216
    %1476 = vmatpush1.bf16.msra.mxu0 %v1215
    %1477 = vmatprep.subr.bf16.mxu0 %v1224
    %1478 = vmatpush1.bf16.msra.mxu0 %v1223
    %1479 = vmatprep.subr.bf16.mxu0 %v1232
    %1480 = vmatpush1.bf16.msra.mxu0 %v1231
    %1481 = vmatprep.subr.bf16.mxu0 %v1240
    %1482 = vmatpush1.bf16.msra.mxu0 %v1239
    %1483 = vmatprep.subr.bf16.mxu0 %v1248
    %1484 = vmatpush1.bf16.msra.mxu0 %v1247
    %1485 = vmatprep.subr.bf16.mxu0 %v1256
    %1486 = vmatpush1.bf16.msra.mxu0 %v1255
    %1487 = vmatprep.subr.bf16.mxu0 %v1264
    %1488 = vmatpush1.bf16.msra.mxu0 %v1263
    %1489 = vmatprep.subr.bf16.mxu0 %v1272
    %1490 = vmatpush1.bf16.msra.mxu0 %v1271
    %1491 = vmatprep.subr.bf16.mxu0 %v1280
    %1492 = vmatpush1.bf16.msra.mxu0 %v1279
    %1493 = vmatprep.subr.bf16.mxu0 %v1288
    %1494 = vmatpush1.bf16.msra.mxu0 %v1287
    %1495 = vmatprep.subr.bf16.mxu0 %v1296
    %1496 = vmatpush1.bf16.msra.mxu0 %v1295
    %1497 = vmatprep.subr.bf16.mxu0 %v1304
    %1498 = vmatpush1.bf16.msra.mxu0 %v1303
    %1499 = vmatprep.subr.bf16.mxu0 %v1312
    %1500 = vmatpush1.bf16.msra.mxu0 %v1311
    %1501 = vmatprep.subr.bf16.mxu0 %v1320
    %1502 = vmatpush1.bf16.msra.mxu0 %v1319
    %1503 = vmatprep.subr.bf16.mxu0 %v1328
    %1504 = vmatpush1.bf16.msra.mxu0 %v1327
    %1505 = vmatprep.subr.bf16.mxu0 %v1336
    %1506 = vmatpush1.bf16.msra.mxu0 %v1335
    %1507 = vmatprep.mubr.bf16.mxu0 %v1472
    %1508 = vmatmul.mubr.bf16.gmra.mrb[0].mxu0 %v1471
    %v1509 = vpop.f32.mrb[0].mxu0
    %v1510 = vadd.f32 0.0, %v1509
    %v1511 = vpop.f32.mrb[0].mxu0
    %v1512 = vadd.f32 0.0, %v1511
    %v1513 = vpop.f32.mrb[0].mxu0
    %v1514 = vpop.f32.mrb[0].mxu0
    %1515 = vdwg.mxu0
    %1516 = vmatprep.subr.bf16.mxu0 %v1344
    %1517 = vmatpush1.bf16.msra.mxu0 %v1343
    %1518 = vmatprep.subr.bf16.mxu0 %v1352
    %1519 = vmatpush1.bf16.msra.mxu0 %v1351
    %1520 = vmatprep.subr.bf16.mxu0 %v1360
    %1521 = vmatpush1.bf16.msra.mxu0 %v1359
    %1522 = vmatprep.subr.bf16.mxu0 %v1368
    %1523 = vmatpush1.bf16.msra.mxu0 %v1367
    %1524 = vmatprep.subr.bf16.mxu0 %v1376
    %1525 = vmatpush1.bf16.msra.mxu0 %v1375
    %1526 = vmatprep.subr.bf16.mxu0 %v1384
    %1527 = vmatpush1.bf16.msra.mxu0 %v1383
    %1528 = vmatprep.subr.bf16.mxu0 %v1392
    %1529 = vmatpush1.bf16.msra.mxu0 %v1391
    %1530 = vmatprep.subr.bf16.mxu0 %v1400
    %1531 = vmatpush1.bf16.msra.mxu0 %v1399
    %1532 = vmatprep.subr.bf16.mxu0 %v1408
    %1533 = vmatpush1.bf16.msra.mxu0 %v1407
    %1534 = vmatprep.subr.bf16.mxu0 %v1416
    %1535 = vmatpush1.bf16.msra.mxu0 %v1415
    %1536 = vmatprep.subr.bf16.mxu0 %v1424
    %1537 = vmatpush1.bf16.msra.mxu0 %v1423
    %1538 = vmatprep.subr.bf16.mxu0 %v1432
    %1539 = vmatpush1.bf16.msra.mxu0 %v1431
    %1540 = vmatprep.subr.bf16.mxu0 %v1440
    %1541 = vmatpush1.bf16.msra.mxu0 %v1439
    %1542 = vmatprep.subr.bf16.mxu0 %v1448
    %1543 = vmatpush1.bf16.msra.mxu0 %v1447
    %1544 = vmatprep.subr.bf16.mxu0 %v1456
    %1545 = vmatpush1.bf16.msra.mxu0 %v1455
    %1546 = vmatprep.subr.bf16.mxu0 %v1464
    %1547 = vmatpush1.bf16.msra.mxu0 %v1463
    %1548 = vmatprep.mubr.bf16.mxu0 %v1474
    %1549 = vmatmul.mubr.bf16.gmra.mrb[0].mxu0 %v1473
    %v1550 = vpop.f32.mrb[0].mxu0
    %v1551 = vadd.f32 %v1510, %v1550
    %v1552 = vpop.f32.mrb[0].mxu0
    %v1553 = vadd.f32 %v1512, %v1552
    %v1554 = vpop.f32.mrb[0].mxu0
    %v1555 = vpop.f32.mrb[0].mxu0
    %1556 = vdwg.mxu0
    %1557 = vmatprep.subr.bf16.mxu0 %v1218
    %1558 = vmatpush1.bf16.msra.mxu0 %v1217
    %1559 = vmatprep.subr.bf16.mxu0 %v1226
    %1560 = vmatpush1.bf16.msra.mxu0 %v1225
    %1561 = vmatprep.subr.bf16.mxu0 %v1234
    %1562 = vmatpush1.bf16.msra.mxu0 %v1233
    %1563 = vmatprep.subr.bf16.mxu0 %v1242
    %1564 = vmatpush1.bf16.msra.mxu0 %v1241
    %1565 = vmatprep.subr.bf16.mxu0 %v1250
    %1566 = vmatpush1.bf16.msra.mxu0 %v1249
    %1567 = vmatprep.subr.bf16.mxu0 %v1258
    %1568 = vmatpush1.bf16.msra.mxu0 %v1257
    %1569 = vmatprep.subr.bf16.mxu0 %v1266
    %1570 = vmatpush1.bf16.msra.mxu0 %v1265
    %1571 = vmatprep.subr.bf16.mxu0 %v1274
    %1572 = vmatpush1.bf16.msra.mxu0 %v1273
    %1573 = vmatprep.subr.bf16.mxu0 %v1282
    %1574 = vmatpush1.bf16.msra.mxu0 %v1281
    %1575 = vmatprep.subr.bf16.mxu0 %v1290
    %1576 = vmatpush1.bf16.msra.mxu0 %v1289
    %1577 = vmatprep.subr.bf16.mxu0 %v1298
    %1578 = vmatpush1.bf16.msra.mxu0 %v1297
    %1579 = vmatprep.subr.bf16.mxu0 %v1306
    %1580 = vmatpush1.bf16.msra.mxu0 %v1305
    %1581 = vmatprep.subr.bf16.mxu0 %v1314
    %1582 = vmatpush1.bf16.msra.mxu0 %v1313
    %1583 = vmatprep.subr.bf16.mxu0 %v1322
    %1584 = vmatpush1.bf16.msra.mxu0 %v1321
    %1585 = vmatprep.subr.bf16.mxu0 %v1330
    %1586 = vmatpush1.bf16.msra.mxu0 %v1329
    %1587 = vmatprep.subr.bf16.mxu0 %v1338
    %1588 = vmatpush1.bf16.msra.mxu0 %v1337
    %1589 = vmatprep.mubr.bf16.mxu0 %v1472
    %1590 = vmatmul.mubr.bf16.gmra.mrb[0].mxu0 %v1471
    %v1591 = vpop.f32.mrb[0].mxu0
    %v1592 = vadd.f32 0.0, %v1591
    %v1593 = vpop.f32.mrb[0].mxu0
    %v1594 = vadd.f32 0.0, %v1593
    %v1595 = vpop.f32.mrb[0].mxu0
    %v1596 = vpop.f32.mrb[0].mxu0
    %1597 = vdwg.mxu0
    %1598 = vmatprep.subr.bf16.mxu0 %v1346
    %1599 = vmatpush1.bf16.msra.mxu0 %v1345
    %1600 = vmatprep.subr.bf16.mxu0 %v1354
    %1601 = vmatpush1.bf16.msra.mxu0 %v1353
    %1602 = vmatprep.subr.bf16.mxu0 %v1362
    %1603 = vmatpush1.bf16.msra.mxu0 %v1361
    %1604 = vmatprep.subr.bf16.mxu0 %v1370
    %1605 = vmatpush1.bf16.msra.mxu0 %v1369
    %1606 = vmatprep.subr.bf16.mxu0 %v1378
    %1607 = vmatpush1.bf16.msra.mxu0 %v1377
    %1608 = vmatprep.subr.bf16.mxu0 %v1386
    %1609 = vmatpush1.bf16.msra.mxu0 %v1385
    %1610 = vmatprep.subr.bf16.mxu0 %v1394
    %1611 = vmatpush1.bf16.msra.mxu0 %v1393
    %1612 = vmatprep.subr.bf16.mxu0 %v1402
    %1613 = vmatpush1.bf16.msra.mxu0 %v1401
    %1614 = vmatprep.subr.bf16.mxu0 %v1410
    %1615 = vmatpush1.bf16.msra.mxu0 %v1409
    %1616 = vmatprep.subr.bf16.mxu0 %v1418
    %1617 = vmatpush1.bf16.msra.mxu0 %v1417
    %1618 = vmatprep.subr.bf16.mxu0 %v1426
    %1619 = vmatpush1.bf16.msra.mxu0 %v1425
    %1620 = vmatprep.subr.bf16.mxu0 %v1434
    %1621 = vmatpush1.bf16.msra.mxu0 %v1433
    %1622 = vmatprep.subr.bf16.mxu0 %v1442
    %1623 = vmatpush1.bf16.msra.mxu0 %v1441
    %1624 = vmatprep.subr.bf16.mxu0 %v1450
    %1625 = vmatpush1.bf16.msra.mxu0 %v1449
    %1626 = vmatprep.subr.bf16.mxu0 %v1458
    %1627 = vmatpush1.bf16.msra.mxu0 %v1457
    %1628 = vmatprep.subr.bf16.mxu0 %v1466
    %1629 = vmatpush1.bf16.msra.mxu0 %v1465
    %1630 = vmatprep.mubr.bf16.mxu0 %v1474
    %1631 = vmatmul.mubr.bf16.gmra.mrb[0].mxu0 %v1473
    %v1632 = vpop.f32.mrb[0].mxu0
    %v1633 = vadd.f32 %v1592, %v1632
    %v1634 = vpop.f32.mrb[0].mxu0
    %v1635 = vadd.f32 %v1594, %v1634
    %v1636 = vpop.f32.mrb[0].mxu0
    %v1637 = vpop.f32.mrb[0].mxu0
    %1638 = vdwg.mxu0
    %1639 = vmatprep.subr.bf16.mxu0 %v1220
    %1640 = vmatpush1.bf16.msra.mxu0 %v1219
    %1641 = vmatprep.subr.bf16.mxu0 %v1228
    %1642 = vmatpush1.bf16.msra.mxu0 %v1227
    %1643 = vmatprep.subr.bf16.mxu0 %v1236
    %1644 = vmatpush1.bf16.msra.mxu0 %v1235
    %1645 = vmatprep.subr.bf16.mxu0 %v1244
    %1646 = vmatpush1.bf16.msra.mxu0 %v1243
    %1647 = vmatprep.subr.bf16.mxu0 %v1252
    %1648 = vmatpush1.bf16.msra.mxu0 %v1251
    %1649 = vmatprep.subr.bf16.mxu0 %v1260
    %1650 = vmatpush1.bf16.msra.mxu0 %v1259
    %1651 = vmatprep.subr.bf16.mxu0 %v1268
    %1652 = vmatpush1.bf16.msra.mxu0 %v1267
    %1653 = vmatprep.subr.bf16.mxu0 %v1276
    %1654 = vmatpush1.bf16.msra.mxu0 %v1275
    %1655 = vmatprep.subr.bf16.mxu0 %v1284
    %1656 = vmatpush1.bf16.msra.mxu0 %v1283
    %1657 = vmatprep.subr.bf16.mxu0 %v1292
    %1658 = vmatpush1.bf16.msra.mxu0 %v1291
    %1659 = vmatprep.subr.bf16.mxu0 %v1300
    %1660 = vmatpush1.bf16.msra.mxu0 %v1299
    %1661 = vmatprep.subr.bf16.mxu0 %v1308
    %1662 = vmatpush1.bf16.msra.mxu0 %v1307
    %1663 = vmatprep.subr.bf16.mxu0 %v1316
    %1664 = vmatpush1.bf16.msra.mxu0 %v1315
    %1665 = vmatprep.subr.bf16.mxu0 %v1324
    %1666 = vmatpush1.bf16.msra.mxu0 %v1323
    %1667 = vmatprep.subr.bf16.mxu0 %v1332
    %1668 = vmatpush1.bf16.msra.mxu0 %v1331
    %1669 = vmatprep.subr.bf16.mxu0 %v1340
    %1670 = vmatpush1.bf16.msra.mxu0 %v1339
    %1671 = vmatprep.mubr.bf16.mxu0 %v1472
    %1672 = vmatmul.mubr.bf16.gmra.mrb[0].mxu0 %v1471
    %v1673 = vpop.f32.mrb[0].mxu0
    %v1674 = vadd.f32 0.0, %v1673
    %v1675 = vpop.f32.mrb[0].mxu0
    %v1676 = vadd.f32 0.0, %v1675
    %v1677 = vpop.f32.mrb[0].mxu0
    %v1678 = vpop.f32.mrb[0].mxu0
    %1679 = vdwg.mxu0
    %1680 = vmatprep.subr.bf16.mxu0 %v1348
    %1681 = vmatpush1.bf16.msra.mxu0 %v1347
    %1682 = vmatprep.subr.bf16.mxu0 %v1356
    %1683 = vmatpush1.bf16.msra.mxu0 %v1355
    %1684 = vmatprep.subr.bf16.mxu0 %v1364
    %1685 = vmatpush1.bf16.msra.mxu0 %v1363
    %1686 = vmatprep.subr.bf16.mxu0 %v1372
    %1687 = vmatpush1.bf16.msra.mxu0 %v1371
    %1688 = vmatprep.subr.bf16.mxu0 %v1380
    %1689 = vmatpush1.bf16.msra.mxu0 %v1379
    %1690 = vmatprep.subr.bf16.mxu0 %v1388
    %1691 = vmatpush1.bf16.msra.mxu0 %v1387
    %1692 = vmatprep.subr.bf16.mxu0 %v1396
    %1693 = vmatpush1.bf16.msra.mxu0 %v1395
    %1694 = vmatprep.subr.bf16.mxu0 %v1404
    %1695 = vmatpush1.bf16.msra.mxu0 %v1403
    %1696 = vmatprep.subr.bf16.mxu0 %v1412
    %1697 = vmatpush1.bf16.msra.mxu0 %v1411
    %1698 = vmatprep.subr.bf16.mxu0 %v1420
    %1699 = vmatpush1.bf16.msra.mxu0 %v1419
    %1700 = vmatprep.subr.bf16.mxu0 %v1428
    %1701 = vmatpush1.bf16.msra.mxu0 %v1427
    %1702 = vmatprep.subr.bf16.mxu0 %v1436
    %1703 = vmatpush1.bf16.msra.mxu0 %v1435
    %1704 = vmatprep.subr.bf16.mxu0 %v1444
    %1705 = vmatpush1.bf16.msra.mxu0 %v1443
    %1706 = vmatprep.subr.bf16.mxu0 %v1452
    %1707 = vmatpush1.bf16.msra.mxu0 %v1451
    %1708 = vmatprep.subr.bf16.mxu0 %v1460
    %1709 = vmatpush1.bf16.msra.mxu0 %v1459
    %1710 = vmatprep.subr.bf16.mxu0 %v1468
    %1711 = vmatpush1.bf16.msra.mxu0 %v1467
    %1712 = vmatprep.mubr.bf16.mxu0 %v1474
    %1713 = vmatmul.mubr.bf16.gmra.mrb[0].mxu0 %v1473
    %v1714 = vpop.f32.mrb[0].mxu0
    %v1715 = vadd.f32 %v1674, %v1714
    %v1716 = vpop.f32.mrb[0].mxu0
    %v1717 = vadd.f32 %v1676, %v1716
    %v1718 = vpop.f32.mrb[0].mxu0
    %v1719 = vpop.f32.mrb[0].mxu0
    %1720 = vdwg.mxu0
    %1721 = vmatprep.subr.bf16.mxu0 %v1222
    %1722 = vmatpush1.bf16.msra.mxu0 %v1221
    %1723 = vmatprep.subr.bf16.mxu0 %v1230
    %1724 = vmatpush1.bf16.msra.mxu0 %v1229
    %1725 = vmatprep.subr.bf16.mxu0 %v1238
    %1726 = vmatpush1.bf16.msra.mxu0 %v1237
    %1727 = vmatprep.subr.bf16.mxu0 %v1246
    %1728 = vmatpush1.bf16.msra.mxu0 %v1245
    %1729 = vmatprep.subr.bf16.mxu0 %v1254
    %1730 = vmatpush1.bf16.msra.mxu0 %v1253
    %1731 = vmatprep.subr.bf16.mxu0 %v1262
    %1732 = vmatpush1.bf16.msra.mxu0 %v1261
    %1733 = vmatprep.subr.bf16.mxu0 %v1270
    %1734 = vmatpush1.bf16.msra.mxu0 %v1269
    %1735 = vmatprep.subr.bf16.mxu0 %v1278
    %1736 = vmatpush1.bf16.msra.mxu0 %v1277
    %1737 = vmatprep.subr.bf16.mxu0 %v1286
    %1738 = vmatpush1.bf16.msra.mxu0 %v1285
    %1739 = vmatprep.subr.bf16.mxu0 %v1294
    %1740 = vmatpush1.bf16.msra.mxu0 %v1293
    %1741 = vmatprep.subr.bf16.mxu0 %v1302
    %1742 = vmatpush1.bf16.msra.mxu0 %v1301
    %1743 = vmatprep.subr.bf16.mxu0 %v1310
    %1744 = vmatpush1.bf16.msra.mxu0 %v1309
    %1745 = vmatprep.subr.bf16.mxu0 %v1318
    %1746 = vmatpush1.bf16.msra.mxu0 %v1317
    %1747 = vmatprep.subr.bf16.mxu0 %v1326
    %1748 = vmatpush1.bf16.msra.mxu0 %v1325
    %1749 = vmatprep.subr.bf16.mxu0 %v1334
    %1750 = vmatpush1.bf16.msra.mxu0 %v1333
    %1751 = vmatprep.subr.bf16.mxu0 %v1342
    %1752 = vmatpush1.bf16.msra.mxu0 %v1341
    %1753 = vmatprep.mubr.bf16.mxu0 %v1472
    %1754 = vmatmul.mubr.bf16.gmra.mrb[0].mxu0 %v1471
    %v1755 = vpop.f32.mrb[0].mxu0
    %v1756 = vadd.f32 0.0, %v1755
    %v1757 = vpop.f32.mrb[0].mxu0
    %v1758 = vadd.f32 0.0, %v1757
    %v1759 = vpop.f32.mrb[0].mxu0
    %v1760 = vpop.f32.mrb[0].mxu0
    %1761 = vdwg.mxu0
    %1762 = vmatprep.subr.bf16.mxu0 %v1350
    %1763 = vmatpush1.bf16.msra.mxu0 %v1349
    %1764 = vmatprep.subr.bf16.mxu0 %v1358
    %1765 = vmatpush1.bf16.msra.mxu0 %v1357
    %1766 = vmatprep.subr.bf16.mxu0 %v1366
    %1767 = vmatpush1.bf16.msra.mxu0 %v1365
    %1768 = vmatprep.subr.bf16.mxu0 %v1374
    %1769 = vmatpush1.bf16.msra.mxu0 %v1373
    %1770 = vmatprep.subr.bf16.mxu0 %v1382
    %1771 = vmatpush1.bf16.msra.mxu0 %v1381
    %1772 = vmatprep.subr.bf16.mxu0 %v1390
    %1773 = vmatpush1.bf16.msra.mxu0 %v1389
    %1774 = vmatprep.subr.bf16.mxu0 %v1398
    %1775 = vmatpush1.bf16.msra.mxu0 %v1397
    %1776 = vmatprep.subr.bf16.mxu0 %v1406
    %1777 = vmatpush1.bf16.msra.mxu0 %v1405
    %1778 = vmatprep.subr.bf16.mxu0 %v1414
    %1779 = vmatpush1.bf16.msra.mxu0 %v1413
    %1780 = vmatprep.subr.bf16.mxu0 %v1422
    %1781 = vmatpush1.bf16.msra.mxu0 %v1421
    %1782 = vmatprep.subr.bf16.mxu0 %v1430
    %1783 = vmatpush1.bf16.msra.mxu0 %v1429
    %1784 = vmatprep.subr.bf16.mxu0 %v1438
    %1785 = vmatpush1.bf16.msra.mxu0 %v1437
    %1786 = vmatprep.subr.bf16.mxu0 %v1446
    %1787 = vmatpush1.bf16.msra.mxu0 %v1445
    %1788 = vmatprep.subr.bf16.mxu0 %v1454
    %1789 = vmatpush1.bf16.msra.mxu0 %v1453
    %1790 = vmatprep.subr.bf16.mxu0 %v1462
    %1791 = vmatpush1.bf16.msra.mxu0 %v1461
    %1792 = vmatprep.subr.bf16.mxu0 %v1470
    %1793 = vmatpush1.bf16.msra.mxu0 %v1469
    %1794 = vmatprep.mubr.bf16.mxu0 %v1474
    %1795 = vmatmul.mubr.bf16.gmra.mrb[0].mxu0 %v1473
    %v1796 = vpop.f32.mrb[0].mxu0
    %v1797 = vadd.f32 %v1756, %v1796
    %v1798 = vpop.f32.mrb[0].mxu0
    %v1799 = vadd.f32 %v1758, %v1798
    %v1800 = vpop.f32.mrb[0].mxu0
    %v1801 = vpop.f32.mrb[0].mxu0
    %1802 = vdwg.mxu0
    %v1803 = vld [vmem:[#allocation10 + $0xc] sm:$0xff]
    %v1805 = vlaneseq
    %v1806 = vshrl.u32 %v1805, 7
    %v1807 = vsub.s32 0, %v1806
    %v1808 = vrot.slane %v1803, %v1807
    %v1809 = vlaneseq
    %v1810 = vshrl.u32 %v1809, 7
    %v1811 = vsub.s32 1, %v1810
    %v1812 = vrot.slane %v1803, %v1811
    %v1813 = vlaneseq
    %v1814 = vshrl.u32 %v1813, 7
    %v1815 = vsub.s32 2, %v1814
    %v1816 = vrot.slane %v1803, %v1815
    %v1817 = vlaneseq
    %v1818 = vshrl.u32 %v1817, 7
    %v1819 = vsub.s32 3, %v1818
    %v1820 = vrot.slane %v1803, %v1819
    %v1821 = vlaneseq
    %v1822 = vshrl.u32 %v1821, 7
    %v1823 = vsub.s32 4, %v1822
    %v1824 = vrot.slane %v1803, %v1823
    %v1825 = vlaneseq
    %v1826 = vshrl.u32 %v1825, 7
    %v1827 = vsub.s32 5, %v1826
    %v1828 = vrot.slane %v1803, %v1827
    %v1829 = vlaneseq
    %v1830 = vshrl.u32 %v1829, 7
    %v1831 = vsub.s32 6, %v1830
    %v1832 = vrot.slane %v1803, %v1831
    %v1833 = vlaneseq
    %v1834 = vshrl.u32 %v1833, 7
    %v1835 = vsub.s32 7, %v1834
    %v1836 = vrot.slane %v1803, %v1835
    %v1845 = vmul.f32 %v1551, %v1808
    %v1846 = vmul.f32 %v1553, %v1812
    %v1847 = vmul.f32 %v1633, %v1816
    %v1848 = vmul.f32 %v1635, %v1820
    %v1849 = vmul.f32 %v1715, %v1824
    %v1850 = vmul.f32 %v1717, %v1828
    %v1851 = vmul.f32 %v1797, %v1832
    %v1852 = vmul.f32 %v1799, %v1836
    %v1853 = vld [vmem:[#allocation11 + $0xc] sm:$0xff]
    %v1855 = vlaneseq
    %v1856 = vshrl.u32 %v1855, 7
    %v1857 = vsub.s32 0, %v1856
    %v1858 = vrot.slane %v1853, %v1857
    %v1859 = vlaneseq
    %v1860 = vshrl.u32 %v1859, 7
    %v1861 = vsub.s32 1, %v1860
    %v1862 = vrot.slane %v1853, %v1861
    %v1863 = vlaneseq
    %v1864 = vshrl.u32 %v1863, 7
    %v1865 = vsub.s32 2, %v1864
    %v1866 = vrot.slane %v1853, %v1865
    %v1867 = vlaneseq
    %v1868 = vshrl.u32 %v1867, 7
    %v1869 = vsub.s32 3, %v1868
    %v1870 = vrot.slane %v1853, %v1869
    %v1871 = vlaneseq
    %v1872 = vshrl.u32 %v1871, 7
    %v1873 = vsub.s32 4, %v1872
    %v1874 = vrot.slane %v1853, %v1873
    %v1875 = vlaneseq
    %v1876 = vshrl.u32 %v1875, 7
    %v1877 = vsub.s32 5, %v1876
    %v1878 = vrot.slane %v1853, %v1877
    %v1879 = vlaneseq
    %v1880 = vshrl.u32 %v1879, 7
    %v1881 = vsub.s32 6, %v1880
    %v1882 = vrot.slane %v1853, %v1881
    %v1883 = vlaneseq
    %v1884 = vshrl.u32 %v1883, 7
    %v1885 = vsub.s32 7, %v1884
    %v1886 = vrot.slane %v1853, %v1885
    %v1895 = vadd.f32 %v1845, %v1858
    %v1896 = vadd.f32 %v1846, %v1862
    %v1897 = vadd.f32 %v1847, %v1866
    %v1898 = vadd.f32 %v1848, %v1870
    %v1899 = vadd.f32 %v1849, %v1874
    %v1900 = vadd.f32 %v1850, %v1878
    %v1901 = vadd.f32 %v1851, %v1882
    %v1902 = vadd.f32 %v1852, %v1886
    %v1903 = vmax.f32 %v1895, 0.0
    %v1904 = vmax.f32 %v1896, 0.0
    %v1905 = vmax.f32 %v1897, 0.0
    %v1906 = vmax.f32 %v1898, 0.0
    %v1907 = vmax.f32 %v1899, 0.0
    %v1908 = vmax.f32 %v1900, 0.0
    %v1909 = vmax.f32 %v1901, 0.0
    %v1910 = vmax.f32 %v1902, 0.0
    %v1911 = vld [vmem:[#allocation8] sm:$0xff]
    %v1912 = vld [vmem:[#allocation8 + $0x8] sm:$0xff]
    %v1913 = vld [vmem:[#allocation8 + $0x10] sm:$0xff]
    %v1914 = vld [vmem:[#allocation8 + $0x18] sm:$0xff]
    %v1915 = vld [vmem:[#allocation8 + $0x20] sm:$0xff]
    %v1916 = vld [vmem:[#allocation8 + $0x28] sm:$0xff]
    %v1917 = vld [vmem:[#allocation8 + $0x30] sm:$0xff]
    %v1918 = vld [vmem:[#allocation8 + $0x38] sm:$0xff]
    %v1919 = vld [vmem:[#allocation8 + $0x40] sm:$0xff]
    %v1920 = vld [vmem:[#allocation8 + $0x48] sm:$0xff]
    %v1921 = vld [vmem:[#allocation8 + $0x50] sm:$0xff]
    %v1922 = vld [vmem:[#allocation8 + $0x58] sm:$0xff]
    %v1923 = vld [vmem:[#allocation8 + $0x60] sm:$0xff]
    %v1924 = vld [vmem:[#allocation8 + $0x68] sm:$0xff]
    %v1925 = vld [vmem:[#allocation8 + $0x70] sm:$0xff]
    %v1926 = vld [vmem:[#allocation8 + $0x78] sm:$0xff]
    %v1927 = vld [vmem:[#allocation8 + $0x80] sm:$0xff]
    %v1928 = vld [vmem:[#allocation8 + $0x88] sm:$0xff]
    %v1929 = vld [vmem:[#allocation8 + $0x90] sm:$0xff]
    %v1930 = vld [vmem:[#allocation8 + $0x98] sm:$0xff]
    %v1931 = vld [vmem:[#allocation8 + $0xa0] sm:$0xff]
    %v1932 = vld [vmem:[#allocation8 + $0xa8] sm:$0xff]
    %v1933 = vld [vmem:[#allocation8 + $0xb0] sm:$0xff]
    %v1934 = vld [vmem:[#allocation8 + $0xb8] sm:$0xff]
    %v1935 = vld [vmem:[#allocation8 + $0xc0] sm:$0xff]
    %v1936 = vld [vmem:[#allocation8 + $0xc8] sm:$0xff]
    %v1937 = vld [vmem:[#allocation8 + $0xd0] sm:$0xff]
    %v1938 = vld [vmem:[#allocation8 + $0xd8] sm:$0xff]
    %v1939 = vld [vmem:[#allocation8 + $0xe0] sm:$0xff]
    %v1940 = vld [vmem:[#allocation8 + $0xe8] sm:$0xff]
    %v1941 = vld [vmem:[#allocation8 + $0xf0] sm:$0xff]
    %v1942 = vld [vmem:[#allocation8 + $0xf8] sm:$0xff]
    %v1943 = vunpack.c.l.s8.bf16 %v1911
    %v1944 = vunpack.c.h.s8.bf16 %v1911
    %v1945 = vunpack.c.l.s8.bf16 %v1912
    %v1946 = vunpack.c.h.s8.bf16 %v1912
    %v1947 = vunpack.c.l.s8.bf16 %v1913
    %v1948 = vunpack.c.h.s8.bf16 %v1913
    %v1949 = vunpack.c.l.s8.bf16 %v1914
    %v1950 = vunpack.c.h.s8.bf16 %v1914
    %v1951 = vunpack.c.l.s8.bf16 %v1915
    %v1952 = vunpack.c.h.s8.bf16 %v1915
    %v1953 = vunpack.c.l.s8.bf16 %v1916
    %v1954 = vunpack.c.h.s8.bf16 %v1916
    %v1955 = vunpack.c.l.s8.bf16 %v1917
    %v1956 = vunpack.c.h.s8.bf16 %v1917
    %v1957 = vunpack.c.l.s8.bf16 %v1918
    %v1958 = vunpack.c.h.s8.bf16 %v1918
    %v1959 = vunpack.c.l.s8.bf16 %v1919
    %v1960 = vunpack.c.h.s8.bf16 %v1919
    %v1961 = vunpack.c.l.s8.bf16 %v1920
    %v1962 = vunpack.c.h.s8.bf16 %v1920
    %v1963 = vunpack.c.l.s8.bf16 %v1921
    %v1964 = vunpack.c.h.s8.bf16 %v1921
    %v1965 = vunpack.c.l.s8.bf16 %v1922
    %v1966 = vunpack.c.h.s8.bf16 %v1922
    %v1967 = vunpack.c.l.s8.bf16 %v1923
    %v1968 = vunpack.c.h.s8.bf16 %v1923
    %v1969 = vunpack.c.l.s8.bf16 %v1924
    %v1970 = vunpack.c.h.s8.bf16 %v1924
    %v1971 = vunpack.c.l.s8.bf16 %v1925
    %v1972 = vunpack.c.h.s8.bf16 %v1925
    %v1973 = vunpack.c.l.s8.bf16 %v1926
    %v1974 = vunpack.c.h.s8.bf16 %v1926
    %v1975 = vunpack.c.l.s8.bf16 %v1927
    %v1976 = vunpack.c.h.s8.bf16 %v1927
    %v1977 = vunpack.c.l.s8.bf16 %v1928
    %v1978 = vunpack.c.h.s8.bf16 %v1928
    %v1979 = vunpack.c.l.s8.bf16 %v1929
    %v1980 = vunpack.c.h.s8.bf16 %v1929
    %v1981 = vunpack.c.l.s8.bf16 %v1930
    %v1982 = vunpack.c.h.s8.bf16 %v1930
    %v1983 = vunpack.c.l.s8.bf16 %v1931
    %v1984 = vunpack.c.h.s8.bf16 %v1931
    %v1985 = vunpack.c.l.s8.bf16 %v1932
    %v1986 = vunpack.c.h.s8.bf16 %v1932
    %v1987 = vunpack.c.l.s8.bf16 %v1933
    %v1988 = vunpack.c.h.s8.bf16 %v1933
    %v1989 = vunpack.c.l.s8.bf16 %v1934
    %v1990 = vunpack.c.h.s8.bf16 %v1934
    %v1991 = vunpack.c.l.s8.bf16 %v1935
    %v1992 = vunpack.c.h.s8.bf16 %v1935
    %v1993 = vunpack.c.l.s8.bf16 %v1936
    %v1994 = vunpack.c.h.s8.bf16 %v1936
    %v1995 = vunpack.c.l.s8.bf16 %v1937
    %v1996 = vunpack.c.h.s8.bf16 %v1937
    %v1997 = vunpack.c.l.s8.bf16 %v1938
    %v1998 = vunpack.c.h.s8.bf16 %v1938
    %v1999 = vunpack.c.l.s8.bf16 %v1939
    %v2000 = vunpack.c.h.s8.bf16 %v1939
    %v2001 = vunpack.c.l.s8.bf16 %v1940
    %v2002 = vunpack.c.h.s8.bf16 %v1940
    %v2003 = vunpack.c.l.s8.bf16 %v1941
    %v2004 = vunpack.c.h.s8.bf16 %v1941
    %v2005 = vunpack.c.l.s8.bf16 %v1942
    %v2006 = vunpack.c.h.s8.bf16 %v1942
    %v2007 = vpack.c.bf16 %v1903, %v1903
    %v2008 = vpack.c.bf16 %v1904, %v1904
    %v2009 = vpack.c.bf16 %v1905, %v1905
    %v2010 = vpack.c.bf16 %v1906, %v1906
    %v2011 = vpack.c.bf16 %v1907, %v1907
    %v2012 = vpack.c.bf16 %v1908, %v1908
    %v2013 = vpack.c.bf16 %v1909, %v1909
    %v2014 = vpack.c.bf16 %v1910, %v1910
    %2015 = vmatprep.subr.bf16.mxu0 0
    %2016 = vmatpush1.bf16.msra.mxu0 %v1943
    %2017 = vmatprep.subr.bf16.mxu0 0
    %2018 = vmatpush1.bf16.msra.mxu0 %v1944
    %2019 = vmatprep.subr.bf16.mxu0 0
    %2020 = vmatpush1.bf16.msra.mxu0 %v1945
    %2021 = vmatprep.subr.bf16.mxu0 0
    %2022 = vmatpush1.bf16.msra.mxu0 %v1946
    %2023 = vmatprep.subr.bf16.mxu0 0
    %2024 = vmatpush1.bf16.msra.mxu0 %v1947
    %2025 = vmatprep.subr.bf16.mxu0 0
    %2026 = vmatpush1.bf16.msra.mxu0 %v1948
    %2027 = vmatprep.subr.bf16.mxu0 0
    %2028 = vmatpush1.bf16.msra.mxu0 %v1949
    %2029 = vmatprep.subr.bf16.mxu0 0
    %2030 = vmatpush1.bf16.msra.mxu0 %v1950
    %2031 = vmatprep.subr.bf16.mxu0 0
    %2032 = vmatpush1.bf16.msra.mxu0 %v1951
    %2033 = vmatprep.subr.bf16.mxu0 0
    %2034 = vmatpush1.bf16.msra.mxu0 %v1952
    %2035 = vmatprep.subr.bf16.mxu0 0
    %2036 = vmatpush1.bf16.msra.mxu0 %v1953
    %2037 = vmatprep.subr.bf16.mxu0 0
    %2038 = vmatpush1.bf16.msra.mxu0 %v1954
    %2039 = vmatprep.subr.bf16.mxu0 0
    %2040 = vmatpush1.bf16.msra.mxu0 %v1955
    %2041 = vmatprep.subr.bf16.mxu0 0
    %2042 = vmatpush1.bf16.msra.mxu0 %v1956
    %2043 = vmatprep.subr.bf16.mxu0 0
    %2044 = vmatpush1.bf16.msra.mxu0 %v1957
    %2045 = vmatprep.subr.bf16.mxu0 0
    %2046 = vmatpush1.bf16.msra.mxu0 %v1958
    %2047 = vmatprep.mubr.bf16.mxu0 %v2008
    %2048 = vmatmul.mubr.bf16.gmra.mrb[0].mxu0 %v2007
    %v2049 = vpop.f32.mrb[0].mxu0
    %v2050 = vadd.f32 0.0, %v2049
    %v2051 = vpop.f32.mrb[0].mxu0
    %v2052 = vpop.f32.mrb[0].mxu0
    %v2053 = vpop.f32.mrb[0].mxu0
    %2054 = vdwg.mxu0
    %2055 = vmatprep.subr.bf16.mxu0 0
    %2056 = vmatpush1.bf16.msra.mxu0 %v1959
    %2057 = vmatprep.subr.bf16.mxu0 0
    %2058 = vmatpush1.bf16.msra.mxu0 %v1960
    %2059 = vmatprep.subr.bf16.mxu0 0
    %2060 = vmatpush1.bf16.msra.mxu0 %v1961
    %2061 = vmatprep.subr.bf16.mxu0 0
    %2062 = vmatpush1.bf16.msra.mxu0 %v1962
    %2063 = vmatprep.subr.bf16.mxu0 0
    %2064 = vmatpush1.bf16.msra.mxu0 %v1963
    %2065 = vmatprep.subr.bf16.mxu0 0
    %2066 = vmatpush1.bf16.msra.mxu0 %v1964
    %2067 = vmatprep.subr.bf16.mxu0 0
    %2068 = vmatpush1.bf16.msra.mxu0 %v1965
    %2069 = vmatprep.subr.bf16.mxu0 0
    %2070 = vmatpush1.bf16.msra.mxu0 %v1966
    %2071 = vmatprep.subr.bf16.mxu0 0
    %2072 = vmatpush1.bf16.msra.mxu0 %v1967
    %2073 = vmatprep.subr.bf16.mxu0 0
    %2074 = vmatpush1.bf16.msra.mxu0 %v1968
    %2075 = vmatprep.subr.bf16.mxu0 0
    %2076 = vmatpush1.bf16.msra.mxu0 %v1969
    %2077 = vmatprep.subr.bf16.mxu0 0
    %2078 = vmatpush1.bf16.msra.mxu0 %v1970
    %2079 = vmatprep.subr.bf16.mxu0 0
    %2080 = vmatpush1.bf16.msra.mxu0 %v1971
    %2081 = vmatprep.subr.bf16.mxu0 0
    %2082 = vmatpush1.bf16.msra.mxu0 %v1972
    %2083 = vmatprep.subr.bf16.mxu0 0
    %2084 = vmatpush1.bf16.msra.mxu0 %v1973
    %2085 = vmatprep.subr.bf16.mxu0 0
    %2086 = vmatpush1.bf16.msra.mxu0 %v1974
    %2087 = vmatprep.mubr.bf16.mxu0 %v2010
    %2088 = vmatmul.mubr.bf16.gmra.mrb[0].mxu0 %v2009
    %v2089 = vpop.f32.mrb[0].mxu0
    %v2090 = vadd.f32 %v2050, %v2089
    %v2091 = vpop.f32.mrb[0].mxu0
    %v2092 = vpop.f32.mrb[0].mxu0
    %v2093 = vpop.f32.mrb[0].mxu0
    %2094 = vdwg.mxu0
    %2095 = vmatprep.subr.bf16.mxu0 0
    %2096 = vmatpush1.bf16.msra.mxu0 %v1975
    %2097 = vmatprep.subr.bf16.mxu0 0
    %2098 = vmatpush1.bf16.msra.mxu0 %v1976
    %2099 = vmatprep.subr.bf16.mxu0 0
    %2100 = vmatpush1.bf16.msra.mxu0 %v1977
    %2101 = vmatprep.subr.bf16.mxu0 0
    %2102 = vmatpush1.bf16.msra.mxu0 %v1978
    %2103 = vmatprep.subr.bf16.mxu0 0
    %2104 = vmatpush1.bf16.msra.mxu0 %v1979
    %2105 = vmatprep.subr.bf16.mxu0 0
    %2106 = vmatpush1.bf16.msra.mxu0 %v1980
    %2107 = vmatprep.subr.bf16.mxu0 0
    %2108 = vmatpush1.bf16.msra.mxu0 %v1981
    %2109 = vmatprep.subr.bf16.mxu0 0
    %2110 = vmatpush1.bf16.msra.mxu0 %v1982
    %2111 = vmatprep.subr.bf16.mxu0 0
    %2112 = vmatpush1.bf16.msra.mxu0 %v1983
    %2113 = vmatprep.subr.bf16.mxu0 0
    %2114 = vmatpush1.bf16.msra.mxu0 %v1984
    %2115 = vmatprep.subr.bf16.mxu0 0
    %2116 = vmatpush1.bf16.msra.mxu0 %v1985
    %2117 = vmatprep.subr.bf16.mxu0 0
    %2118 = vmatpush1.bf16.msra.mxu0 %v1986
    %2119 = vmatprep.subr.bf16.mxu0 0
    %2120 = vmatpush1.bf16.msra.mxu0 %v1987
    %2121 = vmatprep.subr.bf16.mxu0 0
    %2122 = vmatpush1.bf16.msra.mxu0 %v1988
    %2123 = vmatprep.subr.bf16.mxu0 0
    %2124 = vmatpush1.bf16.msra.mxu0 %v1989
    %2125 = vmatprep.subr.bf16.mxu0 0
    %2126 = vmatpush1.bf16.msra.mxu0 %v1990
    %2127 = vmatprep.mubr.bf16.mxu0 %v2012
    %2128 = vmatmul.mubr.bf16.gmra.mrb[0].mxu0 %v2011
    %v2129 = vpop.f32.mrb[0].mxu0
    %v2130 = vadd.f32 %v2090, %v2129
    %v2131 = vpop.f32.mrb[0].mxu0
    %v2132 = vpop.f32.mrb[0].mxu0
    %v2133 = vpop.f32.mrb[0].mxu0
    %2134 = vdwg.mxu0
    %2135 = vmatprep.subr.bf16.mxu0 0
    %2136 = vmatpush1.bf16.msra.mxu0 %v1991
    %2137 = vmatprep.subr.bf16.mxu0 0
    %2138 = vmatpush1.bf16.msra.mxu0 %v1992
    %2139 = vmatprep.subr.bf16.mxu0 0
    %2140 = vmatpush1.bf16.msra.mxu0 %v1993
    %2141 = vmatprep.subr.bf16.mxu0 0
    %2142 = vmatpush1.bf16.msra.mxu0 %v1994
    %2143 = vmatprep.subr.bf16.mxu0 0
    %2144 = vmatpush1.bf16.msra.mxu0 %v1995
    %2145 = vmatprep.subr.bf16.mxu0 0
    %2146 = vmatpush1.bf16.msra.mxu0 %v1996
    %2147 = vmatprep.subr.bf16.mxu0 0
    %2148 = vmatpush1.bf16.msra.mxu0 %v1997
    %2149 = vmatprep.subr.bf16.mxu0 0
    %2150 = vmatpush1.bf16.msra.mxu0 %v1998
    %2151 = vmatprep.subr.bf16.mxu0 0
    %2152 = vmatpush1.bf16.msra.mxu0 %v1999
    %2153 = vmatprep.subr.bf16.mxu0 0
    %2154 = vmatpush1.bf16.msra.mxu0 %v2000
    %2155 = vmatprep.subr.bf16.mxu0 0
    %2156 = vmatpush1.bf16.msra.mxu0 %v2001
    %2157 = vmatprep.subr.bf16.mxu0 0
    %2158 = vmatpush1.bf16.msra.mxu0 %v2002
    %2159 = vmatprep.subr.bf16.mxu0 0
    %2160 = vmatpush1.bf16.msra.mxu0 %v2003
    %2161 = vmatprep.subr.bf16.mxu0 0
    %2162 = vmatpush1.bf16.msra.mxu0 %v2004
    %2163 = vmatprep.subr.bf16.mxu0 0
    %2164 = vmatpush1.bf16.msra.mxu0 %v2005
    %2165 = vmatprep.subr.bf16.mxu0 0
    %2166 = vmatpush1.bf16.msra.mxu0 %v2006
    %2167 = vmatprep.mubr.bf16.mxu0 %v2014
    %2168 = vmatmul.mubr.bf16.gmra.mrb[0].mxu0 %v2013
    %v2169 = vpop.f32.mrb[0].mxu0
    %v2170 = vadd.f32 %v2130, %v2169
    %v2171 = vpop.f32.mrb[0].mxu0
    %v2172 = vpop.f32.mrb[0].mxu0
    %v2173 = vpop.f32.mrb[0].mxu0
    %2174 = vdwg.mxu0
    %v2175 = vld [vmem:[#allocation10 + $0x14] sm:$0x1]
    %v2177 = vlaneseq
    %v2178 = vshrl.u32 %v2177, 7
    %v2179 = vsub.s32 0, %v2178
    %v2180 = vrot.slane %v2175, %v2179
    %v2182 = vmul.f32 %v2170, %v2180
    %v2183 = vld [vmem:[#allocation11 + $0x14] sm:$0x1]
    %v2185 = vlaneseq
    %v2186 = vshrl.u32 %v2185, 7
    %v2187 = vsub.s32 0, %v2186
    %v2188 = vrot.slane %v2183, %v2187
    %v2190 = vadd.f32 %v2182, %v2188
    %2191 = vadd.xlane.f32.xlu0 %v2190
    %v2192 = vpop.xlane.xlu0 %2191
    %v2193 = vsub.f32 %v2192, %v2190
    %v2194 = vmul.f32 %v2193, 0.25
    %v2195 = vsub.f32 %v2190, %v2194
    %2197 = vset.pattern.permute.xlu0 4
    %2198 = vperm.xlu0 %2197, %v2195
    %v2199 = vpop.permute.xlu0 %2198
    %v2201 = vadd.f32 %v2190, %v2199
    %2202 = vst [vmem:[#allocation13] sm:$0xff] %v2201
    // Predicated region
    $region50: #{tpu_custom_call.1} parent=1 // pred_check
      _
    $region51: #{tpu_custom_call.1} parent=1 // pred_check_branch
      %2204 = sbr.rel (0) target = $region53
    $region52: #{tpu_custom_call.1} parent=1 // pred_region
      %s2206 = ssub.s32 128, 128
      %2207 = vsyncadd [#allocation4], %s2206
      %s2209 = sshll.u32 [#allocation13], 4
      %s2210 = int_to_ptr.vmem [resolvable:$true] %s2209
      %2212 = dma.vmem_to_hbm [thread:$0]  %s2210, 128, %s6, [#allocation4]
    $region53: #{tpu_custom_call.1} parent=1 // pred_fallthru
      _
    // Predicated region
    $region54: #{tpu_custom_call.1} parent=1 // pred_check
      _
    $region55: #{tpu_custom_call.1} parent=1 // pred_check_branch
      %2214 = sbr.rel (0) target = $region57
    $region56: #{tpu_custom_call.1} parent=1 // pred_region
      %2215 = dma.done [#allocation4], 128
    $region57: #{tpu_custom_call.1} parent=1 // pred_fallthru
      _
    %2216 = vsyncpa [#allocation3], 1
    %2217 = vsyncpa [#allocation6], 1
    %2218 = vsyncpa [#allocation9], 1
    %2219 = vsyncpa [#allocation12], 1
    %2220 = vsyncpa [#allocation4], 1

// kernel: tpu_custom_call.1
$region0: #{tpu_custom_call.1}
  #allocation0 [shape = 'u32[]', space=smem, size = 0x4, offset = 0x4, fixed_abs, tag = 'smem constant byte address 0x4 - core index']
  #allocation1 [shape = 'u32[144,128]{1,0:T(1,128)}', space=vmem, size = 0x12000, scoped, tag = 'internal scratch']
  %s0 = inlined_call_operand.hbm [shape: f32[8,32], index: 0, kind: input, shape index: {}]
  %s1 = inlined_call_operand.hbm [shape: s8[32,512], index: 1, kind: input, shape index: {}]
  %s2 = inlined_call_operand.hbm [shape: s8[512,2048], index: 2, kind: input, shape index: {}]
  %s3 = inlined_call_operand.hbm [shape: s8[1024,128], index: 3, kind: input, shape index: {}]
  %s4 = inlined_call_operand.hbm [shape: f32[1,2688], index: 4, kind: input, shape index: {}]
  %s5 = inlined_call_operand.hbm [shape: f32[1,2688], index: 5, kind: input, shape index: {}]
  %s6 = inlined_call_operand.hbm [shape: f32[8,128], index: 6, kind: output, shape index: {}]
  %s7 = sld [smem:[#allocation0]]
  $region58: #{tpu_custom_call.1} parent=0
    _
  %s9 = ssub.s32 1, %s7
  %s10 = scalar_select 0, %s9, %s7
  $region1: #{tpu_custom_call.1} parent=0
    #allocation2 [shape = 'u8[4096]{0}', space=vmem, size = 0x1000, scoped, tag = 'input window, operand 0, single buffered']
    #allocation3 [shape = 's32[1]{0}', space=sflag, size = 0x4, scoped, tag = 'scoped memory for tpu_custom_call.1']
    #allocation4 [shape = 's32[1]{0}', space=sflag, size = 0x4, scoped, tag = 'scoped memory for tpu_custom_call.1']
    #allocation5 [shape = 'u8[16384]{0}', space=vmem, size = 0x4000, scoped, tag = 'input window, operand 1, single buffered']
    #allocation6 [shape = 's32[1]{0}', space=sflag, size = 0x4, scoped, tag = 'scoped memory for tpu_custom_call.1']
    #allocation7 [shape = 'u8[1048576]{0}', space=vmem, size = 0x100000, scoped, tag = 'input window, operand 2, single buffered']
    #allocation8 [shape = 'u8[131072]{0}', space=vmem, size = 0x20000, scoped, tag = 'input window, operand 3, single buffered']
    #allocation9 [shape = 's32[1]{0}', space=sflag, size = 0x4, scoped, tag = 'scoped memory for tpu_custom_call.1']
    #allocation10 [shape = 'u8[10752]{0}', space=vmem, size = 0x2c00, scoped, tag = 'input window, operand 4, single buffered']
    #allocation11 [shape = 'u8[10752]{0}', space=vmem, size = 0x2c00, scoped, tag = 'input window, operand 5, single buffered']
    #allocation12 [shape = 's32[1]{0}', space=sflag, size = 0x4, scoped, tag = 'scoped memory for tpu_custom_call.1']
    #allocation13 [shape = 'u8[4096]{0}', space=vmem, size = 0x1000, scoped, tag = 'output window, operand 0, single buffered']
    %11 = vsyncpa [#allocation3], 0
    %12 = vsyncpa [#allocation6], 0
    %13 = vsyncpa [#allocation9], 0
    %14 = vsyncpa [#allocation12], 0
    %15 = vsyncpa [#allocation4], 0
    // Predicated region
    $region2: #{tpu_custom_call.1} parent=1 // pred_check
      _
    $region3: #{tpu_custom_call.1} parent=1 // pred_check_branch
      %17 = sbr.rel (0) target = $region5
    $region4: #{tpu_custom_call.1} parent=1 // pred_region
      %s19 = ssub.s32 128, 128
      %20 = vsyncadd [#allocation3], %s19
      %s22 = sshll.u32 [#allocation2], 4
      %s23 = int_to_ptr.vmem [resolvable:$true] %s22
      %25 = dma.hbm_to_vmem [thread:$0]  %s0, 128, %s23, [#allocation3]
    $region5: #{tpu_custom_call.1} parent=1 // pred_fallthru
      _
    // Predicated region
    $region6: #{tpu_custom_call.1} parent=1 // pred_check
      _
    $region7: #{tpu_custom_call.1} parent=1 // pred_check_branch
      %27 = sbr.rel (0) target = $region9
    $region8: #{tpu_custom_call.1} parent=1 // pred_region
      %s29 = ssub.s32 512, 512
      %30 = vsyncadd [#allocation6], %s29
      %s32 = sshll.u32 [#allocation5], 4
      %s33 = int_to_ptr.vmem [resolvable:$true] %s32
      %35 = dma.hbm_to_vmem [thread:$0]  %s1, 512, %s33, [#allocation6]
    $region9: #{tpu_custom_call.1} parent=1 // pred_fallthru
      _
    // Predicated region
    $region10: #{tpu_custom_call.1} parent=1 // pred_check
      _
    $region11: #{tpu_custom_call.1} parent=1 // pred_check_branch
      %37 = sbr.rel (0) target = $region13
    $region12: #{tpu_custom_call.1} parent=1 // pred_region
      %s39 = ssub.s32 32768, 32768
      %40 = vsyncadd [#allocation6], %s39
      %s41 = sshll.u32 [#allocation7], 4
      %s42 = int_to_ptr.vmem [resolvable:$true] %s41
      %47 = dma.hbm_to_vmem [thread:$0]  %s2, 32768, %s42, [#allocation6], 2048, 2048, 128
    $region13: #{tpu_custom_call.1} parent=1 // pred_fallthru
      _
    // Predicated region
    $region14: #{tpu_custom_call.1} parent=1 // pred_check
      _
    $region15: #{tpu_custom_call.1} parent=1 // pred_check_branch
      %49 = sbr.rel (0) target = $region17
    $region16: #{tpu_custom_call.1} parent=1 // pred_region
      %s51 = ssub.s32 4096, 4096
      %52 = vsyncadd [#allocation9], %s51
      %s53 = sshll.u32 [#allocation8], 4
      %s54 = int_to_ptr.vmem [resolvable:$true] %s53
      %59 = dma.hbm_to_vmem [thread:$0]  %s3, 4096, %s54, [#allocation9], 128, 128, 8
    $region17: #{tpu_custom_call.1} parent=1 // pred_fallthru
      _
    // Predicated region
    $region18: #{tpu_custom_call.1} parent=1 // pred_check
      _
    $region19: #{tpu_custom_call.1} parent=1 // pred_check_branch
      %61 = sbr.rel (0) target = $region21
    $region20: #{tpu_custom_call.1} parent=1 // pred_region
      %s63 = ssub.s32 336, 336
      %64 = vsyncadd [#allocation9], %s63
      %s66 = sshll.u32 [#allocation10], 4
      %s67 = int_to_ptr.vmem [resolvable:$true] %s66
      %69 = dma.hbm_to_vmem [thread:$0]  %s4, 336, %s67, [#allocation9]
    $region21: #{tpu_custom_call.1} parent=1 // pred_fallthru
      _
    // Predicated region
    $region22: #{tpu_custom_call.1} parent=1 // pred_check
      _
    $region23: #{tpu_custom_call.1} parent=1 // pred_check_branch
      %71 = sbr.rel (0) target = $region25
    $region24: #{tpu_custom_call.1} parent=1 // pred_region
      %s73 = ssub.s32 336, 336
      %74 = vsyncadd [#allocation12], %s73
      %s76 = sshll.u32 [#allocation11], 4
      %s77 = int_to_ptr.vmem [resolvable:$true] %s76
      %79 = dma.hbm_to_vmem [thread:$0]  %s5, 336, %s77, [#allocation12]
    $region25: #{tpu_custom_call.1} parent=1 // pred_fallthru
      _
    // Predicated region
    $region26: #{tpu_custom_call.1} parent=1 // pred_check
      _
    $region27: #{tpu_custom_call.1} parent=1 // pred_check_branch
      %81 = sbr.rel (0) target = $region29
    $region28: #{tpu_custom_call.1} parent=1 // pred_region
      %82 = dma.done [#allocation3], 128
    $region29: #{tpu_custom_call.1} parent=1 // pred_fallthru
      _
    // Predicated region
    $region30: #{tpu_custom_call.1} parent=1 // pred_check
      _
    $region31: #{tpu_custom_call.1} parent=1 // pred_check_branch
      %84 = sbr.rel (0) target = $region33
    $region32: #{tpu_custom_call.1} parent=1 // pred_region
      %85 = dma.done [#allocation6], 512
    $region33: #{tpu_custom_call.1} parent=1 // pred_fallthru
      _
    // Predicated region
    $region34: #{tpu_custom_call.1} parent=1 // pred_check
      _
    $region35: #{tpu_custom_call.1} parent=1 // pred_check_branch
      %87 = sbr.rel (0) target = $region37
    $region36: #{tpu_custom_call.1} parent=1 // pred_region
      %88 = dma.done [#allocation6], 32768
    $region37: #{tpu_custom_call.1} parent=1 // pred_fallthru
      _
    // Predicated region
    $region38: #{tpu_custom_call.1} parent=1 // pred_check
      _
    $region39: #{tpu_custom_call.1} parent=1 // pred_check_branch
      %90 = sbr.rel (0) target = $region41
    $region40: #{tpu_custom_call.1} parent=1 // pred_region
      %91 = dma.done [#allocation9], 4096
    $region41: #{tpu_custom_call.1} parent=1 // pred_fallthru
      _
    // Predicated region
    $region42: #{tpu_custom_call.1} parent=1 // pred_check
      _
    $region43: #{tpu_custom_call.1} parent=1 // pred_check_branch
      %93 = sbr.rel (0) target = $region45
    $region44: #{tpu_custom_call.1} parent=1 // pred_region
      %94 = dma.done [#allocation9], 336
    $region45: #{tpu_custom_call.1} parent=1 // pred_fallthru
      _
    // Predicated region
    $region46: #{tpu_custom_call.1} parent=1 // pred_check
      _
    $region47: #{tpu_custom_call.1} parent=1 // pred_check_branch
      %96 = sbr.rel (0) target = $region49
    $region48: #{tpu_custom_call.1} parent=1 // pred_region
      %97 = dma.done [#allocation12], 336
    $region49: #{tpu_custom_call.1} parent=1 // pred_fallthru
      _
    %v99 = vld [vmem:[#allocation2] sm:$0xff]
    %v100 = vld [vmem:[#allocation5] sm:$0xff]
    %v101 = vld [vmem:[#allocation5 + $0x8] sm:$0xff]
    %v102 = vld [vmem:[#allocation5 + $0x10] sm:$0xff]
    %v103 = vld [vmem:[#allocation5 + $0x18] sm:$0xff]
    %v104 = vunpack.c.l.s8.bf16 %v100
    %v105 = vunpack.c.l.s8.bf16 %v101
    %v106 = vunpack.c.l.s8.bf16 %v102
    %v107 = vunpack.c.l.s8.bf16 %v103
    %v108 = vunpack.c.h.s8.bf16 %v100
    %v109 = vunpack.c.h.s8.bf16 %v101
    %v110 = vunpack.c.h.s8.bf16 %v102
    %v111 = vunpack.c.h.s8.bf16 %v103
    %v112 = vpack.c.bf16 %v99, %v99
    %vm113 = vcmask 261120
    %v115 = vsel %vm113, %v112, 0
    %117 = vmatprep.subr.bf16.mxu0 %v105
    %118 = vmatpush1.bf16.msra.mxu0 %v104
    %119 = vmatprep.subr.bf16.mxu0 %v109
    %120 = vmatpush1.bf16.msra.mxu0 %v108
    %121 = vmatprep.subr.bf16.mxu0 0
    %122 = vmatpush1.bf16.msra.mxu0 0
    %123 = vmatprep.subr.bf16.mxu0 0
    %124 = vmatpush1.bf16.msra.mxu0 0
    %125 = vmatprep.subr.bf16.mxu0 0
    %126 = vmatpush1.bf16.msra.mxu0 0
    %127 = vmatprep.subr.bf16.mxu0 0
    %128 = vmatpush1.bf16.msra.mxu0 0
    %129 = vmatprep.subr.bf16.mxu0 0
    %130 = vmatpush1.bf16.msra.mxu0 0
    %131 = vmatprep.subr.bf16.mxu0 0
    %132 = vmatpush1.bf16.msra.mxu0 0
    %133 = vmatprep.subr.bf16.mxu0 0
    %134 = vmatpush1.bf16.msra.mxu0 0
    %135 = vmatprep.subr.bf16.mxu0 0
    %136 = vmatpush1.bf16.msra.mxu0 0
    %137 = vmatprep.subr.bf16.mxu0 0
    %138 = vmatpush1.bf16.msra.mxu0 0
    %139 = vmatprep.subr.bf16.mxu0 0
    %140 = vmatpush1.bf16.msra.mxu0 0
    %141 = vmatprep.subr.bf16.mxu0 0
    %142 = vmatpush1.bf16.msra.mxu0 0
    %143 = vmatprep.subr.bf16.mxu0 0
    %144 = vmatpush1.bf16.msra.mxu0 0
    %145 = vmatprep.subr.bf16.mxu0 0
    %146 = vmatpush1.bf16.msra.mxu0 0
    %147 = vmatprep.subr.bf16.mxu0 0
    %148 = vmatpush1.bf16.msra.mxu0 0
    %149 = vmatprep.mubr.bf16.mxu0 0
    %150 = vmatmul.mubr.bf16.gmra.mrb[0].mxu0 %v115
    %v151 = vpop.f32.mrb[0].mxu0
    %v152 = vadd.f32 0.0, %v151
    %v153 = vpop.f32.mrb[0].mxu0
    %v154 = vadd.f32 0.0, %v153
    %v155 = vpop.f32.mrb[0].mxu0
    %v156 = vpop.f32.mrb[0].mxu0
    %157 = vdwg.mxu0
    %158 = vmatprep.subr.bf16.mxu0 %v107
    %159 = vmatpush1.bf16.msra.mxu0 %v106
    %160 = vmatprep.subr.bf16.mxu0 %v111
    %161 = vmatpush1.bf16.msra.mxu0 %v110
    %162 = vmatprep.subr.bf16.mxu0 0
    %163 = vmatpush1.bf16.msra.mxu0 0
    %164 = vmatprep.subr.bf16.mxu0 0
    %165 = vmatpush1.bf16.msra.mxu0 0
    %166 = vmatprep.subr.bf16.mxu0 0
    %167 = vmatpush1.bf16.msra.mxu0 0
    %168 = vmatprep.subr.bf16.mxu0 0
    %169 = vmatpush1.bf16.msra.mxu0 0
    %170 = vmatprep.subr.bf16.mxu0 0
    %171 = vmatpush1.bf16.msra.mxu0 0
    %172 = vmatprep.subr.bf16.mxu0 0
    %173 = vmatpush1.bf16.msra.mxu0 0
    %174 = vmatprep.subr.bf16.mxu0 0
    %175 = vmatpush1.bf16.msra.mxu0 0
    %176 = vmatprep.subr.bf16.mxu0 0
    %177 = vmatpush1.bf16.msra.mxu0 0
    %178 = vmatprep.subr.bf16.mxu0 0
    %179 = vmatpush1.bf16.msra.mxu0 0
    %180 = vmatprep.subr.bf16.mxu0 0
    %181 = vmatpush1.bf16.msra.mxu0 0
    %182 = vmatprep.subr.bf16.mxu0 0
    %183 = vmatpush1.bf16.msra.mxu0 0
    %184 = vmatprep.subr.bf16.mxu0 0
    %185 = vmatpush1.bf16.msra.mxu0 0
    %186 = vmatprep.subr.bf16.mxu0 0
    %187 = vmatpush1.bf16.msra.mxu0 0
    %188 = vmatprep.subr.bf16.mxu0 0
    %189 = vmatpush1.bf16.msra.mxu0 0
    %190 = vmatprep.mubr.bf16.mxu0 0
    %191 = vmatmul.mubr.bf16.gmra.mrb[0].mxu0 %v115
    %v192 = vpop.f32.mrb[0].mxu0
    %v193 = vadd.f32 0.0, %v192
    %v194 = vpop.f32.mrb[0].mxu0
    %v195 = vadd.f32 0.0, %v194
    %v196 = vpop.f32.mrb[0].mxu0
    %v197 = vpop.f32.mrb[0].mxu0
    %198 = vdwg.mxu0
    %v199 = vld [vmem:[#allocation10] sm:$0xf]
    %v201 = vlaneseq
    %v202 = vshrl.u32 %v201, 7
    %v203 = vsub.s32 0, %v202
    %v204 = vrot.slane %v199, %v203
    %v205 = vlaneseq
    %v206 = vshrl.u32 %v205, 7
    %v207 = vsub.s32 1, %v206
    %v208 = vrot.slane %v199, %v207
    %v209 = vlaneseq
    %v210 = vshrl.u32 %v209, 7
    %v211 = vsub.s32 2, %v210
    %v212 = vrot.slane %v199, %v211
    %v213 = vlaneseq
    %v214 = vshrl.u32 %v213, 7
    %v215 = vsub.s32 3, %v214
    %v216 = vrot.slane %v199, %v215
    %v221 = vmul.f32 %v152, %v204
    %v222 = vmul.f32 %v154, %v208
    %v223 = vmul.f32 %v193, %v212
    %v224 = vmul.f32 %v195, %v216
    %v225 = vld [vmem:[#allocation11] sm:$0xf]
    %v227 = vlaneseq
    %v228 = vshrl.u32 %v227, 7
    %v229 = vsub.s32 0, %v228
    %v230 = vrot.slane %v225, %v229
    %v231 = vlaneseq
    %v232 = vshrl.u32 %v231, 7
    %v233 = vsub.s32 1, %v232
    %v234 = vrot.slane %v225, %v233
    %v235 = vlaneseq
    %v236 = vshrl.u32 %v235, 7
    %v237 = vsub.s32 2, %v236
    %v238 = vrot.slane %v225, %v237
    %v239 = vlaneseq
    %v240 = vshrl.u32 %v239, 7
    %v241 = vsub.s32 3, %v240
    %v242 = vrot.slane %v225, %v241
    %v247 = vadd.f32 %v221, %v230
    %v248 = vadd.f32 %v222, %v234
    %v249 = vadd.f32 %v223, %v238
    %v250 = vadd.f32 %v224, %v242
    %v251 = vmax.f32 %v247, 0.0
    %v252 = vmax.f32 %v248, 0.0
    %v253 = vmax.f32 %v249, 0.0
    %v254 = vmax.f32 %v250, 0.0
    %v255 = vld [vmem:[#allocation7] sm:$0xff]
    %v256 = vld [vmem:[#allocation7 + $0x8] sm:$0xff]
    %v257 = vld [vmem:[#allocation7 + $0x10] sm:$0xff]
    %v258 = vld [vmem:[#allocation7 + $0x18] sm:$0xff]
    %v259 = vld [vmem:[#allocation7 + $0x80] sm:$0xff]
    %v260 = vld [vmem:[#allocation7 + $0x88] sm:$0xff]
    %v261 = vld [vmem:[#allocation7 + $0x90] sm:$0xff]
    %v262 = vld [vmem:[#allocation7 + $0x98] sm:$0xff]
    %v263 = vld [vmem:[#allocation7 + $0x100] sm:$0xff]
    %v264 = vld [vmem:[#allocation7 + $0x108] sm:$0xff]
    %v265 = vld [vmem:[#allocation7 + $0x110] sm:$0xff]
    %v266 = vld [vmem:[#allocation7 + $0x118] sm:$0xff]
    %v267 = vld [vmem:[#allocation7 + $0x180] sm:$0xff]
    %v268 = vld [vmem:[#allocation7 + $0x188] sm:$0xff]
    %v269 = vld [vmem:[#allocation7 + $0x190] sm:$0xff]
    %v270 = vld [vmem:[#allocation7 + $0x198] sm:$0xff]
    %v271 = vld [vmem:[#allocation7 + $0x200] sm:$0xff]
    %v272 = vld [vmem:[#allocation7 + $0x208] sm:$0xff]
    %v273 = vld [vmem:[#allocation7 + $0x210] sm:$0xff]
    %v274 = vld [vmem:[#allocation7 + $0x218] sm:$0xff]
    %v275 = vld [vmem:[#allocation7 + $0x280] sm:$0xff]
    %v276 = vld [vmem:[#allocation7 + $0x288] sm:$0xff]
    %v277 = vld [vmem:[#allocation7 + $0x290] sm:$0xff]
    %v278 = vld [vmem:[#allocation7 + $0x298] sm:$0xff]
    %v279 = vld [vmem:[#allocation7 + $0x300] sm:$0xff]
    %v280 = vld [vmem:[#allocation7 + $0x308] sm:$0xff]
    %v281 = vld [vmem:[#allocation7 + $0x310] sm:$0xff]
    %v282 = vld [vmem:[#allocation7 + $0x318] sm:$0xff]
    %v283 = vld [vmem:[#allocation7 + $0x380] sm:$0xff]
    %v284 = vld [vmem:[#allocation7 + $0x388] sm:$0xff]
    %v285 = vld [vmem:[#allocation7 + $0x390] sm:$0xff]
    %v286 = vld [vmem:[#allocation7 + $0x398] sm:$0xff]
    %v287 = vld [vmem:[#allocation7 + $0x400] sm:$0xff]
    %v288 = vld [vmem:[#allocation7 + $0x408] sm:$0xff]
    %v289 = vld [vmem:[#allocation7 + $0x410] sm:$0xff]
    %v290 = vld [vmem:[#allocation7 + $0x418] sm:$0xff]
    %v291 = vld [vmem:[#allocation7 + $0x480] sm:$0xff]
    %v292 = vld [vmem:[#allocation7 + $0x488] sm:$0xff]
    %v293 = vld [vmem:[#allocation7 + $0x490] sm:$0xff]
    %v294 = vld [vmem:[#allocation7 + $0x498] sm:$0xff]
    %v295 = vld [vmem:[#allocation7 + $0x500] sm:$0xff]
    %v296 = vld [vmem:[#allocation7 + $0x508] sm:$0xff]
    %v297 = vld [vmem:[#allocation7 + $0x510] sm:$0xff]
    %v298 = vld [vmem:[#allocation7 + $0x518] sm:$0xff]
    %v299 = vld [vmem:[#allocation7 + $0x580] sm:$0xff]
    %v300 = vld [vmem:[#allocation7 + $0x588] sm:$0xff]
    %v301 = vld [vmem:[#allocation7 + $0x590] sm:$0xff]
    %v302 = vld [vmem:[#allocation7 + $0x598] sm:$0xff]
    %v303 = vld [vmem:[#allocation7 + $0x600] sm:$0xff]
    %v304 = vld [vmem:[#allocation7 + $0x608] sm:$0xff]
    %v305 = vld [vmem:[#allocation7 + $0x610] sm:$0xff]
    %v306 = vld [vmem:[#allocation7 + $0x618] sm:$0xff]
    %v307 = vld [vmem:[#allocation7 + $0x680] sm:$0xff]
    %v308 = vld [vmem:[#allocation7 + $0x688] sm:$0xff]
    %v309 = vld [vmem:[#allocation7 + $0x690] sm:$0xff]
    %v310 = vld [vmem:[#allocation7 + $0x698] sm:$0xff]
    %v311 = vld [vmem:[#allocation7 + $0x700] sm:$0xff]
    %v312 = vld [vmem:[#allocation7 + $0x708] sm:$0xff]
    %v313 = vld [vmem:[#allocation7 + $0x710] sm:$0xff]
    %v314 = vld [vmem:[#allocation7 + $0x718] sm:$0xff]
    %v315 = vld [vmem:[#allocation7 + $0x780] sm:$0xff]
    %v316 = vld [vmem:[#allocation7 + $0x788] sm:$0xff]
    %v317 = vld [vmem:[#allocation7 + $0x790] sm:$0xff]
    %v318 = vld [vmem:[#allocation7 + $0x798] sm:$0xff]
    %v319 = vunpack.c.l.s8.bf16 %v255
    %v320 = vunpack.c.l.s8.bf16 %v256
    %v321 = vunpack.c.l.s8.bf16 %v257
    %v322 = vunpack.c.l.s8.bf16 %v258
    %v323 = vunpack.c.h.s8.bf16 %v255
    %v324 = vunpack.c.h.s8.bf16 %v256
    %v325 = vunpack.c.h.s8.bf16 %v257
    %v326 = vunpack.c.h.s8.bf16 %v258
    %v327 = vunpack.c.l.s8.bf16 %v259
    %v328 = vunpack.c.l.s8.bf16 %v260
    %v329 = vunpack.c.l.s8.bf16 %v261
    %v330 = vunpack.c.l.s8.bf16 %v262
    %v331 = vunpack.c.h.s8.bf16 %v259
    %v332 = vunpack.c.h.s8.bf16 %v260
    %v333 = vunpack.c.h.s8.bf16 %v261
    %v334 = vunpack.c.h.s8.bf16 %v262
    %v335 = vunpack.c.l.s8.bf16 %v263
    %v336 = vunpack.c.l.s8.bf16 %v264
    %v337 = vunpack.c.l.s8.bf16 %v265
    %v338 = vunpack.c.l.s8.bf16 %v266
    %v339 = vunpack.c.h.s8.bf16 %v263
    %v340 = vunpack.c.h.s8.bf16 %v264
    %v341 = vunpack.c.h.s8.bf16 %v265
    %v342 = vunpack.c.h.s8.bf16 %v266
    %v343 = vunpack.c.l.s8.bf16 %v267
    %v344 = vunpack.c.l.s8.bf16 %v268
    %v345 = vunpack.c.l.s8.bf16 %v269
    %v346 = vunpack.c.l.s8.bf16 %v270
    %v347 = vunpack.c.h.s8.bf16 %v267
    %v348 = vunpack.c.h.s8.bf16 %v268
    %v349 = vunpack.c.h.s8.bf16 %v269
    %v350 = vunpack.c.h.s8.bf16 %v270
    %v351 = vunpack.c.l.s8.bf16 %v271
    %v352 = vunpack.c.l.s8.bf16 %v272
    %v353 = vunpack.c.l.s8.bf16 %v273
    %v354 = vunpack.c.l.s8.bf16 %v274
    %v355 = vunpack.c.h.s8.bf16 %v271
    %v356 = vunpack.c.h.s8.bf16 %v272
    %v357 = vunpack.c.h.s8.bf16 %v273
    %v358 = vunpack.c.h.s8.bf16 %v274
    %v359 = vunpack.c.l.s8.bf16 %v275
    %v360 = vunpack.c.l.s8.bf16 %v276
    %v361 = vunpack.c.l.s8.bf16 %v277
    %v362 = vunpack.c.l.s8.bf16 %v278
    %v363 = vunpack.c.h.s8.bf16 %v275
    %v364 = vunpack.c.h.s8.bf16 %v276
    %v365 = vunpack.c.h.s8.bf16 %v277
    %v366 = vunpack.c.h.s8.bf16 %v278
    %v367 = vunpack.c.l.s8.bf16 %v279
    %v368 = vunpack.c.l.s8.bf16 %v280
    %v369 = vunpack.c.l.s8.bf16 %v281
    %v370 = vunpack.c.l.s8.bf16 %v282
    %v371 = vunpack.c.h.s8.bf16 %v279
    %v372 = vunpack.c.h.s8.bf16 %v280
    %v373 = vunpack.c.h.s8.bf16 %v281
    %v374 = vunpack.c.h.s8.bf16 %v282
    %v375 = vunpack.c.l.s8.bf16 %v283
    %v376 = vunpack.c.l.s8.bf16 %v284
    %v377 = vunpack.c.l.s8.bf16 %v285
    %v378 = vunpack.c.l.s8.bf16 %v286
    %v379 = vunpack.c.h.s8.bf16 %v283
    %v380 = vunpack.c.h.s8.bf16 %v284
    %v381 = vunpack.c.h.s8.bf16 %v285
    %v382 = vunpack.c.h.s8.bf16 %v286
    %v383 = vunpack.c.l.s8.bf16 %v287
    %v384 = vunpack.c.l.s8.bf16 %v288
    %v385 = vunpack.c.l.s8.bf16 %v289
    %v386 = vunpack.c.l.s8.bf16 %v290
    %v387 = vunpack.c.h.s8.bf16 %v287
    %v388 = vunpack.c.h.s8.bf16 %v288
    %v389 = vunpack.c.h.s8.bf16 %v289
    %v390 = vunpack.c.h.s8.bf16 %v290
    %v391 = vunpack.c.l.s8.bf16 %v291
    %v392 = vunpack.c.l.s8.bf16 %v292
    %v393 = vunpack.c.l.s8.bf16 %v293
    %v394 = vunpack.c.l.s8.bf16 %v294
    %v395 = vunpack.c.h.s8.bf16 %v291
    %v396 = vunpack.c.h.s8.bf16 %v292
    %v397 = vunpack.c.h.s8.bf16 %v293
    %v398 = vunpack.c.h.s8.bf16 %v294
    %v399 = vunpack.c.l.s8.bf16 %v295
    %v400 = vunpack.c.l.s8.bf16 %v296
    %v401 = vunpack.c.l.s8.bf16 %v297
    %v402 = vunpack.c.l.s8.bf16 %v298
    %v403 = vunpack.c.h.s8.bf16 %v295
    %v404 = vunpack.c.h.s8.bf16 %v296
    %v405 = vunpack.c.h.s8.bf16 %v297
    %v406 = vunpack.c.h.s8.bf16 %v298
    %v407 = vunpack.c.l.s8.bf16 %v299
    %v408 = vunpack.c.l.s8.bf16 %v300
    %v409 = vunpack.c.l.s8.bf16 %v301
    %v410 = vunpack.c.l.s8.bf16 %v302
    %v411 = vunpack.c.h.s8.bf16 %v299
    %v412 = vunpack.c.h.s8.bf16 %v300
    %v413 = vunpack.c.h.s8.bf16 %v301
    %v414 = vunpack.c.h.s8.bf16 %v302
    %v415 = vunpack.c.l.s8.bf16 %v303
    %v416 = vunpack.c.l.s8.bf16 %v304
    %v417 = vunpack.c.l.s8.bf16 %v305
    %v418 = vunpack.c.l.s8.bf16 %v306
    %v419 = vunpack.c.h.s8.bf16 %v303
    %v420 = vunpack.c.h.s8.bf16 %v304
    %v421 = vunpack.c.h.s8.bf16 %v305
    %v422 = vunpack.c.h.s8.bf16 %v306
    %v423 = vunpack.c.l.s8.bf16 %v307
    %v424 = vunpack.c.l.s8.bf16 %v308
    %v425 = vunpack.c.l.s8.bf16 %v309
    %v426 = vunpack.c.l.s8.bf16 %v310
    %v427 = vunpack.c.h.s8.bf16 %v307
    %v428 = vunpack.c.h.s8.bf16 %v308
    %v429 = vunpack.c.h.s8.bf16 %v309
    %v430 = vunpack.c.h.s8.bf16 %v310
    %v431 = vunpack.c.l.s8.bf16 %v311
    %v432 = vunpack.c.l.s8.bf16 %v312
    %v433 = vunpack.c.l.s8.bf16 %v313
    %v434 = vunpack.c.l.s8.bf16 %v314
    %v435 = vunpack.c.h.s8.bf16 %v311
    %v436 = vunpack.c.h.s8.bf16 %v312
    %v437 = vunpack.c.h.s8.bf16 %v313
    %v438 = vunpack.c.h.s8.bf16 %v314
    %v439 = vunpack.c.l.s8.bf16 %v315
    %v440 = vunpack.c.l.s8.bf16 %v316
    %v441 = vunpack.c.l.s8.bf16 %v317
    %v442 = vunpack.c.l.s8.bf16 %v318
    %v443 = vunpack.c.h.s8.bf16 %v315
    %v444 = vunpack.c.h.s8.bf16 %v316
    %v445 = vunpack.c.h.s8.bf16 %v317
    %v446 = vunpack.c.h.s8.bf16 %v318
    %v447 = vpack.c.bf16 %v251, %v251
    %v448 = vpack.c.bf16 %v252, %v252
    %v449 = vpack.c.bf16 %v253, %v253
    %v450 = vpack.c.bf16 %v254, %v254
    %451 = vmatprep.subr.bf16.mxu0 %v320
    %452 = vmatpush1.bf16.msra.mxu0 %v319
    %453 = vmatprep.subr.bf16.mxu0 %v324
    %454 = vmatpush1.bf16.msra.mxu0 %v323
    %455 = vmatprep.subr.bf16.mxu0 %v328
    %456 = vmatpush1.bf16.msra.mxu0 %v327
    %457 = vmatprep.subr.bf16.mxu0 %v332
    %458 = vmatpush1.bf16.msra.mxu0 %v331
    %459 = vmatprep.subr.bf16.mxu0 %v336
    %460 = vmatpush1.bf16.msra.mxu0 %v335
    %461 = vmatprep.subr.bf16.mxu0 %v340
    %462 = vmatpush1.bf16.msra.mxu0 %v339
    %463 = vmatprep.subr.bf16.mxu0 %v344
    %464 = vmatpush1.bf16.msra.mxu0 %v343
    %465 = vmatprep.subr.bf16.mxu0 %v348
    %466 = vmatpush1.bf16.msra.mxu0 %v347
    %467 = vmatprep.subr.bf16.mxu0 %v352
    %468 = vmatpush1.bf16.msra.mxu0 %v351
    %469 = vmatprep.subr.bf16.mxu0 %v356
    %470 = vmatpush1.bf16.msra.mxu0 %v355
    %471 = vmatprep.subr.bf16.mxu0 %v360
    %472 = vmatpush1.bf16.msra.mxu0 %v359
    %473 = vmatprep.subr.bf16.mxu0 %v364
    %474 = vmatpush1.bf16.msra.mxu0 %v363
    %475 = vmatprep.subr.bf16.mxu0 %v368
    %476 = vmatpush1.bf16.msra.mxu0 %v367
    %477 = vmatprep.subr.bf16.mxu0 %v372
    %478 = vmatpush1.bf16.msra.mxu0 %v371
    %479 = vmatprep.subr.bf16.mxu0 %v376
    %480 = vmatpush1.bf16.msra.mxu0 %v375
    %481 = vmatprep.subr.bf16.mxu0 %v380
    %482 = vmatpush1.bf16.msra.mxu0 %v379
    %483 = vmatprep.mubr.bf16.mxu0 %v448
    %484 = vmatmul.mubr.bf16.gmra.mrb[0].mxu0 %v447
    %v485 = vpop.f32.mrb[0].mxu0
    %v486 = vadd.f32 0.0, %v485
    %v487 = vpop.f32.mrb[0].mxu0
    %v488 = vadd.f32 0.0, %v487
    %v489 = vpop.f32.mrb[0].mxu0
    %v490 = vpop.f32.mrb[0].mxu0
    %491 = vdwg.mxu0
    %492 = vmatprep.subr.bf16.mxu0 %v384
    %493 = vmatpush1.bf16.msra.mxu0 %v383
    %494 = vmatprep.subr.bf16.mxu0 %v388
    %495 = vmatpush1.bf16.msra.mxu0 %v387
    %496 = vmatprep.subr.bf16.mxu0 %v392
    %497 = vmatpush1.bf16.msra.mxu0 %v391
    %498 = vmatprep.subr.bf16.mxu0 %v396
    %499 = vmatpush1.bf16.msra.mxu0 %v395
    %500 = vmatprep.subr.bf16.mxu0 %v400
    %501 = vmatpush1.bf16.msra.mxu0 %v399
    %502 = vmatprep.subr.bf16.mxu0 %v404
    %503 = vmatpush1.bf16.msra.mxu0 %v403
    %504 = vmatprep.subr.bf16.mxu0 %v408
    %505 = vmatpush1.bf16.msra.mxu0 %v407
    %506 = vmatprep.subr.bf16.mxu0 %v412
    %507 = vmatpush1.bf16.msra.mxu0 %v411
    %508 = vmatprep.subr.bf16.mxu0 %v416
    %509 = vmatpush1.bf16.msra.mxu0 %v415
    %510 = vmatprep.subr.bf16.mxu0 %v420
    %511 = vmatpush1.bf16.msra.mxu0 %v419
    %512 = vmatprep.subr.bf16.mxu0 %v424
    %513 = vmatpush1.bf16.msra.mxu0 %v423
    %514 = vmatprep.subr.bf16.mxu0 %v428
    %515 = vmatpush1.bf16.msra.mxu0 %v427
    %516 = vmatprep.subr.bf16.mxu0 %v432
    %517 = vmatpush1.bf16.msra.mxu0 %v431
    %518 = vmatprep.subr.bf16.mxu0 %v436
    %519 = vmatpush1.bf16.msra.mxu0 %v435
    %520 = vmatprep.subr.bf16.mxu0 %v440
    %521 = vmatpush1.bf16.msra.mxu0 %v439
    %522 = vmatprep.subr.bf16.mxu0 %v444
    %523 = vmatpush1.bf16.msra.mxu0 %v443
    %524 = vmatprep.mubr.bf16.mxu0 %v450
    %525 = vmatmul.mubr.bf16.gmra.mrb[0].mxu0 %v449
    %v526 = vpop.f32.mrb[0].mxu0
    %v527 = vadd.f32 %v486, %v526
    %v528 = vpop.f32.mrb[0].mxu0
    %v529 = vadd.f32 %v488, %v528
    %v530 = vpop.f32.mrb[0].mxu0
    %v531 = vpop.f32.mrb[0].mxu0
    %532 = vdwg.mxu0
    %533 = vmatprep.subr.bf16.mxu0 %v322
    %534 = vmatpush1.bf16.msra.mxu0 %v321
    %535 = vmatprep.subr.bf16.mxu0 %v326
    %536 = vmatpush1.bf16.msra.mxu0 %v325
    %537 = vmatprep.subr.bf16.mxu0 %v330
    %538 = vmatpush1.bf16.msra.mxu0 %v329
    %539 = vmatprep.subr.bf16.mxu0 %v334
    %540 = vmatpush1.bf16.msra.mxu0 %v333
    %541 = vmatprep.subr.bf16.mxu0 %v338
    %542 = vmatpush1.bf16.msra.mxu0 %v337
    %543 = vmatprep.subr.bf16.mxu0 %v342
    %544 = vmatpush1.bf16.msra.mxu0 %v341
    %545 = vmatprep.subr.bf16.mxu0 %v346
    %546 = vmatpush1.bf16.msra.mxu0 %v345
    %547 = vmatprep.subr.bf16.mxu0 %v350
    %548 = vmatpush1.bf16.msra.mxu0 %v349
    %549 = vmatprep.subr.bf16.mxu0 %v354
    %550 = vmatpush1.bf16.msra.mxu0 %v353
    %551 = vmatprep.subr.bf16.mxu0 %v358
    %552 = vmatpush1.bf16.msra.mxu0 %v357
    %553 = vmatprep.subr.bf16.mxu0 %v362
    %554 = vmatpush1.bf16.msra.mxu0 %v361
    %555 = vmatprep.subr.bf16.mxu0 %v366
    %556 = vmatpush1.bf16.msra.mxu0 %v365
    %557 = vmatprep.subr.bf16.mxu0 %v370
    %558 = vmatpush1.bf16.msra.mxu0 %v369
    %559 = vmatprep.subr.bf16.mxu0 %v374
    %560 = vmatpush1.bf16.msra.mxu0 %v373
    %561 = vmatprep.subr.bf16.mxu0 %v378
    %562 = vmatpush1.bf16.msra.mxu0 %v377
    %563 = vmatprep.subr.bf16.mxu0 %v382
    %564 = vmatpush1.bf16.msra.mxu0 %v381
    %565 = vmatprep.mubr.bf16.mxu0 %v448
    %566 = vmatmul.mubr.bf16.gmra.mrb[0].mxu0 %v447
    %v567 = vpop.f32.mrb[0].mxu0
    %v568 = vadd.f32 0.0, %v567
    %v569 = vpop.f32.mrb[0].mxu0
    %v570 = vadd.f32 0.0, %v569
    %v571 = vpop.f32.mrb[0].mxu0
    %v572 = vpop.f32.mrb[0].mxu0
    %573 = vdwg.mxu0
    %574 = vmatprep.subr.bf16.mxu0 %v386
    %575 = vmatpush1.bf16.msra.mxu0 %v385
    %576 = vmatprep.subr.bf16.mxu0 %v390
    %577 = vmatpush1.bf16.msra.mxu0 %v389
    %578 = vmatprep.subr.bf16.mxu0 %v394
    %579 = vmatpush1.bf16.msra.mxu0 %v393
    %580 = vmatprep.subr.bf16.mxu0 %v398
    %581 = vmatpush1.bf16.msra.mxu0 %v397
    %582 = vmatprep.subr.bf16.mxu0 %v402
    %583 = vmatpush1.bf16.msra.mxu0 %v401
    %584 = vmatprep.subr.bf16.mxu0 %v406
    %585 = vmatpush1.bf16.msra.mxu0 %v405
    %586 = vmatprep.subr.bf16.mxu0 %v410
    %587 = vmatpush1.bf16.msra.mxu0 %v409
    %588 = vmatprep.subr.bf16.mxu0 %v414
    %589 = vmatpush1.bf16.msra.mxu0 %v413
    %590 = vmatprep.subr.bf16.mxu0 %v418
    %591 = vmatpush1.bf16.msra.mxu0 %v417
    %592 = vmatprep.subr.bf16.mxu0 %v422
    %593 = vmatpush1.bf16.msra.mxu0 %v421
    %594 = vmatprep.subr.bf16.mxu0 %v426
    %595 = vmatpush1.bf16.msra.mxu0 %v425
    %596 = vmatprep.subr.bf16.mxu0 %v430
    %597 = vmatpush1.bf16.msra.mxu0 %v429
    %598 = vmatprep.subr.bf16.mxu0 %v434
    %599 = vmatpush1.bf16.msra.mxu0 %v433
    %600 = vmatprep.subr.bf16.mxu0 %v438
    %601 = vmatpush1.bf16.msra.mxu0 %v437
    %602 = vmatprep.subr.bf16.mxu0 %v442
    %603 = vmatpush1.bf16.msra.mxu0 %v441
    %604 = vmatprep.subr.bf16.mxu0 %v446
    %605 = vmatpush1.bf16.msra.mxu0 %v445
    %606 = vmatprep.mubr.bf16.mxu0 %v450
    %607 = vmatmul.mubr.bf16.gmra.mrb[0].mxu0 %v449
    %v608 = vpop.f32.mrb[0].mxu0
    %v609 = vadd.f32 %v568, %v608
    %v610 = vpop.f32.mrb[0].mxu0
    %v611 = vadd.f32 %v570, %v610
    %v612 = vpop.f32.mrb[0].mxu0
    %v613 = vpop.f32.mrb[0].mxu0
    %614 = vdwg.mxu0
    %v615 = vld [vmem:[#allocation10 + $0x4] sm:$0xf]
    %v617 = vlaneseq
    %v618 = vshrl.u32 %v617, 7
    %v619 = vsub.s32 0, %v618
    %v620 = vrot.slane %v615, %v619
    %v621 = vlaneseq
    %v622 = vshrl.u32 %v621, 7
    %v623 = vsub.s32 1, %v622
    %v624 = vrot.slane %v615, %v623
    %v625 = vlaneseq
    %v626 = vshrl.u32 %v625, 7
    %v627 = vsub.s32 2, %v626
    %v628 = vrot.slane %v615, %v627
    %v629 = vlaneseq
    %v630 = vshrl.u32 %v629, 7
    %v631 = vsub.s32 3, %v630
    %v632 = vrot.slane %v615, %v631
    %v637 = vmul.f32 %v527, %v620
    %v638 = vmul.f32 %v529, %v624
    %v639 = vmul.f32 %v609, %v628
    %v640 = vmul.f32 %v611, %v632
    %v641 = vld [vmem:[#allocation11 + $0x4] sm:$0xf]
    %v643 = vlaneseq
    %v644 = vshrl.u32 %v643, 7
    %v645 = vsub.s32 0, %v644
    %v646 = vrot.slane %v641, %v645
    %v647 = vlaneseq
    %v648 = vshrl.u32 %v647, 7
    %v649 = vsub.s32 1, %v648
    %v650 = vrot.slane %v641, %v649
    %v651 = vlaneseq
    %v652 = vshrl.u32 %v651, 7
    %v653 = vsub.s32 2, %v652
    %v654 = vrot.slane %v641, %v653
    %v655 = vlaneseq
    %v656 = vshrl.u32 %v655, 7
    %v657 = vsub.s32 3, %v656
    %v658 = vrot.slane %v641, %v657
    %v663 = vadd.f32 %v637, %v646
    %v664 = vadd.f32 %v638, %v650
    %v665 = vadd.f32 %v639, %v654
    %v666 = vadd.f32 %v640, %v658
    %v667 = vmax.f32 %v663, 0.0
    %v668 = vmax.f32 %v664, 0.0
    %v669 = vmax.f32 %v665, 0.0
    %v670 = vmax.f32 %v666, 0.0
    %v671 = vld [vmem:[#allocation7 + $0x20] sm:$0xff]
    %v672 = vld [vmem:[#allocation7 + $0x28] sm:$0xff]
    %v673 = vld [vmem:[#allocation7 + $0x30] sm:$0xff]
    %v674 = vld [vmem:[#allocation7 + $0x38] sm:$0xff]
    %v675 = vld [vmem:[#allocation7 + $0xa0] sm:$0xff]
    %v676 = vld [vmem:[#allocation7 + $0xa8] sm:$0xff]
    %v677 = vld [vmem:[#allocation7 + $0xb0] sm:$0xff]
    %v678 = vld [vmem:[#allocation7 + $0xb8] sm:$0xff]
    %v679 = vld [vmem:[#allocation7 + $0x120] sm:$0xff]
    %v680 = vld [vmem:[#allocation7 + $0x128] sm:$0xff]
    %v681 = vld [vmem:[#allocation7 + $0x130] sm:$0xff]
    %v682 = vld [vmem:[#allocation7 + $0x138] sm:$0xff]
    %v683 = vld [vmem:[#allocation7 + $0x1a0] sm:$0xff]
    %v684 = vld [vmem:[#allocation7 + $0x1a8] sm:$0xff]
    %v685 = vld [vmem:[#allocation7 + $0x1b0] sm:$0xff]
    %v686 = vld [vmem:[#allocation7 + $0x1b8] sm:$0xff]
    %v687 = vld [vmem:[#allocation7 + $0x220] sm:$0xff]
    %v688 = vld [vmem:[#allocation7 + $0x228] sm:$0xff]
    %v689 = vld [vmem:[#allocation7 + $0x230] sm:$0xff]
    %v690 = vld [vmem:[#allocation7 + $0x238] sm:$0xff]
    %v691 = vld [vmem:[#allocation7 + $0x2a0] sm:$0xff]
    %v692 = vld [vmem:[#allocation7 + $0x2a8] sm:$0xff]
    %v693 = vld [vmem:[#allocation7 + $0x2b0] sm:$0xff]
    %v694 = vld [vmem:[#allocation7 + $0x2b8] sm:$0xff]
    %v695 = vld [vmem:[#allocation7 + $0x320] sm:$0xff]
    %v696 = vld [vmem:[#allocation7 + $0x328] sm:$0xff]
    %v697 = vld [vmem:[#allocation7 + $0x330] sm:$0xff]
    %v698 = vld [vmem:[#allocation7 + $0x338] sm:$0xff]
    %v699 = vld [vmem:[#allocation7 + $0x3a0] sm:$0xff]
    %v700 = vld [vmem:[#allocation7 + $0x3a8] sm:$0xff]
    %v701 = vld [vmem:[#allocation7 + $0x3b0] sm:$0xff]
    %v702 = vld [vmem:[#allocation7 + $0x3b8] sm:$0xff]
    %v703 = vld [vmem:[#allocation7 + $0x420] sm:$0xff]
    %v704 = vld [vmem:[#allocation7 + $0x428] sm:$0xff]
    %v705 = vld [vmem:[#allocation7 + $0x430] sm:$0xff]
    %v706 = vld [vmem:[#allocation7 + $0x438] sm:$0xff]
    %v707 = vld [vmem:[#allocation7 + $0x4a0] sm:$0xff]
    %v708 = vld [vmem:[#allocation7 + $0x4a8] sm:$0xff]
    %v709 = vld [vmem:[#allocation7 + $0x4b0] sm:$0xff]
    %v710 = vld [vmem:[#allocation7 + $0x4b8] sm:$0xff]
    %v711 = vld [vmem:[#allocation7 + $0x520] sm:$0xff]
    %v712 = vld [vmem:[#allocation7 + $0x528] sm:$0xff]
    %v713 = vld [vmem:[#allocation7 + $0x530] sm:$0xff]
    %v714 = vld [vmem:[#allocation7 + $0x538] sm:$0xff]
    %v715 = vld [vmem:[#allocation7 + $0x5a0] sm:$0xff]
    %v716 = vld [vmem:[#allocation7 + $0x5a8] sm:$0xff]
    %v717 = vld [vmem:[#allocation7 + $0x5b0] sm:$0xff]
    %v718 = vld [vmem:[#allocation7 + $0x5b8] sm:$0xff]
    %v719 = vld [vmem:[#allocation7 + $0x620] sm:$0xff]
    %v720 = vld [vmem:[#allocation7 + $0x628] sm:$0xff]
    %v721 = vld [vmem:[#allocation7 + $0x630] sm:$0xff]
    %v722 = vld [vmem:[#allocation7 + $0x638] sm:$0xff]
    %v723 = vld [vmem:[#allocation7 + $0x6a0] sm:$0xff]
    %v724 = vld [vmem:[#allocation7 + $0x6a8] sm:$0xff]
    %v725 = vld [vmem:[#allocation7 + $0x6b0] sm:$0xff]
    %v726 = vld [vmem:[#allocation7 + $0x6b8] sm:$0xff]
    %v727 = vld [vmem:[#allocation7 + $0x720] sm:$0xff]
    %v728 = vld [vmem:[#allocation7 + $0x728] sm:$0xff]
    %v729 = vld [vmem:[#allocation7 + $0x730] sm:$0xff]
    %v730 = vld [vmem:[#allocation7 + $0x738] sm:$0xff]
    %v731 = vld [vmem:[#allocation7 + $0x7a0] sm:$0xff]
    %v732 = vld [vmem:[#allocation7 + $0x7a8] sm:$0xff]
    %v733 = vld [vmem:[#allocation7 + $0x7b0] sm:$0xff]
    %v734 = vld [vmem:[#allocation7 + $0x7b8] sm:$0xff]
    %v735 = vunpack.c.l.s8.bf16 %v671
    %v736 = vunpack.c.l.s8.bf16 %v672
    %v737 = vunpack.c.l.s8.bf16 %v673
    %v738 = vunpack.c.l.s8.bf16 %v674
    %v739 = vunpack.c.h.s8.bf16 %v671
    %v740 = vunpack.c.h.s8.bf16 %v672
    %v741 = vunpack.c.h.s8.bf16 %v673
    %v742 = vunpack.c.h.s8.bf16 %v674
    %v743 = vunpack.c.l.s8.bf16 %v675
    %v744 = vunpack.c.l.s8.bf16 %v676
    %v745 = vunpack.c.l.s8.bf16 %v677
    %v746 = vunpack.c.l.s8.bf16 %v678
    %v747 = vunpack.c.h.s8.bf16 %v675
    %v748 = vunpack.c.h.s8.bf16 %v676
    %v749 = vunpack.c.h.s8.bf16 %v677
    %v750 = vunpack.c.h.s8.bf16 %v678
    %v751 = vunpack.c.l.s8.bf16 %v679
    %v752 = vunpack.c.l.s8.bf16 %v680
    %v753 = vunpack.c.l.s8.bf16 %v681
    %v754 = vunpack.c.l.s8.bf16 %v682
    %v755 = vunpack.c.h.s8.bf16 %v679
    %v756 = vunpack.c.h.s8.bf16 %v680
    %v757 = vunpack.c.h.s8.bf16 %v681
    %v758 = vunpack.c.h.s8.bf16 %v682
    %v759 = vunpack.c.l.s8.bf16 %v683
    %v760 = vunpack.c.l.s8.bf16 %v684
    %v761 = vunpack.c.l.s8.bf16 %v685
    %v762 = vunpack.c.l.s8.bf16 %v686
    %v763 = vunpack.c.h.s8.bf16 %v683
    %v764 = vunpack.c.h.s8.bf16 %v684
    %v765 = vunpack.c.h.s8.bf16 %v685
    %v766 = vunpack.c.h.s8.bf16 %v686
    %v767 = vunpack.c.l.s8.bf16 %v687
    %v768 = vunpack.c.l.s8.bf16 %v688
    %v769 = vunpack.c.l.s8.bf16 %v689
    %v770 = vunpack.c.l.s8.bf16 %v690
    %v771 = vunpack.c.h.s8.bf16 %v687
    %v772 = vunpack.c.h.s8.bf16 %v688
    %v773 = vunpack.c.h.s8.bf16 %v689
    %v774 = vunpack.c.h.s8.bf16 %v690
    %v775 = vunpack.c.l.s8.bf16 %v691
    %v776 = vunpack.c.l.s8.bf16 %v692
    %v777 = vunpack.c.l.s8.bf16 %v693
    %v778 = vunpack.c.l.s8.bf16 %v694
    %v779 = vunpack.c.h.s8.bf16 %v691
    %v780 = vunpack.c.h.s8.bf16 %v692
    %v781 = vunpack.c.h.s8.bf16 %v693
    %v782 = vunpack.c.h.s8.bf16 %v694
    %v783 = vunpack.c.l.s8.bf16 %v695
    %v784 = vunpack.c.l.s8.bf16 %v696
    %v785 = vunpack.c.l.s8.bf16 %v697
    %v786 = vunpack.c.l.s8.bf16 %v698
    %v787 = vunpack.c.h.s8.bf16 %v695
    %v788 = vunpack.c.h.s8.bf16 %v696
    %v789 = vunpack.c.h.s8.bf16 %v697
    %v790 = vunpack.c.h.s8.bf16 %v698
    %v791 = vunpack.c.l.s8.bf16 %v699
    %v792 = vunpack.c.l.s8.bf16 %v700
    %v793 = vunpack.c.l.s8.bf16 %v701
    %v794 = vunpack.c.l.s8.bf16 %v702
    %v795 = vunpack.c.h.s8.bf16 %v699
    %v796 = vunpack.c.h.s8.bf16 %v700
    %v797 = vunpack.c.h.s8.bf16 %v701
    %v798 = vunpack.c.h.s8.bf16 %v702
    %v799 = vunpack.c.l.s8.bf16 %v703
    %v800 = vunpack.c.l.s8.bf16 %v704
    %v801 = vunpack.c.l.s8.bf16 %v705
    %v802 = vunpack.c.l.s8.bf16 %v706
    %v803 = vunpack.c.h.s8.bf16 %v703
    %v804 = vunpack.c.h.s8.bf16 %v704
    %v805 = vunpack.c.h.s8.bf16 %v705
    %v806 = vunpack.c.h.s8.bf16 %v706
    %v807 = vunpack.c.l.s8.bf16 %v707
    %v808 = vunpack.c.l.s8.bf16 %v708
    %v809 = vunpack.c.l.s8.bf16 %v709
    %v810 = vunpack.c.l.s8.bf16 %v710
    %v811 = vunpack.c.h.s8.bf16 %v707
    %v812 = vunpack.c.h.s8.bf16 %v708
    %v813 = vunpack.c.h.s8.bf16 %v709
    %v814 = vunpack.c.h.s8.bf16 %v710
    %v815 = vunpack.c.l.s8.bf16 %v711
    %v816 = vunpack.c.l.s8.bf16 %v712
    %v817 = vunpack.c.l.s8.bf16 %v713
    %v818 = vunpack.c.l.s8.bf16 %v714
    %v819 = vunpack.c.h.s8.bf16 %v711
    %v820 = vunpack.c.h.s8.bf16 %v712
    %v821 = vunpack.c.h.s8.bf16 %v713
    %v822 = vunpack.c.h.s8.bf16 %v714
    %v823 = vunpack.c.l.s8.bf16 %v715
    %v824 = vunpack.c.l.s8.bf16 %v716
    %v825 = vunpack.c.l.s8.bf16 %v717
    %v826 = vunpack.c.l.s8.bf16 %v718
    %v827 = vunpack.c.h.s8.bf16 %v715
    %v828 = vunpack.c.h.s8.bf16 %v716
    %v829 = vunpack.c.h.s8.bf16 %v717
    %v830 = vunpack.c.h.s8.bf16 %v718
    %v831 = vunpack.c.l.s8.bf16 %v719
    %v832 = vunpack.c.l.s8.bf16 %v720
    %v833 = vunpack.c.l.s8.bf16 %v721
    %v834 = vunpack.c.l.s8.bf16 %v722
    %v835 = vunpack.c.h.s8.bf16 %v719
    %v836 = vunpack.c.h.s8.bf16 %v720
    %v837 = vunpack.c.h.s8.bf16 %v721
    %v838 = vunpack.c.h.s8.bf16 %v722
    %v839 = vunpack.c.l.s8.bf16 %v723
    %v840 = vunpack.c.l.s8.bf16 %v724
    %v841 = vunpack.c.l.s8.bf16 %v725
    %v842 = vunpack.c.l.s8.bf16 %v726
    %v843 = vunpack.c.h.s8.bf16 %v723
    %v844 = vunpack.c.h.s8.bf16 %v724
    %v845 = vunpack.c.h.s8.bf16 %v725
    %v846 = vunpack.c.h.s8.bf16 %v726
    %v847 = vunpack.c.l.s8.bf16 %v727
    %v848 = vunpack.c.l.s8.bf16 %v728
    %v849 = vunpack.c.l.s8.bf16 %v729
    %v850 = vunpack.c.l.s8.bf16 %v730
    %v851 = vunpack.c.h.s8.bf16 %v727
    %v852 = vunpack.c.h.s8.bf16 %v728
    %v853 = vunpack.c.h.s8.bf16 %v729
    %v854 = vunpack.c.h.s8.bf16 %v730
    %v855 = vunpack.c.l.s8.bf16 %v731
    %v856 = vunpack.c.l.s8.bf16 %v732
    %v857 = vunpack.c.l.s8.bf16 %v733
    %v858 = vunpack.c.l.s8.bf16 %v734
    %v859 = vunpack.c.h.s8.bf16 %v731
    %v860 = vunpack.c.h.s8.bf16 %v732
    %v861 = vunpack.c.h.s8.bf16 %v733
    %v862 = vunpack.c.h.s8.bf16 %v734
    %v863 = vpack.c.bf16 %v667, %v667
    %v864 = vpack.c.bf16 %v668, %v668
    %v865 = vpack.c.bf16 %v669, %v669
    %v866 = vpack.c.bf16 %v670, %v670
    %867 = vmatprep.subr.bf16.mxu0 %v736
    %868 = vmatpush1.bf16.msra.mxu0 %v735
    %869 = vmatprep.subr.bf16.mxu0 %v740
    %870 = vmatpush1.bf16.msra.mxu0 %v739
    %871 = vmatprep.subr.bf16.mxu0 %v744
    %872 = vmatpush1.bf16.msra.mxu0 %v743
    %873 = vmatprep.subr.bf16.mxu0 %v748
    %874 = vmatpush1.bf16.msra.mxu0 %v747
    %875 = vmatprep.subr.bf16.mxu0 %v752
    %876 = vmatpush1.bf16.msra.mxu0 %v751
    %877 = vmatprep.subr.bf16.mxu0 %v756
    %878 = vmatpush1.bf16.msra.mxu0 %v755
    %879 = vmatprep.subr.bf16.mxu0 %v760
    %880 = vmatpush1.bf16.msra.mxu0 %v759
    %881 = vmatprep.subr.bf16.mxu0 %v764
    %882 = vmatpush1.bf16.msra.mxu0 %v763
    %883 = vmatprep.subr.bf16.mxu0 %v768
    %884 = vmatpush1.bf16.msra.mxu0 %v767
    %885 = vmatprep.subr.bf16.mxu0 %v772
    %886 = vmatpush1.bf16.msra.mxu0 %v771
    %887 = vmatprep.subr.bf16.mxu0 %v776
    %888 = vmatpush1.bf16.msra.mxu0 %v775
    %889 = vmatprep.subr.bf16.mxu0 %v780
    %890 = vmatpush1.bf16.msra.mxu0 %v779
    %891 = vmatprep.subr.bf16.mxu0 %v784
    %892 = vmatpush1.bf16.msra.mxu0 %v783
    %893 = vmatprep.subr.bf16.mxu0 %v788
    %894 = vmatpush1.bf16.msra.mxu0 %v787
    %895 = vmatprep.subr.bf16.mxu0 %v792
    %896 = vmatpush1.bf16.msra.mxu0 %v791
    %897 = vmatprep.subr.bf16.mxu0 %v796
    %898 = vmatpush1.bf16.msra.mxu0 %v795
    %899 = vmatprep.mubr.bf16.mxu0 %v864
    %900 = vmatmul.mubr.bf16.gmra.mrb[0].mxu0 %v863
    %v901 = vpop.f32.mrb[0].mxu0
    %v902 = vadd.f32 0.0, %v901
    %v903 = vpop.f32.mrb[0].mxu0
    %v904 = vadd.f32 0.0, %v903
    %v905 = vpop.f32.mrb[0].mxu0
    %v906 = vpop.f32.mrb[0].mxu0
    %907 = vdwg.mxu0
    %908 = vmatprep.subr.bf16.mxu0 %v800
    %909 = vmatpush1.bf16.msra.mxu0 %v799
    %910 = vmatprep.subr.bf16.mxu0 %v804
    %911 = vmatpush1.bf16.msra.mxu0 %v803
    %912 = vmatprep.subr.bf16.mxu0 %v808
    %913 = vmatpush1.bf16.msra.mxu0 %v807
    %914 = vmatprep.subr.bf16.mxu0 %v812
    %915 = vmatpush1.bf16.msra.mxu0 %v811
    %916 = vmatprep.subr.bf16.mxu0 %v816
    %917 = vmatpush1.bf16.msra.mxu0 %v815
    %918 = vmatprep.subr.bf16.mxu0 %v820
    %919 = vmatpush1.bf16.msra.mxu0 %v819
    %920 = vmatprep.subr.bf16.mxu0 %v824
    %921 = vmatpush1.bf16.msra.mxu0 %v823
    %922 = vmatprep.subr.bf16.mxu0 %v828
    %923 = vmatpush1.bf16.msra.mxu0 %v827
    %924 = vmatprep.subr.bf16.mxu0 %v832
    %925 = vmatpush1.bf16.msra.mxu0 %v831
    %926 = vmatprep.subr.bf16.mxu0 %v836
    %927 = vmatpush1.bf16.msra.mxu0 %v835
    %928 = vmatprep.subr.bf16.mxu0 %v840
    %929 = vmatpush1.bf16.msra.mxu0 %v839
    %930 = vmatprep.subr.bf16.mxu0 %v844
    %931 = vmatpush1.bf16.msra.mxu0 %v843
    %932 = vmatprep.subr.bf16.mxu0 %v848
    %933 = vmatpush1.bf16.msra.mxu0 %v847
    %934 = vmatprep.subr.bf16.mxu0 %v852
    %935 = vmatpush1.bf16.msra.mxu0 %v851
    %936 = vmatprep.subr.bf16.mxu0 %v856
    %937 = vmatpush1.bf16.msra.mxu0 %v855
    %938 = vmatprep.subr.bf16.mxu0 %v860
    %939 = vmatpush1.bf16.msra.mxu0 %v859
    %940 = vmatprep.mubr.bf16.mxu0 %v866
    %941 = vmatmul.mubr.bf16.gmra.mrb[0].mxu0 %v865
    %v942 = vpop.f32.mrb[0].mxu0
    %v943 = vadd.f32 %v902, %v942
    %v944 = vpop.f32.mrb[0].mxu0
    %v945 = vadd.f32 %v904, %v944
    %v946 = vpop.f32.mrb[0].mxu0
    %v947 = vpop.f32.mrb[0].mxu0
    %948 = vdwg.mxu0
    %949 = vmatprep.subr.bf16.mxu0 %v738
    %950 = vmatpush1.bf16.msra.mxu0 %v737
    %951 = vmatprep.subr.bf16.mxu0 %v742
    %952 = vmatpush1.bf16.msra.mxu0 %v741
    %953 = vmatprep.subr.bf16.mxu0 %v746
    %954 = vmatpush1.bf16.msra.mxu0 %v745
    %955 = vmatprep.subr.bf16.mxu0 %v750
    %956 = vmatpush1.bf16.msra.mxu0 %v749
    %957 = vmatprep.subr.bf16.mxu0 %v754
    %958 = vmatpush1.bf16.msra.mxu0 %v753
    %959 = vmatprep.subr.bf16.mxu0 %v758
    %960 = vmatpush1.bf16.msra.mxu0 %v757
    %961 = vmatprep.subr.bf16.mxu0 %v762
    %962 = vmatpush1.bf16.msra.mxu0 %v761
    %963 = vmatprep.subr.bf16.mxu0 %v766
    %964 = vmatpush1.bf16.msra.mxu0 %v765
    %965 = vmatprep.subr.bf16.mxu0 %v770
    %966 = vmatpush1.bf16.msra.mxu0 %v769
    %967 = vmatprep.subr.bf16.mxu0 %v774
    %968 = vmatpush1.bf16.msra.mxu0 %v773
    %969 = vmatprep.subr.bf16.mxu0 %v778
    %970 = vmatpush1.bf16.msra.mxu0 %v777
    %971 = vmatprep.subr.bf16.mxu0 %v782
    %972 = vmatpush1.bf16.msra.mxu0 %v781
    %973 = vmatprep.subr.bf16.mxu0 %v786
    %974 = vmatpush1.bf16.msra.mxu0 %v785
    %975 = vmatprep.subr.bf16.mxu0 %v790
    %976 = vmatpush1.bf16.msra.mxu0 %v789
    %977 = vmatprep.subr.bf16.mxu0 %v794
    %978 = vmatpush1.bf16.msra.mxu0 %v793
    %979 = vmatprep.subr.bf16.mxu0 %v798
    %980 = vmatpush1.bf16.msra.mxu0 %v797
    %981 = vmatprep.mubr.bf16.mxu0 %v864
    %982 = vmatmul.mubr.bf16.gmra.mrb[0].mxu0 %v863
    %v983 = vpop.f32.mrb[0].mxu0
    %v984 = vadd.f32 0.0, %v983
    %v985 = vpop.f32.mrb[0].mxu0
    %v986 = vadd.f32 0.0, %v985
    %v987 = vpop.f32.mrb[0].mxu0
    %v988 = vpop.f32.mrb[0].mxu0
    %989 = vdwg.mxu0
    %990 = vmatprep.subr.bf16.mxu0 %v802
    %991 = vmatpush1.bf16.msra.mxu0 %v801
    %992 = vmatprep.subr.bf16.mxu0 %v806
    %993 = vmatpush1.bf16.msra.mxu0 %v805
    %994 = vmatprep.subr.bf16.mxu0 %v810
    %995 = vmatpush1.bf16.msra.mxu0 %v809
    %996 = vmatprep.subr.bf16.mxu0 %v814
    %997 = vmatpush1.bf16.msra.mxu0 %v813
    %998 = vmatprep.subr.bf16.mxu0 %v818
    %999 = vmatpush1.bf16.msra.mxu0 %v817
    %1000 = vmatprep.subr.bf16.mxu0 %v822
    %1001 = vmatpush1.bf16.msra.mxu0 %v821
    %1002 = vmatprep.subr.bf16.mxu0 %v826
    %1003 = vmatpush1.bf16.msra.mxu0 %v825
    %1004 = vmatprep.subr.bf16.mxu0 %v830
    %1005 = vmatpush1.bf16.msra.mxu0 %v829
    %1006 = vmatprep.subr.bf16.mxu0 %v834
    %1007 = vmatpush1.bf16.msra.mxu0 %v833
    %1008 = vmatprep.subr.bf16.mxu0 %v838
    %1009 = vmatpush1.bf16.msra.mxu0 %v837
    %1010 = vmatprep.subr.bf16.mxu0 %v842
    %1011 = vmatpush1.bf16.msra.mxu0 %v841
    %1012 = vmatprep.subr.bf16.mxu0 %v846
    %1013 = vmatpush1.bf16.msra.mxu0 %v845
    %1014 = vmatprep.subr.bf16.mxu0 %v850
    %1015 = vmatpush1.bf16.msra.mxu0 %v849
    %1016 = vmatprep.subr.bf16.mxu0 %v854
    %1017 = vmatpush1.bf16.msra.mxu0 %v853
    %1018 = vmatprep.subr.bf16.mxu0 %v858
    %1019 = vmatpush1.bf16.msra.mxu0 %v857
    %1020 = vmatprep.subr.bf16.mxu0 %v862
    %1021 = vmatpush1.bf16.msra.mxu0 %v861
    %1022 = vmatprep.mubr.bf16.mxu0 %v866
    %1023 = vmatmul.mubr.bf16.gmra.mrb[0].mxu0 %v865
    %v1024 = vpop.f32.mrb[0].mxu0
    %v1025 = vadd.f32 %v984, %v1024
    %v1026 = vpop.f32.mrb[0].mxu0
    %v1027 = vadd.f32 %v986, %v1026
    %v1028 = vpop.f32.mrb[0].mxu0
    %v1029 = vpop.f32.mrb[0].mxu0
    %1030 = vdwg.mxu0
    %v1031 = vld [vmem:[#allocation10 + $0x8] sm:$0xf]
    %v1033 = vlaneseq
    %v1034 = vshrl.u32 %v1033, 7
    %v1035 = vsub.s32 0, %v1034
    %v1036 = vrot.slane %v1031, %v1035
    %v1037 = vlaneseq
    %v1038 = vshrl.u32 %v1037, 7
    %v1039 = vsub.s32 1, %v1038
    %v1040 = vrot.slane %v1031, %v1039
    %v1041 = vlaneseq
    %v1042 = vshrl.u32 %v1041, 7
    %v1043 = vsub.s32 2, %v1042
    %v1044 = vrot.slane %v1031, %v1043
    %v1045 = vlaneseq
    %v1046 = vshrl.u32 %v1045, 7
    %v1047 = vsub.s32 3, %v1046
    %v1048 = vrot.slane %v1031, %v1047
    %v1053 = vmul.f32 %v943, %v1036
    %v1054 = vmul.f32 %v945, %v1040
    %v1055 = vmul.f32 %v1025, %v1044
    %v1056 = vmul.f32 %v1027, %v1048
    %v1057 = vld [vmem:[#allocation11 + $0x8] sm:$0xf]
    %v1059 = vlaneseq
    %v1060 = vshrl.u32 %v1059, 7
    %v1061 = vsub.s32 0, %v1060
    %v1062 = vrot.slane %v1057, %v1061
    %v1063 = vlaneseq
    %v1064 = vshrl.u32 %v1063, 7
    %v1065 = vsub.s32 1, %v1064
    %v1066 = vrot.slane %v1057, %v1065
    %v1067 = vlaneseq
    %v1068 = vshrl.u32 %v1067, 7
    %v1069 = vsub.s32 2, %v1068
    %v1070 = vrot.slane %v1057, %v1069
    %v1071 = vlaneseq
    %v1072 = vshrl.u32 %v1071, 7
    %v1073 = vsub.s32 3, %v1072
    %v1074 = vrot.slane %v1057, %v1073
    %v1079 = vadd.f32 %v1053, %v1062
    %v1080 = vadd.f32 %v1054, %v1066
    %v1081 = vadd.f32 %v1055, %v1070
    %v1082 = vadd.f32 %v1056, %v1074
    %v1083 = vmax.f32 %v1079, 0.0
    %v1084 = vmax.f32 %v1080, 0.0
    %v1085 = vmax.f32 %v1081, 0.0
    %v1086 = vmax.f32 %v1082, 0.0
    %v1087 = vld [vmem:[#allocation7 + $0x40] sm:$0xff]
    %v1088 = vld [vmem:[#allocation7 + $0x48] sm:$0xff]
    %v1089 = vld [vmem:[#allocation7 + $0x50] sm:$0xff]
    %v1090 = vld [vmem:[#allocation7 + $0x58] sm:$0xff]
    %v1091 = vld [vmem:[#allocation7 + $0x60] sm:$0xff]
    %v1092 = vld [vmem:[#allocation7 + $0x68] sm:$0xff]
    %v1093 = vld [vmem:[#allocation7 + $0x70] sm:$0xff]
    %v1094 = vld [vmem:[#allocation7 + $0x78] sm:$0xff]
    %v1095 = vld [vmem:[#allocation7 + $0xc0] sm:$0xff]
    %v1096 = vld [vmem:[#allocation7 + $0xc8] sm:$0xff]
    %v1097 = vld [vmem:[#allocation7 + $0xd0] sm:$0xff]
    %v1098 = vld [vmem:[#allocation7 + $0xd8] sm:$0xff]
    %v1099 = vld [vmem:[#allocation7 + $0xe0] sm:$0xff]
    %v1100 = vld [vmem:[#allocation7 + $0xe8] sm:$0xff]
    %v1101 = vld [vmem:[#allocation7 + $0xf0] sm:$0xff]
    %v1102 = vld [vmem:[#allocation7 + $0xf8] sm:$0xff]
    %v1103 = vld [vmem:[#allocation7 + $0x140] sm:$0xff]
    %v1104 = vld [vmem:[#allocation7 + $0x148] sm:$0xff]
    %v1105 = vld [vmem:[#allocation7 + $0x150] sm:$0xff]
    %v1106 = vld [vmem:[#allocation7 + $0x158] sm:$0xff]
    %v1107 = vld [vmem:[#allocation7 + $0x160] sm:$0xff]
    %v1108 = vld [vmem:[#allocation7 + $0x168] sm:$0xff]
    %v1109 = vld [vmem:[#allocation7 + $0x170] sm:$0xff]
    %v1110 = vld [vmem:[#allocation7 + $0x178] sm:$0xff]
    %v1111 = vld [vmem:[#allocation7 + $0x1c0] sm:$0xff]
    %v1112 = vld [vmem:[#allocation7 + $0x1c8] sm:$0xff]
    %v1113 = vld [vmem:[#allocation7 + $0x1d0] sm:$0xff]
    %v1114 = vld [vmem:[#allocation7 + $0x1d8] sm:$0xff]
    %v1115 = vld [vmem:[#allocation7 + $0x1e0] sm:$0xff]
    %v1116 = vld [vmem:[#allocation7 + $0x1e8] sm:$0xff]
    %v1117 = vld [vmem:[#allocation7 + $0x1f0] sm:$0xff]
    %v1118 = vld [vmem:[#allocation7 + $0x1f8] sm:$0xff]
    %v1119 = vld [vmem:[#allocation7 + $0x240] sm:$0xff]
    %v1120 = vld [vmem:[#allocation7 + $0x248] sm:$0xff]
    %v1121 = vld [vmem:[#allocation7 + $0x250] sm:$0xff]
    %v1122 = vld [vmem:[#allocation7 + $0x258] sm:$0xff]
    %v1123 = vld [vmem:[#allocation7 + $0x260] sm:$0xff]
    %v1124 = vld [vmem:[#allocation7 + $0x268] sm:$0xff]
    %v1125 = vld [vmem:[#allocation7 + $0x270] sm:$0xff]
    %v1126 = vld [vmem:[#allocation7 + $0x278] sm:$0xff]
    %v1127 = vld [vmem:[#allocation7 + $0x2c0] sm:$0xff]
    %v1128 = vld [vmem:[#allocation7 + $0x2c8] sm:$0xff]
    %v1129 = vld [vmem:[#allocation7 + $0x2d0] sm:$0xff]
    %v1130 = vld [vmem:[#allocation7 + $0x2d8] sm:$0xff]
    %v1131 = vld [vmem:[#allocation7 + $0x2e0] sm:$0xff]
    %v1132 = vld [vmem:[#allocation7 + $0x2e8] sm:$0xff]
    %v1133 = vld [vmem:[#allocation7 + $0x2f0] sm:$0xff]
    %v1134 = vld [vmem:[#allocation7 + $0x2f8] sm:$0xff]
    %v1135 = vld [vmem:[#allocation7 + $0x340] sm:$0xff]
    %v1136 = vld [vmem:[#allocation7 + $0x348] sm:$0xff]
    %v1137 = vld [vmem:[#allocation7 + $0x350] sm:$0xff]
    %v1138 = vld [vmem:[#allocation7 + $0x358] sm:$0xff]
    %v1139 = vld [vmem:[#allocation7 + $0x360] sm:$0xff]
    %v1140 = vld [vmem:[#allocation7 + $0x368] sm:$0xff]
    %v1141 = vld [vmem:[#allocation7 + $0x370] sm:$0xff]
    %v1142 = vld [vmem:[#allocation7 + $0x378] sm:$0xff]
    %v1143 = vld [vmem:[#allocation7 + $0x3c0] sm:$0xff]
    %v1144 = vld [vmem:[#allocation7 + $0x3c8] sm:$0xff]
    %v1145 = vld [vmem:[#allocation7 + $0x3d0] sm:$0xff]
    %v1146 = vld [vmem:[#allocation7 + $0x3d8] sm:$0xff]
    %v1147 = vld [vmem:[#allocation7 + $0x3e0] sm:$0xff]
    %v1148 = vld [vmem:[#allocation7 + $0x3e8] sm:$0xff]
    %v1149 = vld [vmem:[#allocation7 + $0x3f0] sm:$0xff]
    %v1150 = vld [vmem:[#allocation7 + $0x3f8] sm:$0xff]
    %v1151 = vld [vmem:[#allocation7 + $0x440] sm:$0xff]
    %v1152 = vld [vmem:[#allocation7 + $0x448] sm:$0xff]
    %v1153 = vld [vmem:[#allocation7 + $0x450] sm:$0xff]
    %v1154 = vld [vmem:[#allocation7 + $0x458] sm:$0xff]
    %v1155 = vld [vmem:[#allocation7 + $0x460] sm:$0xff]
    %v1156 = vld [vmem:[#allocation7 + $0x468] sm:$0xff]
    %v1157 = vld [vmem:[#allocation7 + $0x470] sm:$0xff]
    %v1158 = vld [vmem:[#allocation7 + $0x478] sm:$0xff]
    %v1159 = vld [vmem:[#allocation7 + $0x4c0] sm:$0xff]
    %v1160 = vld [vmem:[#allocation7 + $0x4c8] sm:$0xff]
    %v1161 = vld [vmem:[#allocation7 + $0x4d0] sm:$0xff]
    %v1162 = vld [vmem:[#allocation7 + $0x4d8] sm:$0xff]
    %v1163 = vld [vmem:[#allocation7 + $0x4e0] sm:$0xff]
    %v1164 = vld [vmem:[#allocation7 + $0x4e8] sm:$0xff]
    %v1165 = vld [vmem:[#allocation7 + $0x4f0] sm:$0xff]
    %v1166 = vld [vmem:[#allocation7 + $0x4f8] sm:$0xff]
    %v1167 = vld [vmem:[#allocation7 + $0x540] sm:$0xff]
    %v1168 = vld [vmem:[#allocation7 + $0x548] sm:$0xff]
    %v1169 = vld [vmem:[#allocation7 + $0x550] sm:$0xff]
    %v1170 = vld [vmem:[#allocation7 + $0x558] sm:$0xff]
    %v1171 = vld [vmem:[#allocation7 + $0x560] sm:$0xff]
    %v1172 = vld [vmem:[#allocation7 + $0x568] sm:$0xff]
    %v1173 = vld [vmem:[#allocation7 + $0x570] sm:$0xff]
    %v1174 = vld [vmem:[#allocation7 + $0x578] sm:$0xff]
    %v1175 = vld [vmem:[#allocation7 + $0x5c0] sm:$0xff]
    %v1176 = vld [vmem:[#allocation7 + $0x5c8] sm:$0xff]
    %v1177 = vld [vmem:[#allocation7 + $0x5d0] sm:$0xff]
    %v1178 = vld [vmem:[#allocation7 + $0x5d8] sm:$0xff]
    %v1179 = vld [vmem:[#allocation7 + $0x5e0] sm:$0xff]
    %v1180 = vld [vmem:[#allocation7 + $0x5e8] sm:$0xff]
    %v1181 = vld [vmem:[#allocation7 + $0x5f0] sm:$0xff]
    %v1182 = vld [vmem:[#allocation7 + $0x5f8] sm:$0xff]
    %v1183 = vld [vmem:[#allocation7 + $0x640] sm:$0xff]
    %v1184 = vld [vmem:[#allocation7 + $0x648] sm:$0xff]
    %v1185 = vld [vmem:[#allocation7 + $0x650] sm:$0xff]
    %v1186 = vld [vmem:[#allocation7 + $0x658] sm:$0xff]
    %v1187 = vld [vmem:[#allocation7 + $0x660] sm:$0xff]
    %v1188 = vld [vmem:[#allocation7 + $0x668] sm:$0xff]
    %v1189 = vld [vmem:[#allocation7 + $0x670] sm:$0xff]
    %v1190 = vld [vmem:[#allocation7 + $0x678] sm:$0xff]
    %v1191 = vld [vmem:[#allocation7 + $0x6c0] sm:$0xff]
    %v1192 = vld [vmem:[#allocation7 + $0x6c8] sm:$0xff]
    %v1193 = vld [vmem:[#allocation7 + $0x6d0] sm:$0xff]
    %v1194 = vld [vmem:[#allocation7 + $0x6d8] sm:$0xff]
    %v1195 = vld [vmem:[#allocation7 + $0x6e0] sm:$0xff]
    %v1196 = vld [vmem:[#allocation7 + $0x6e8] sm:$0xff]
    %v1197 = vld [vmem:[#allocation7 + $0x6f0] sm:$0xff]
    %v1198 = vld [vmem:[#allocation7 + $0x6f8] sm:$0xff]
    %v1199 = vld [vmem:[#allocation7 + $0x740] sm:$0xff]
    %v1200 = vld [vmem:[#allocation7 + $0x748] sm:$0xff]
    %v1201 = vld [vmem:[#allocation7 + $0x750] sm:$0xff]
    %v1202 = vld [vmem:[#allocation7 + $0x758] sm:$0xff]
    %v1203 = vld [vmem:[#allocation7 + $0x760] sm:$0xff]
    %v1204 = vld [vmem:[#allocation7 + $0x768] sm:$0xff]
    %v1205 = vld [vmem:[#allocation7 + $0x770] sm:$0xff]
    %v1206 = vld [vmem:[#allocation7 + $0x778] sm:$0xff]
    %v1207 = vld [vmem:[#allocation7 + $0x7c0] sm:$0xff]
    %v1208 = vld [vmem:[#allocation7 + $0x7c8] sm:$0xff]
    %v1209 = vld [vmem:[#allocation7 + $0x7d0] sm:$0xff]
    %v1210 = vld [vmem:[#allocation7 + $0x7d8] sm:$0xff]
    %v1211 = vld [vmem:[#allocation7 + $0x7e0] sm:$0xff]
    %v1212 = vld [vmem:[#allocation7 + $0x7e8] sm:$0xff]
    %v1213 = vld [vmem:[#allocation7 + $0x7f0] sm:$0xff]
    %v1214 = vld [vmem:[#allocation7 + $0x7f8] sm:$0xff]
    %v1215 = vunpack.c.l.s8.bf16 %v1087
    %v1216 = vunpack.c.l.s8.bf16 %v1088
    %v1217 = vunpack.c.l.s8.bf16 %v1089
    %v1218 = vunpack.c.l.s8.bf16 %v1090
    %v1219 = vunpack.c.l.s8.bf16 %v1091
    %v1220 = vunpack.c.l.s8.bf16 %v1092
    %v1221 = vunpack.c.l.s8.bf16 %v1093
    %v1222 = vunpack.c.l.s8.bf16 %v1094
    %v1223 = vunpack.c.h.s8.bf16 %v1087
    %v1224 = vunpack.c.h.s8.bf16 %v1088
    %v1225 = vunpack.c.h.s8.bf16 %v1089
    %v1226 = vunpack.c.h.s8.bf16 %v1090
    %v1227 = vunpack.c.h.s8.bf16 %v1091
    %v1228 = vunpack.c.h.s8.bf16 %v1092
    %v1229 = vunpack.c.h.s8.bf16 %v1093
    %v1230 = vunpack.c.h.s8.bf16 %v1094
    %v1231 = vunpack.c.l.s8.bf16 %v1095
    %v1232 = vunpack.c.l.s8.bf16 %v1096
    %v1233 = vunpack.c.l.s8.bf16 %v1097
    %v1234 = vunpack.c.l.s8.bf16 %v1098
    %v1235 = vunpack.c.l.s8.bf16 %v1099
    %v1236 = vunpack.c.l.s8.bf16 %v1100
    %v1237 = vunpack.c.l.s8.bf16 %v1101
    %v1238 = vunpack.c.l.s8.bf16 %v1102
    %v1239 = vunpack.c.h.s8.bf16 %v1095
    %v1240 = vunpack.c.h.s8.bf16 %v1096
    %v1241 = vunpack.c.h.s8.bf16 %v1097
    %v1242 = vunpack.c.h.s8.bf16 %v1098
    %v1243 = vunpack.c.h.s8.bf16 %v1099
    %v1244 = vunpack.c.h.s8.bf16 %v1100
    %v1245 = vunpack.c.h.s8.bf16 %v1101
    %v1246 = vunpack.c.h.s8.bf16 %v1102
    %v1247 = vunpack.c.l.s8.bf16 %v1103
    %v1248 = vunpack.c.l.s8.bf16 %v1104
    %v1249 = vunpack.c.l.s8.bf16 %v1105
    %v1250 = vunpack.c.l.s8.bf16 %v1106
    %v1251 = vunpack.c.l.s8.bf16 %v1107
    %v1252 = vunpack.c.l.s8.bf16 %v1108
    %v1253 = vunpack.c.l.s8.bf16 %v1109
    %v1254 = vunpack.c.l.s8.bf16 %v1110
    %v1255 = vunpack.c.h.s8.bf16 %v1103
    %v1256 = vunpack.c.h.s8.bf16 %v1104
    %v1257 = vunpack.c.h.s8.bf16 %v1105
    %v1258 = vunpack.c.h.s8.bf16 %v1106
    %v1259 = vunpack.c.h.s8.bf16 %v1107
    %v1260 = vunpack.c.h.s8.bf16 %v1108
    %v1261 = vunpack.c.h.s8.bf16 %v1109
    %v1262 = vunpack.c.h.s8.bf16 %v1110
    %v1263 = vunpack.c.l.s8.bf16 %v1111
    %v1264 = vunpack.c.l.s8.bf16 %v1112
    %v1265 = vunpack.c.l.s8.bf16 %v1113
    %v1266 = vunpack.c.l.s8.bf16 %v1114
    %v1267 = vunpack.c.l.s8.bf16 %v1115
    %v1268 = vunpack.c.l.s8.bf16 %v1116
    %v1269 = vunpack.c.l.s8.bf16 %v1117
    %v1270 = vunpack.c.l.s8.bf16 %v1118
    %v1271 = vunpack.c.h.s8.bf16 %v1111
    %v1272 = vunpack.c.h.s8.bf16 %v1112
    %v1273 = vunpack.c.h.s8.bf16 %v1113
    %v1274 = vunpack.c.h.s8.bf16 %v1114
    %v1275 = vunpack.c.h.s8.bf16 %v1115
    %v1276 = vunpack.c.h.s8.bf16 %v1116
    %v1277 = vunpack.c.h.s8.bf16 %v1117
    %v1278 = vunpack.c.h.s8.bf16 %v1118
    %v1279 = vunpack.c.l.s8.bf16 %v1119
    %v1280 = vunpack.c.l.s8.bf16 %v1120
    %v1281 = vunpack.c.l.s8.bf16 %v1121
    %v1282 = vunpack.c.l.s8.bf16 %v1122
    %v1283 = vunpack.c.l.s8.bf16 %v1123
    %v1284 = vunpack.c.l.s8.bf16 %v1124
    %v1285 = vunpack.c.l.s8.bf16 %v1125
    %v1286 = vunpack.c.l.s8.bf16 %v1126
    %v1287 = vunpack.c.h.s8.bf16 %v1119
    %v1288 = vunpack.c.h.s8.bf16 %v1120
    %v1289 = vunpack.c.h.s8.bf16 %v1121
    %v1290 = vunpack.c.h.s8.bf16 %v1122
    %v1291 = vunpack.c.h.s8.bf16 %v1123
    %v1292 = vunpack.c.h.s8.bf16 %v1124
    %v1293 = vunpack.c.h.s8.bf16 %v1125
    %v1294 = vunpack.c.h.s8.bf16 %v1126
    %v1295 = vunpack.c.l.s8.bf16 %v1127
    %v1296 = vunpack.c.l.s8.bf16 %v1128
    %v1297 = vunpack.c.l.s8.bf16 %v1129
    %v1298 = vunpack.c.l.s8.bf16 %v1130
    %v1299 = vunpack.c.l.s8.bf16 %v1131
    %v1300 = vunpack.c.l.s8.bf16 %v1132
    %v1301 = vunpack.c.l.s8.bf16 %v1133
    %v1302 = vunpack.c.l.s8.bf16 %v1134
    %v1303 = vunpack.c.h.s8.bf16 %v1127
    %v1304 = vunpack.c.h.s8.bf16 %v1128
    %v1305 = vunpack.c.h.s8.bf16 %v1129
    %v1306 = vunpack.c.h.s8.bf16 %v1130
    %v1307 = vunpack.c.h.s8.bf16 %v1131
    %v1308 = vunpack.c.h.s8.bf16 %v1132
    %v1309 = vunpack.c.h.s8.bf16 %v1133
    %v1310 = vunpack.c.h.s8.bf16 %v1134
    %v1311 = vunpack.c.l.s8.bf16 %v1135
    %v1312 = vunpack.c.l.s8.bf16 %v1136
    %v1313 = vunpack.c.l.s8.bf16 %v1137
    %v1314 = vunpack.c.l.s8.bf16 %v1138
    %v1315 = vunpack.c.l.s8.bf16 %v1139
    %v1316 = vunpack.c.l.s8.bf16 %v1140
    %v1317 = vunpack.c.l.s8.bf16 %v1141
    %v1318 = vunpack.c.l.s8.bf16 %v1142
    %v1319 = vunpack.c.h.s8.bf16 %v1135
    %v1320 = vunpack.c.h.s8.bf16 %v1136
    %v1321 = vunpack.c.h.s8.bf16 %v1137
    %v1322 = vunpack.c.h.s8.bf16 %v1138
    %v1323 = vunpack.c.h.s8.bf16 %v1139
    %v1324 = vunpack.c.h.s8.bf16 %v1140
    %v1325 = vunpack.c.h.s8.bf16 %v1141
    %v1326 = vunpack.c.h.s8.bf16 %v1142
    %v1327 = vunpack.c.l.s8.bf16 %v1143
    %v1328 = vunpack.c.l.s8.bf16 %v1144
    %v1329 = vunpack.c.l.s8.bf16 %v1145
    %v1330 = vunpack.c.l.s8.bf16 %v1146
    %v1331 = vunpack.c.l.s8.bf16 %v1147
    %v1332 = vunpack.c.l.s8.bf16 %v1148
    %v1333 = vunpack.c.l.s8.bf16 %v1149
    %v1334 = vunpack.c.l.s8.bf16 %v1150
    %v1335 = vunpack.c.h.s8.bf16 %v1143
    %v1336 = vunpack.c.h.s8.bf16 %v1144
    %v1337 = vunpack.c.h.s8.bf16 %v1145
    %v1338 = vunpack.c.h.s8.bf16 %v1146
    %v1339 = vunpack.c.h.s8.bf16 %v1147
    %v1340 = vunpack.c.h.s8.bf16 %v1148
    %v1341 = vunpack.c.h.s8.bf16 %v1149
    %v1342 = vunpack.c.h.s8.bf16 %v1150
    %v1343 = vunpack.c.l.s8.bf16 %v1151
    %v1344 = vunpack.c.l.s8.bf16 %v1152
    %v1345 = vunpack.c.l.s8.bf16 %v1153
    %v1346 = vunpack.c.l.s8.bf16 %v1154
    %v1347 = vunpack.c.l.s8.bf16 %v1155
    %v1348 = vunpack.c.l.s8.bf16 %v1156
    %v1349 = vunpack.c.l.s8.bf16 %v1157
    %v1350 = vunpack.c.l.s8.bf16 %v1158
    %v1351 = vunpack.c.h.s8.bf16 %v1151
    %v1352 = vunpack.c.h.s8.bf16 %v1152
    %v1353 = vunpack.c.h.s8.bf16 %v1153
    %v1354 = vunpack.c.h.s8.bf16 %v1154
    %v1355 = vunpack.c.h.s8.bf16 %v1155
    %v1356 = vunpack.c.h.s8.bf16 %v1156
    %v1357 = vunpack.c.h.s8.bf16 %v1157
    %v1358 = vunpack.c.h.s8.bf16 %v1158
    %v1359 = vunpack.c.l.s8.bf16 %v1159
    %v1360 = vunpack.c.l.s8.bf16 %v1160
    %v1361 = vunpack.c.l.s8.bf16 %v1161
    %v1362 = vunpack.c.l.s8.bf16 %v1162
    %v1363 = vunpack.c.l.s8.bf16 %v1163
    %v1364 = vunpack.c.l.s8.bf16 %v1164
    %v1365 = vunpack.c.l.s8.bf16 %v1165
    %v1366 = vunpack.c.l.s8.bf16 %v1166
    %v1367 = vunpack.c.h.s8.bf16 %v1159
    %v1368 = vunpack.c.h.s8.bf16 %v1160
    %v1369 = vunpack.c.h.s8.bf16 %v1161
    %v1370 = vunpack.c.h.s8.bf16 %v1162
    %v1371 = vunpack.c.h.s8.bf16 %v1163
    %v1372 = vunpack.c.h.s8.bf16 %v1164
    %v1373 = vunpack.c.h.s8.bf16 %v1165
    %v1374 = vunpack.c.h.s8.bf16 %v1166
    %v1375 = vunpack.c.l.s8.bf16 %v1167
    %v1376 = vunpack.c.l.s8.bf16 %v1168
    %v1377 = vunpack.c.l.s8.bf16 %v1169
    %v1378 = vunpack.c.l.s8.bf16 %v1170
    %v1379 = vunpack.c.l.s8.bf16 %v1171
    %v1380 = vunpack.c.l.s8.bf16 %v1172
    %v1381 = vunpack.c.l.s8.bf16 %v1173
    %v1382 = vunpack.c.l.s8.bf16 %v1174
    %v1383 = vunpack.c.h.s8.bf16 %v1167
    %v1384 = vunpack.c.h.s8.bf16 %v1168
    %v1385 = vunpack.c.h.s8.bf16 %v1169
    %v1386 = vunpack.c.h.s8.bf16 %v1170
    %v1387 = vunpack.c.h.s8.bf16 %v1171
    %v1388 = vunpack.c.h.s8.bf16 %v1172
    %v1389 = vunpack.c.h.s8.bf16 %v1173
    %v1390 = vunpack.c.h.s8.bf16 %v1174
    %v1391 = vunpack.c.l.s8.bf16 %v1175
    %v1392 = vunpack.c.l.s8.bf16 %v1176
    %v1393 = vunpack.c.l.s8.bf16 %v1177
    %v1394 = vunpack.c.l.s8.bf16 %v1178
    %v1395 = vunpack.c.l.s8.bf16 %v1179
    %v1396 = vunpack.c.l.s8.bf16 %v1180
    %v1397 = vunpack.c.l.s8.bf16 %v1181
    %v1398 = vunpack.c.l.s8.bf16 %v1182
    %v1399 = vunpack.c.h.s8.bf16 %v1175
    %v1400 = vunpack.c.h.s8.bf16 %v1176
    %v1401 = vunpack.c.h.s8.bf16 %v1177
    %v1402 = vunpack.c.h.s8.bf16 %v1178
    %v1403 = vunpack.c.h.s8.bf16 %v1179
    %v1404 = vunpack.c.h.s8.bf16 %v1180
    %v1405 = vunpack.c.h.s8.bf16 %v1181
    %v1406 = vunpack.c.h.s8.bf16 %v1182
    %v1407 = vunpack.c.l.s8.bf16 %v1183
    %v1408 = vunpack.c.l.s8.bf16 %v1184
    %v1409 = vunpack.c.l.s8.bf16 %v1185
    %v1410 = vunpack.c.l.s8.bf16 %v1186
    %v1411 = vunpack.c.l.s8.bf16 %v1187
    %v1412 = vunpack.c.l.s8.bf16 %v1188
    %v1413 = vunpack.c.l.s8.bf16 %v1189
    %v1414 = vunpack.c.l.s8.bf16 %v1190
    %v1415 = vunpack.c.h.s8.bf16 %v1183
    %v1416 = vunpack.c.h.s8.bf16 %v1184
    %v1417 = vunpack.c.h.s8.bf16 %v1185
    %v1418 = vunpack.c.h.s8.bf16 %v1186
    %v1419 = vunpack.c.h.s8.bf16 %v1187
    %v1420 = vunpack.c.h.s8.bf16 %v1188
    %v1421 = vunpack.c.h.s8.bf16 %v1189
    %v1422 = vunpack.c.h.s8.bf16 %v1190
    %v1423 = vunpack.c.l.s8.bf16 %v1191
    %v1424 = vunpack.c.l.s8.bf16 %v1192
    %v1425 = vunpack.c.l.s8.bf16 %v1193
    %v1426 = vunpack.c.l.s8.bf16 %v1194
    %v1427 = vunpack.c.l.s8.bf16 %v1195
    %v1428 = vunpack.c.l.s8.bf16 %v1196
    %v1429 = vunpack.c.l.s8.bf16 %v1197
    %v1430 = vunpack.c.l.s8.bf16 %v1198
    %v1431 = vunpack.c.h.s8.bf16 %v1191
    %v1432 = vunpack.c.h.s8.bf16 %v1192
    %v1433 = vunpack.c.h.s8.bf16 %v1193
    %v1434 = vunpack.c.h.s8.bf16 %v1194
    %v1435 = vunpack.c.h.s8.bf16 %v1195
    %v1436 = vunpack.c.h.s8.bf16 %v1196
    %v1437 = vunpack.c.h.s8.bf16 %v1197
    %v1438 = vunpack.c.h.s8.bf16 %v1198
    %v1439 = vunpack.c.l.s8.bf16 %v1199
    %v1440 = vunpack.c.l.s8.bf16 %v1200
    %v1441 = vunpack.c.l.s8.bf16 %v1201
    %v1442 = vunpack.c.l.s8.bf16 %v1202
    %v1443 = vunpack.c.l.s8.bf16 %v1203
    %v1444 = vunpack.c.l.s8.bf16 %v1204
    %v1445 = vunpack.c.l.s8.bf16 %v1205
    %v1446 = vunpack.c.l.s8.bf16 %v1206
    %v1447 = vunpack.c.h.s8.bf16 %v1199
    %v1448 = vunpack.c.h.s8.bf16 %v1200
    %v1449 = vunpack.c.h.s8.bf16 %v1201
    %v1450 = vunpack.c.h.s8.bf16 %v1202
    %v1451 = vunpack.c.h.s8.bf16 %v1203
    %v1452 = vunpack.c.h.s8.bf16 %v1204
    %v1453 = vunpack.c.h.s8.bf16 %v1205
    %v1454 = vunpack.c.h.s8.bf16 %v1206
    %v1455 = vunpack.c.l.s8.bf16 %v1207
    %v1456 = vunpack.c.l.s8.bf16 %v1208
    %v1457 = vunpack.c.l.s8.bf16 %v1209
    %v1458 = vunpack.c.l.s8.bf16 %v1210
    %v1459 = vunpack.c.l.s8.bf16 %v1211
    %v1460 = vunpack.c.l.s8.bf16 %v1212
    %v1461 = vunpack.c.l.s8.bf16 %v1213
    %v1462 = vunpack.c.l.s8.bf16 %v1214
    %v1463 = vunpack.c.h.s8.bf16 %v1207
    %v1464 = vunpack.c.h.s8.bf16 %v1208
    %v1465 = vunpack.c.h.s8.bf16 %v1209
    %v1466 = vunpack.c.h.s8.bf16 %v1210
    %v1467 = vunpack.c.h.s8.bf16 %v1211
    %v1468 = vunpack.c.h.s8.bf16 %v1212
    %v1469 = vunpack.c.h.s8.bf16 %v1213
    %v1470 = vunpack.c.h.s8.bf16 %v1214
    %v1471 = vpack.c.bf16 %v1083, %v1083
    %v1472 = vpack.c.bf16 %v1084, %v1084
    %v1473 = vpack.c.bf16 %v1085, %v1085
    %v1474 = vpack.c.bf16 %v1086, %v1086
    %1475 = vmatprep.subr.bf16.mxu0 %v1216
    %1476 = vmatpush1.bf16.msra.mxu0 %v1215
    %1477 = vmatprep.subr.bf16.mxu0 %v1224
    %1478 = vmatpush1.bf16.msra.mxu0 %v1223
    %1479 = vmatprep.subr.bf16.mxu0 %v1232
    %1480 = vmatpush1.bf16.msra.mxu0 %v1231
    %1481 = vmatprep.subr.bf16.mxu0 %v1240
    %1482 = vmatpush1.bf16.msra.mxu0 %v1239
    %1483 = vmatprep.subr.bf16.mxu0 %v1248
    %1484 = vmatpush1.bf16.msra.mxu0 %v1247
    %1485 = vmatprep.subr.bf16.mxu0 %v1256
    %1486 = vmatpush1.bf16.msra.mxu0 %v1255
    %1487 = vmatprep.subr.bf16.mxu0 %v1264
    %1488 = vmatpush1.bf16.msra.mxu0 %v1263
    %1489 = vmatprep.subr.bf16.mxu0 %v1272
    %1490 = vmatpush1.bf16.msra.mxu0 %v1271
    %1491 = vmatprep.subr.bf16.mxu0 %v1280
    %1492 = vmatpush1.bf16.msra.mxu0 %v1279
    %1493 = vmatprep.subr.bf16.mxu0 %v1288
    %1494 = vmatpush1.bf16.msra.mxu0 %v1287
    %1495 = vmatprep.subr.bf16.mxu0 %v1296
    %1496 = vmatpush1.bf16.msra.mxu0 %v1295
    %1497 = vmatprep.subr.bf16.mxu0 %v1304
    %1498 = vmatpush1.bf16.msra.mxu0 %v1303
    %1499 = vmatprep.subr.bf16.mxu0 %v1312
    %1500 = vmatpush1.bf16.msra.mxu0 %v1311
    %1501 = vmatprep.subr.bf16.mxu0 %v1320
    %1502 = vmatpush1.bf16.msra.mxu0 %v1319
    %1503 = vmatprep.subr.bf16.mxu0 %v1328
    %1504 = vmatpush1.bf16.msra.mxu0 %v1327
    %1505 = vmatprep.subr.bf16.mxu0 %v1336
    %1506 = vmatpush1.bf16.msra.mxu0 %v1335
    %1507 = vmatprep.mubr.bf16.mxu0 %v1472
    %1508 = vmatmul.mubr.bf16.gmra.mrb[0].mxu0 %v1471
    %v1509 = vpop.f32.mrb[0].mxu0
    %v1510 = vadd.f32 0.0, %v1509
    %v1511 = vpop.f32.mrb[0].mxu0
    %v1512 = vadd.f32 0.0, %v1511
    %v1513 = vpop.f32.mrb[0].mxu0
    %v1514 = vpop.f32.mrb[0].mxu0
    %1515 = vdwg.mxu0
    %1516 = vmatprep.subr.bf16.mxu0 %v1344
    %1517 = vmatpush1.bf16.msra.mxu0 %v1343
    %1518 = vmatprep.subr.bf16.mxu0 %v1352
    %1519 = vmatpush1.bf16.msra.mxu0 %v1351
    %1520 = vmatprep.subr.bf16.mxu0 %v1360
    %1521 = vmatpush1.bf16.msra.mxu0 %v1359
    %1522 = vmatprep.subr.bf16.mxu0 %v1368
    %1523 = vmatpush1.bf16.msra.mxu0 %v1367
    %1524 = vmatprep.subr.bf16.mxu0 %v1376
    %1525 = vmatpush1.bf16.msra.mxu0 %v1375
    %1526 = vmatprep.subr.bf16.mxu0 %v1384
    %1527 = vmatpush1.bf16.msra.mxu0 %v1383
    %1528 = vmatprep.subr.bf16.mxu0 %v1392
    %1529 = vmatpush1.bf16.msra.mxu0 %v1391
    %1530 = vmatprep.subr.bf16.mxu0 %v1400
    %1531 = vmatpush1.bf16.msra.mxu0 %v1399
    %1532 = vmatprep.subr.bf16.mxu0 %v1408
    %1533 = vmatpush1.bf16.msra.mxu0 %v1407
    %1534 = vmatprep.subr.bf16.mxu0 %v1416
    %1535 = vmatpush1.bf16.msra.mxu0 %v1415
    %1536 = vmatprep.subr.bf16.mxu0 %v1424
    %1537 = vmatpush1.bf16.msra.mxu0 %v1423
    %1538 = vmatprep.subr.bf16.mxu0 %v1432
    %1539 = vmatpush1.bf16.msra.mxu0 %v1431
    %1540 = vmatprep.subr.bf16.mxu0 %v1440
    %1541 = vmatpush1.bf16.msra.mxu0 %v1439
    %1542 = vmatprep.subr.bf16.mxu0 %v1448
    %1543 = vmatpush1.bf16.msra.mxu0 %v1447
    %1544 = vmatprep.subr.bf16.mxu0 %v1456
    %1545 = vmatpush1.bf16.msra.mxu0 %v1455
    %1546 = vmatprep.subr.bf16.mxu0 %v1464
    %1547 = vmatpush1.bf16.msra.mxu0 %v1463
    %1548 = vmatprep.mubr.bf16.mxu0 %v1474
    %1549 = vmatmul.mubr.bf16.gmra.mrb[0].mxu0 %v1473
    %v1550 = vpop.f32.mrb[0].mxu0
    %v1551 = vadd.f32 %v1510, %v1550
    %v1552 = vpop.f32.mrb[0].mxu0
    %v1553 = vadd.f32 %v1512, %v1552
    %v1554 = vpop.f32.mrb[0].mxu0
    %v1555 = vpop.f32.mrb[0].mxu0
    %1556 = vdwg.mxu0
    %1557 = vmatprep.subr.bf16.mxu0 %v1218
    %1558 = vmatpush1.bf16.msra.mxu0 %v1217
    %1559 = vmatprep.subr.bf16.mxu0 %v1226
    %1560 = vmatpush1.bf16.msra.mxu0 %v1225
    %1561 = vmatprep.subr.bf16.mxu0 %v1234
    %1562 = vmatpush1.bf16.msra.mxu0 %v1233
    %1563 = vmatprep.subr.bf16.mxu0 %v1242
    %1564 = vmatpush1.bf16.msra.mxu0 %v1241
    %1565 = vmatprep.subr.bf16.mxu0 %v1250
    %1566 = vmatpush1.bf16.msra.mxu0 %v1249
    %1567 = vmatprep.subr.bf16.mxu0 %v1258
    %1568 = vmatpush1.bf16.msra.mxu0 %v1257
    %1569 = vmatprep.subr.bf16.mxu0 %v1266
    %1570 = vmatpush1.bf16.msra.mxu0 %v1265
    %1571 = vmatprep.subr.bf16.mxu0 %v1274
    %1572 = vmatpush1.bf16.msra.mxu0 %v1273
    %1573 = vmatprep.subr.bf16.mxu0 %v1282
    %1574 = vmatpush1.bf16.msra.mxu0 %v1281
    %1575 = vmatprep.subr.bf16.mxu0 %v1290
    %1576 = vmatpush1.bf16.msra.mxu0 %v1289
    %1577 = vmatprep.subr.bf16.mxu0 %v1298
    %1578 = vmatpush1.bf16.msra.mxu0 %v1297
    %1579 = vmatprep.subr.bf16.mxu0 %v1306
    %1580 = vmatpush1.bf16.msra.mxu0 %v1305
    %1581 = vmatprep.subr.bf16.mxu0 %v1314
    %1582 = vmatpush1.bf16.msra.mxu0 %v1313
    %1583 = vmatprep.subr.bf16.mxu0 %v1322
    %1584 = vmatpush1.bf16.msra.mxu0 %v1321
    %1585 = vmatprep.subr.bf16.mxu0 %v1330
    %1586 = vmatpush1.bf16.msra.mxu0 %v1329
    %1587 = vmatprep.subr.bf16.mxu0 %v1338
    %1588 = vmatpush1.bf16.msra.mxu0 %v1337
    %1589 = vmatprep.mubr.bf16.mxu0 %v1472
    %1590 = vmatmul.mubr.bf16.gmra.mrb[0].mxu0 %v1471
    %v1591 = vpop.f32.mrb[0].mxu0
    %v1592 = vadd.f32 0.0, %v1591
    %v1593 = vpop.f32.mrb[0].mxu0
    %v1594 = vadd.f32 0.0, %v1593
    %v1595 = vpop.f32.mrb[0].mxu0
    %v1596 = vpop.f32.mrb[0].mxu0
    %1597 = vdwg.mxu0
    %1598 = vmatprep.subr.bf16.mxu0 %v1346
    %1599 = vmatpush1.bf16.msra.mxu0 %v1345
    %1600 = vmatprep.subr.bf16.mxu0 %v1354
    %1601 = vmatpush1.bf16.msra.mxu0 %v1353
    %1602 = vmatprep.subr.bf16.mxu0 %v1362
    %1603 = vmatpush1.bf16.msra.mxu0 %v1361
    %1604 = vmatprep.subr.bf16.mxu0 %v1370
    %1605 = vmatpush1.bf16.msra.mxu0 %v1369
    %1606 = vmatprep.subr.bf16.mxu0 %v1378
    %1607 = vmatpush1.bf16.msra.mxu0 %v1377
    %1608 = vmatprep.subr.bf16.mxu0 %v1386
    %1609 = vmatpush1.bf16.msra.mxu0 %v1385
    %1610 = vmatprep.subr.bf16.mxu0 %v1394
    %1611 = vmatpush1.bf16.msra.mxu0 %v1393
    %1612 = vmatprep.subr.bf16.mxu0 %v1402
    %1613 = vmatpush1.bf16.msra.mxu0 %v1401
    %1614 = vmatprep.subr.bf16.mxu0 %v1410
    %1615 = vmatpush1.bf16.msra.mxu0 %v1409
    %1616 = vmatprep.subr.bf16.mxu0 %v1418
    %1617 = vmatpush1.bf16.msra.mxu0 %v1417
    %1618 = vmatprep.subr.bf16.mxu0 %v1426
    %1619 = vmatpush1.bf16.msra.mxu0 %v1425
    %1620 = vmatprep.subr.bf16.mxu0 %v1434
    %1621 = vmatpush1.bf16.msra.mxu0 %v1433
    %1622 = vmatprep.subr.bf16.mxu0 %v1442
    %1623 = vmatpush1.bf16.msra.mxu0 %v1441
    %1624 = vmatprep.subr.bf16.mxu0 %v1450
    %1625 = vmatpush1.bf16.msra.mxu0 %v1449
    %1626 = vmatprep.subr.bf16.mxu0 %v1458
    %1627 = vmatpush1.bf16.msra.mxu0 %v1457
    %1628 = vmatprep.subr.bf16.mxu0 %v1466
    %1629 = vmatpush1.bf16.msra.mxu0 %v1465
    %1630 = vmatprep.mubr.bf16.mxu0 %v1474
    %1631 = vmatmul.mubr.bf16.gmra.mrb[0].mxu0 %v1473
    %v1632 = vpop.f32.mrb[0].mxu0
    %v1633 = vadd.f32 %v1592, %v1632
    %v1634 = vpop.f32.mrb[0].mxu0
    %v1635 = vadd.f32 %v1594, %v1634
    %v1636 = vpop.f32.mrb[0].mxu0
    %v1637 = vpop.f32.mrb[0].mxu0
    %1638 = vdwg.mxu0
    %1639 = vmatprep.subr.bf16.mxu0 %v1220
    %1640 = vmatpush1.bf16.msra.mxu0 %v1219
    %1641 = vmatprep.subr.bf16.mxu0 %v1228
    %1642 = vmatpush1.bf16.msra.mxu0 %v1227
    %1643 = vmatprep.subr.bf16.mxu0 %v1236
    %1644 = vmatpush1.bf16.msra.mxu0 %v1235
    %1645 = vmatprep.subr.bf16.mxu0 %v1244
    %1646 = vmatpush1.bf16.msra.mxu0 %v1243
    %1647 = vmatprep.subr.bf16.mxu0 %v1252
    %1648 = vmatpush1.bf16.msra.mxu0 %v1251
    %1649 = vmatprep.subr.bf16.mxu0 %v1260
    %1650 = vmatpush1.bf16.msra.mxu0 %v1259
    %1651 = vmatprep.subr.bf16.mxu0 %v1268
    %1652 = vmatpush1.bf16.msra.mxu0 %v1267
    %1653 = vmatprep.subr.bf16.mxu0 %v1276
    %1654 = vmatpush1.bf16.msra.mxu0 %v1275
    %1655 = vmatprep.subr.bf16.mxu0 %v1284
    %1656 = vmatpush1.bf16.msra.mxu0 %v1283
    %1657 = vmatprep.subr.bf16.mxu0 %v1292
    %1658 = vmatpush1.bf16.msra.mxu0 %v1291
    %1659 = vmatprep.subr.bf16.mxu0 %v1300
    %1660 = vmatpush1.bf16.msra.mxu0 %v1299
    %1661 = vmatprep.subr.bf16.mxu0 %v1308
    %1662 = vmatpush1.bf16.msra.mxu0 %v1307
    %1663 = vmatprep.subr.bf16.mxu0 %v1316
    %1664 = vmatpush1.bf16.msra.mxu0 %v1315
    %1665 = vmatprep.subr.bf16.mxu0 %v1324
    %1666 = vmatpush1.bf16.msra.mxu0 %v1323
    %1667 = vmatprep.subr.bf16.mxu0 %v1332
    %1668 = vmatpush1.bf16.msra.mxu0 %v1331
    %1669 = vmatprep.subr.bf16.mxu0 %v1340
    %1670 = vmatpush1.bf16.msra.mxu0 %v1339
    %1671 = vmatprep.mubr.bf16.mxu0 %v1472
    %1672 = vmatmul.mubr.bf16.gmra.mrb[0].mxu0 %v1471
    %v1673 = vpop.f32.mrb[0].mxu0
    %v1674 = vadd.f32 0.0, %v1673
    %v1675 = vpop.f32.mrb[0].mxu0
    %v1676 = vadd.f32 0.0, %v1675
    %v1677 = vpop.f32.mrb[0].mxu0
    %v1678 = vpop.f32.mrb[0].mxu0
    %1679 = vdwg.mxu0
    %1680 = vmatprep.subr.bf16.mxu0 %v1348
    %1681 = vmatpush1.bf16.msra.mxu0 %v1347
    %1682 = vmatprep.subr.bf16.mxu0 %v1356
    %1683 = vmatpush1.bf16.msra.mxu0 %v1355
    %1684 = vmatprep.subr.bf16.mxu0 %v1364
    %1685 = vmatpush1.bf16.msra.mxu0 %v1363
    %1686 = vmatprep.subr.bf16.mxu0 %v1372
    %1687 = vmatpush1.bf16.msra.mxu0 %v1371
    %1688 = vmatprep.subr.bf16.mxu0 %v1380
    %1689 = vmatpush1.bf16.msra.mxu0 %v1379
    %1690 = vmatprep.subr.bf16.mxu0 %v1388
    %1691 = vmatpush1.bf16.msra.mxu0 %v1387
    %1692 = vmatprep.subr.bf16.mxu0 %v1396
    %1693 = vmatpush1.bf16.msra.mxu0 %v1395
    %1694 = vmatprep.subr.bf16.mxu0 %v1404
    %1695 = vmatpush1.bf16.msra.mxu0 %v1403
    %1696 = vmatprep.subr.bf16.mxu0 %v1412
    %1697 = vmatpush1.bf16.msra.mxu0 %v1411
    %1698 = vmatprep.subr.bf16.mxu0 %v1420
    %1699 = vmatpush1.bf16.msra.mxu0 %v1419
    %1700 = vmatprep.subr.bf16.mxu0 %v1428
    %1701 = vmatpush1.bf16.msra.mxu0 %v1427
    %1702 = vmatprep.subr.bf16.mxu0 %v1436
    %1703 = vmatpush1.bf16.msra.mxu0 %v1435
    %1704 = vmatprep.subr.bf16.mxu0 %v1444
    %1705 = vmatpush1.bf16.msra.mxu0 %v1443
    %1706 = vmatprep.subr.bf16.mxu0 %v1452
    %1707 = vmatpush1.bf16.msra.mxu0 %v1451
    %1708 = vmatprep.subr.bf16.mxu0 %v1460
    %1709 = vmatpush1.bf16.msra.mxu0 %v1459
    %1710 = vmatprep.subr.bf16.mxu0 %v1468
    %1711 = vmatpush1.bf16.msra.mxu0 %v1467
    %1712 = vmatprep.mubr.bf16.mxu0 %v1474
    %1713 = vmatmul.mubr.bf16.gmra.mrb[0].mxu0 %v1473
    %v1714 = vpop.f32.mrb[0].mxu0
    %v1715 = vadd.f32 %v1674, %v1714
    %v1716 = vpop.f32.mrb[0].mxu0
    %v1717 = vadd.f32 %v1676, %v1716
    %v1718 = vpop.f32.mrb[0].mxu0
    %v1719 = vpop.f32.mrb[0].mxu0
    %1720 = vdwg.mxu0
    %1721 = vmatprep.subr.bf16.mxu0 %v1222
    %1722 = vmatpush1.bf16.msra.mxu0 %v1221
    %1723 = vmatprep.subr.bf16.mxu0 %v1230
    %1724 = vmatpush1.bf16.msra.mxu0 %v1229
    %1725 = vmatprep.subr.bf16.mxu0 %v1238
    %1726 = vmatpush1.bf16.msra.mxu0 %v1237
    %1727 = vmatprep.subr.bf16.mxu0 %v1246
    %1728 = vmatpush1.bf16.msra.mxu0 %v1245
    %1729 = vmatprep.subr.bf16.mxu0 %v1254
    %1730 = vmatpush1.bf16.msra.mxu0 %v1253
    %1731 = vmatprep.subr.bf16.mxu0 %v1262
    %1732 = vmatpush1.bf16.msra.mxu0 %v1261
    %1733 = vmatprep.subr.bf16.mxu0 %v1270
    %1734 = vmatpush1.bf16.msra.mxu0 %v1269
    %1735 = vmatprep.subr.bf16.mxu0 %v1278
    %1736 = vmatpush1.bf16.msra.mxu0 %v1277
    %1737 = vmatprep.subr.bf16.mxu0 %v1286
    %1738 = vmatpush1.bf16.msra.mxu0 %v1285
    %1739 = vmatprep.subr.bf16.mxu0 %v1294
    %1740 = vmatpush1.bf16.msra.mxu0 %v1293
    %1741 = vmatprep.subr.bf16.mxu0 %v1302
    %1742 = vmatpush1.bf16.msra.mxu0 %v1301
    %1743 = vmatprep.subr.bf16.mxu0 %v1310
    %1744 = vmatpush1.bf16.msra.mxu0 %v1309
    %1745 = vmatprep.subr.bf16.mxu0 %v1318
    %1746 = vmatpush1.bf16.msra.mxu0 %v1317
    %1747 = vmatprep.subr.bf16.mxu0 %v1326
    %1748 = vmatpush1.bf16.msra.mxu0 %v1325
    %1749 = vmatprep.subr.bf16.mxu0 %v1334
    %1750 = vmatpush1.bf16.msra.mxu0 %v1333
    %1751 = vmatprep.subr.bf16.mxu0 %v1342
    %1752 = vmatpush1.bf16.msra.mxu0 %v1341
    %1753 = vmatprep.mubr.bf16.mxu0 %v1472
    %1754 = vmatmul.mubr.bf16.gmra.mrb[0].mxu0 %v1471
    %v1755 = vpop.f32.mrb[0].mxu0
    %v1756 = vadd.f32 0.0, %v1755
    %v1757 = vpop.f32.mrb[0].mxu0
    %v1758 = vadd.f32 0.0, %v1757
    %v1759 = vpop.f32.mrb[0].mxu0
    %v1760 = vpop.f32.mrb[0].mxu0
    %1761 = vdwg.mxu0
    %1762 = vmatprep.subr.bf16.mxu0 %v1350
    %1763 = vmatpush1.bf16.msra.mxu0 %v1349
    %1764 = vmatprep.subr.bf16.mxu0 %v1358
    %1765 = vmatpush1.bf16.msra.mxu0 %v1357
    %1766 = vmatprep.subr.bf16.mxu0 %v1366
    %1767 = vmatpush1.bf16.msra.mxu0 %v1365
    %1768 = vmatprep.subr.bf16.mxu0 %v1374
    %1769 = vmatpush1.bf16.msra.mxu0 %v1373
    %1770 = vmatprep.subr.bf16.mxu0 %v1382
    %1771 = vmatpush1.bf16.msra.mxu0 %v1381
    %1772 = vmatprep.subr.bf16.mxu0 %v1390
    %1773 = vmatpush1.bf16.msra.mxu0 %v1389
    %1774 = vmatprep.subr.bf16.mxu0 %v1398
    %1775 = vmatpush1.bf16.msra.mxu0 %v1397
    %1776 = vmatprep.subr.bf16.mxu0 %v1406
    %1777 = vmatpush1.bf16.msra.mxu0 %v1405
    %1778 = vmatprep.subr.bf16.mxu0 %v1414
    %1779 = vmatpush1.bf16.msra.mxu0 %v1413
    %1780 = vmatprep.subr.bf16.mxu0 %v1422
    %1781 = vmatpush1.bf16.msra.mxu0 %v1421
    %1782 = vmatprep.subr.bf16.mxu0 %v1430
    %1783 = vmatpush1.bf16.msra.mxu0 %v1429
    %1784 = vmatprep.subr.bf16.mxu0 %v1438
    %1785 = vmatpush1.bf16.msra.mxu0 %v1437
    %1786 = vmatprep.subr.bf16.mxu0 %v1446
    %1787 = vmatpush1.bf16.msra.mxu0 %v1445
    %1788 = vmatprep.subr.bf16.mxu0 %v1454
    %1789 = vmatpush1.bf16.msra.mxu0 %v1453
    %1790 = vmatprep.subr.bf16.mxu0 %v1462
    %1791 = vmatpush1.bf16.msra.mxu0 %v1461
    %1792 = vmatprep.subr.bf16.mxu0 %v1470
    %1793 = vmatpush1.bf16.msra.mxu0 %v1469
    %1794 = vmatprep.mubr.bf16.mxu0 %v1474
    %1795 = vmatmul.mubr.bf16.gmra.mrb[0].mxu0 %v1473
    %v1796 = vpop.f32.mrb[0].mxu0
    %v1797 = vadd.f32 %v1756, %v1796
    %v1798 = vpop.f32.mrb[0].mxu0
    %v1799 = vadd.f32 %v1758, %v1798
    %v1800 = vpop.f32.mrb[0].mxu0
    %v1801 = vpop.f32.mrb[0].mxu0
    %1802 = vdwg.mxu0
    %v1803 = vld [vmem:[#allocation10 + $0xc] sm:$0xff]
    %v1805 = vlaneseq
    %v1806 = vshrl.u32 %v1805, 7
    %v1807 = vsub.s32 0, %v1806
    %v1808 = vrot.slane %v1803, %v1807
    %v1809 = vlaneseq
    %v1810 = vshrl.u32 %v1809, 7
    %v1811 = vsub.s32 1, %v1810
    %v1812 = vrot.slane %v1803, %v1811
    %v1813 = vlaneseq
    %v1814 = vshrl.u32 %v1813, 7
    %v1815 = vsub.s32 2, %v1814
    %v1816 = vrot.slane %v1803, %v1815
    %v1817 = vlaneseq
    %v1818 = vshrl.u32 %v1817, 7
    %v1819 = vsub.s32 3, %v1818
    %v1820 = vrot.slane %v1803, %v1819
    %v1821 = vlaneseq
    %v1822 = vshrl.u32 %v1821, 7
    %v1823 = vsub.s32 4, %v1822
    %v1824 = vrot.slane %v1803, %v1823
    %v1825 = vlaneseq
    %v1826 = vshrl.u32 %v1825, 7
    %v1827 = vsub.s32 5, %v1826
    %v1828 = vrot.slane %v1803, %v1827
    %v1829 = vlaneseq
    %v1830 = vshrl.u32 %v1829, 7
    %v1831 = vsub.s32 6, %v1830
    %v1832 = vrot.slane %v1803, %v1831
    %v1833 = vlaneseq
    %v1834 = vshrl.u32 %v1833, 7
    %v1835 = vsub.s32 7, %v1834
    %v1836 = vrot.slane %v1803, %v1835
    %v1845 = vmul.f32 %v1551, %v1808
    %v1846 = vmul.f32 %v1553, %v1812
    %v1847 = vmul.f32 %v1633, %v1816
    %v1848 = vmul.f32 %v1635, %v1820
    %v1849 = vmul.f32 %v1715, %v1824
    %v1850 = vmul.f32 %v1717, %v1828
    %v1851 = vmul.f32 %v1797, %v1832
    %v1852 = vmul.f32 %v1799, %v1836
    %v1853 = vld [vmem:[#allocation11 + $0xc] sm:$0xff]
    %v1855 = vlaneseq
    %v1856 = vshrl.u32 %v1855, 7
    %v1857 = vsub.s32 0, %v1856
    %v1858 = vrot.slane %v1853, %v1857
    %v1859 = vlaneseq
    %v1860 = vshrl.u32 %v1859, 7
    %v1861 = vsub.s32 1, %v1860
    %v1862 = vrot.slane %v1853, %v1861
    %v1863 = vlaneseq
    %v1864 = vshrl.u32 %v1863, 7
    %v1865 = vsub.s32 2, %v1864
    %v1866 = vrot.slane %v1853, %v1865
    %v1867 = vlaneseq
    %v1868 = vshrl.u32 %v1867, 7
    %v1869 = vsub.s32 3, %v1868
    %v1870 = vrot.slane %v1853, %v1869
    %v1871 = vlaneseq
    %v1872 = vshrl.u32 %v1871, 7
    %v1873 = vsub.s32 4, %v1872
    %v1874 = vrot.slane %v1853, %v1873
    %v1875 = vlaneseq
    %v1876 = vshrl.u32 %v1875, 7
    %v1877 = vsub.s32 5, %v1876
    %v1878 = vrot.slane %v1853, %v1877
    %v1879 = vlaneseq
    %v1880 = vshrl.u32 %v1879, 7
    %v1881 = vsub.s32 6, %v1880
    %v1882 = vrot.slane %v1853, %v1881
    %v1883 = vlaneseq
    %v1884 = vshrl.u32 %v1883, 7
    %v1885 = vsub.s32 7, %v1884
    %v1886 = vrot.slane %v1853, %v1885
    %v1895 = vadd.f32 %v1845, %v1858
    %v1896 = vadd.f32 %v1846, %v1862
    %v1897 = vadd.f32 %v1847, %v1866
    %v1898 = vadd.f32 %v1848, %v1870
    %v1899 = vadd.f32 %v1849, %v1874
    %v1900 = vadd.f32 %v1850, %v1878
    %v1901 = vadd.f32 %v1851, %v1882
    %v1902 = vadd.f32 %v1852, %v1886
    %v1903 = vmax.f32 %v1895, 0.0
    %v1904 = vmax.f32 %v1896, 0.0
    %v1905 = vmax.f32 %v1897, 0.0
    %v1906 = vmax.f32 %v1898, 0.0
    %v1907 = vmax.f32 %v1899, 0.0
    %v1908 = vmax.f32 %v1900, 0.0
    %v1909 = vmax.f32 %v1901, 0.0
    %v1910 = vmax.f32 %v1902, 0.0
    %v1911 = vld [vmem:[#allocation8] sm:$0xff]
    %v1912 = vld [vmem:[#allocation8 + $0x8] sm:$0xff]
    %v1913 = vld [vmem:[#allocation8 + $0x10] sm:$0xff]
    %v1914 = vld [vmem:[#allocation8 + $0x18] sm:$0xff]
    %v1915 = vld [vmem:[#allocation8 + $0x20] sm:$0xff]
    %v1916 = vld [vmem:[#allocation8 + $0x28] sm:$0xff]
    %v1917 = vld [vmem:[#allocation8 + $0x30] sm:$0xff]
    %v1918 = vld [vmem:[#allocation8 + $0x38] sm:$0xff]
    %v1919 = vld [vmem:[#allocation8 + $0x40] sm:$0xff]
    %v1920 = vld [vmem:[#allocation8 + $0x48] sm:$0xff]
    %v1921 = vld [vmem:[#allocation8 + $0x50] sm:$0xff]
    %v1922 = vld [vmem:[#allocation8 + $0x58] sm:$0xff]
    %v1923 = vld [vmem:[#allocation8 + $0x60] sm:$0xff]
    %v1924 = vld [vmem:[#allocation8 + $0x68] sm:$0xff]
    %v1925 = vld [vmem:[#allocation8 + $0x70] sm:$0xff]
    %v1926 = vld [vmem:[#allocation8 + $0x78] sm:$0xff]
    %v1927 = vld [vmem:[#allocation8 + $0x80] sm:$0xff]
    %v1928 = vld [vmem:[#allocation8 + $0x88] sm:$0xff]
    %v1929 = vld [vmem:[#allocation8 + $0x90] sm:$0xff]
    %v1930 = vld [vmem:[#allocation8 + $0x98] sm:$0xff]
    %v1931 = vld [vmem:[#allocation8 + $0xa0] sm:$0xff]
    %v1932 = vld [vmem:[#allocation8 + $0xa8] sm:$0xff]
    %v1933 = vld [vmem:[#allocation8 + $0xb0] sm:$0xff]
    %v1934 = vld [vmem:[#allocation8 + $0xb8] sm:$0xff]
    %v1935 = vld [vmem:[#allocation8 + $0xc0] sm:$0xff]
    %v1936 = vld [vmem:[#allocation8 + $0xc8] sm:$0xff]
    %v1937 = vld [vmem:[#allocation8 + $0xd0] sm:$0xff]
    %v1938 = vld [vmem:[#allocation8 + $0xd8] sm:$0xff]
    %v1939 = vld [vmem:[#allocation8 + $0xe0] sm:$0xff]
    %v1940 = vld [vmem:[#allocation8 + $0xe8] sm:$0xff]
    %v1941 = vld [vmem:[#allocation8 + $0xf0] sm:$0xff]
    %v1942 = vld [vmem:[#allocation8 + $0xf8] sm:$0xff]
    %v1943 = vunpack.c.l.s8.bf16 %v1911
    %v1944 = vunpack.c.h.s8.bf16 %v1911
    %v1945 = vunpack.c.l.s8.bf16 %v1912
    %v1946 = vunpack.c.h.s8.bf16 %v1912
    %v1947 = vunpack.c.l.s8.bf16 %v1913
    %v1948 = vunpack.c.h.s8.bf16 %v1913
    %v1949 = vunpack.c.l.s8.bf16 %v1914
    %v1950 = vunpack.c.h.s8.bf16 %v1914
    %v1951 = vunpack.c.l.s8.bf16 %v1915
    %v1952 = vunpack.c.h.s8.bf16 %v1915
    %v1953 = vunpack.c.l.s8.bf16 %v1916
    %v1954 = vunpack.c.h.s8.bf16 %v1916
    %v1955 = vunpack.c.l.s8.bf16 %v1917
    %v1956 = vunpack.c.h.s8.bf16 %v1917
    %v1957 = vunpack.c.l.s8.bf16 %v1918
    %v1958 = vunpack.c.h.s8.bf16 %v1918
    %v1959 = vunpack.c.l.s8.bf16 %v1919
    %v1960 = vunpack.c.h.s8.bf16 %v1919
    %v1961 = vunpack.c.l.s8.bf16 %v1920
    %v1962 = vunpack.c.h.s8.bf16 %v1920
    %v1963 = vunpack.c.l.s8.bf16 %v1921
    %v1964 = vunpack.c.h.s8.bf16 %v1921
    %v1965 = vunpack.c.l.s8.bf16 %v1922
    %v1966 = vunpack.c.h.s8.bf16 %v1922
    %v1967 = vunpack.c.l.s8.bf16 %v1923
    %v1968 = vunpack.c.h.s8.bf16 %v1923
    %v1969 = vunpack.c.l.s8.bf16 %v1924
    %v1970 = vunpack.c.h.s8.bf16 %v1924
    %v1971 = vunpack.c.l.s8.bf16 %v1925
    %v1972 = vunpack.c.h.s8.bf16 %v1925
    %v1973 = vunpack.c.l.s8.bf16 %v1926
    %v1974 = vunpack.c.h.s8.bf16 %v1926
    %v1975 = vunpack.c.l.s8.bf16 %v1927
    %v1976 = vunpack.c.h.s8.bf16 %v1927
    %v1977 = vunpack.c.l.s8.bf16 %v1928
    %v1978 = vunpack.c.h.s8.bf16 %v1928
    %v1979 = vunpack.c.l.s8.bf16 %v1929
    %v1980 = vunpack.c.h.s8.bf16 %v1929
    %v1981 = vunpack.c.l.s8.bf16 %v1930
    %v1982 = vunpack.c.h.s8.bf16 %v1930
    %v1983 = vunpack.c.l.s8.bf16 %v1931
    %v1984 = vunpack.c.h.s8.bf16 %v1931
    %v1985 = vunpack.c.l.s8.bf16 %v1932
    %v1986 = vunpack.c.h.s8.bf16 %v1932
    %v1987 = vunpack.c.l.s8.bf16 %v1933
    %v1988 = vunpack.c.h.s8.bf16 %v1933
    %v1989 = vunpack.c.l.s8.bf16 %v1934
    %v1990 = vunpack.c.h.s8.bf16 %v1934
    %v1991 = vunpack.c.l.s8.bf16 %v1935
    %v1992 = vunpack.c.h.s8.bf16 %v1935
    %v1993 = vunpack.c.l.s8.bf16 %v1936
    %v1994 = vunpack.c.h.s8.bf16 %v1936
    %v1995 = vunpack.c.l.s8.bf16 %v1937
    %v1996 = vunpack.c.h.s8.bf16 %v1937
    %v1997 = vunpack.c.l.s8.bf16 %v1938
    %v1998 = vunpack.c.h.s8.bf16 %v1938
    %v1999 = vunpack.c.l.s8.bf16 %v1939
    %v2000 = vunpack.c.h.s8.bf16 %v1939
    %v2001 = vunpack.c.l.s8.bf16 %v1940
    %v2002 = vunpack.c.h.s8.bf16 %v1940
    %v2003 = vunpack.c.l.s8.bf16 %v1941
    %v2004 = vunpack.c.h.s8.bf16 %v1941
    %v2005 = vunpack.c.l.s8.bf16 %v1942
    %v2006 = vunpack.c.h.s8.bf16 %v1942
    %v2007 = vpack.c.bf16 %v1903, %v1903
    %v2008 = vpack.c.bf16 %v1904, %v1904
    %v2009 = vpack.c.bf16 %v1905, %v1905
    %v2010 = vpack.c.bf16 %v1906, %v1906
    %v2011 = vpack.c.bf16 %v1907, %v1907
    %v2012 = vpack.c.bf16 %v1908, %v1908
    %v2013 = vpack.c.bf16 %v1909, %v1909
    %v2014 = vpack.c.bf16 %v1910, %v1910
    %2015 = vmatprep.subr.bf16.mxu0 0
    %2016 = vmatpush1.bf16.msra.mxu0 %v1943
    %2017 = vmatprep.subr.bf16.mxu0 0
    %2018 = vmatpush1.bf16.msra.mxu0 %v1944
    %2019 = vmatprep.subr.bf16.mxu0 0
    %2020 = vmatpush1.bf16.msra.mxu0 %v1945
    %2021 = vmatprep.subr.bf16.mxu0 0
    %2022 = vmatpush1.bf16.msra.mxu0 %v1946
    %2023 = vmatprep.subr.bf16.mxu0 0
    %2024 = vmatpush1.bf16.msra.mxu0 %v1947
    %2025 = vmatprep.subr.bf16.mxu0 0
    %2026 = vmatpush1.bf16.msra.mxu0 %v1948
    %2027 = vmatprep.subr.bf16.mxu0 0
    %2028 = vmatpush1.bf16.msra.mxu0 %v1949
    %2029 = vmatprep.subr.bf16.mxu0 0
    %2030 = vmatpush1.bf16.msra.mxu0 %v1950
    %2031 = vmatprep.subr.bf16.mxu0 0
    %2032 = vmatpush1.bf16.msra.mxu0 %v1951
    %2033 = vmatprep.subr.bf16.mxu0 0
    %2034 = vmatpush1.bf16.msra.mxu0 %v1952
    %2035 = vmatprep.subr.bf16.mxu0 0
    %2036 = vmatpush1.bf16.msra.mxu0 %v1953
    %2037 = vmatprep.subr.bf16.mxu0 0
    %2038 = vmatpush1.bf16.msra.mxu0 %v1954
    %2039 = vmatprep.subr.bf16.mxu0 0
    %2040 = vmatpush1.bf16.msra.mxu0 %v1955
    %2041 = vmatprep.subr.bf16.mxu0 0
    %2042 = vmatpush1.bf16.msra.mxu0 %v1956
    %2043 = vmatprep.subr.bf16.mxu0 0
    %2044 = vmatpush1.bf16.msra.mxu0 %v1957
    %2045 = vmatprep.subr.bf16.mxu0 0
    %2046 = vmatpush1.bf16.msra.mxu0 %v1958
    %2047 = vmatprep.mubr.bf16.mxu0 %v2008
    %2048 = vmatmul.mubr.bf16.gmra.mrb[0].mxu0 %v2007
    %v2049 = vpop.f32.mrb[0].mxu0
    %v2050 = vadd.f32 0.0, %v2049
    %v2051 = vpop.f32.mrb[0].mxu0
    %v2052 = vpop.f32.mrb[0].mxu0
    %v2053 = vpop.f32.mrb[0].mxu0
    %2054 = vdwg.mxu0
    %2055 = vmatprep.subr.bf16.mxu0 0
    %2056 = vmatpush1.bf16.msra.mxu0 %v1959
    %2057 = vmatprep.subr.bf16.mxu0 0
    %2058 = vmatpush1.bf16.msra.mxu0 %v1960
    %2059 = vmatprep.subr.bf16.mxu0 0
    %2060 = vmatpush1.bf16.msra.mxu0 %v1961
    %2061 = vmatprep.subr.bf16.mxu0 0
    %2062 = vmatpush1.bf16.msra.mxu0 %v1962
    %2063 = vmatprep.subr.bf16.mxu0 0
    %2064 = vmatpush1.bf16.msra.mxu0 %v1963
    %2065 = vmatprep.subr.bf16.mxu0 0
    %2066 = vmatpush1.bf16.msra.mxu0 %v1964
    %2067 = vmatprep.subr.bf16.mxu0 0
    %2068 = vmatpush1.bf16.msra.mxu0 %v1965
    %2069 = vmatprep.subr.bf16.mxu0 0
    %2070 = vmatpush1.bf16.msra.mxu0 %v1966
    %2071 = vmatprep.subr.bf16.mxu0 0
    %2072 = vmatpush1.bf16.msra.mxu0 %v1967
    %2073 = vmatprep.subr.bf16.mxu0 0
    %2074 = vmatpush1.bf16.msra.mxu0 %v1968
    %2075 = vmatprep.subr.bf16.mxu0 0
    %2076 = vmatpush1.bf16.msra.mxu0 %v1969
    %2077 = vmatprep.subr.bf16.mxu0 0
    %2078 = vmatpush1.bf16.msra.mxu0 %v1970
    %2079 = vmatprep.subr.bf16.mxu0 0
    %2080 = vmatpush1.bf16.msra.mxu0 %v1971
    %2081 = vmatprep.subr.bf16.mxu0 0
    %2082 = vmatpush1.bf16.msra.mxu0 %v1972
    %2083 = vmatprep.subr.bf16.mxu0 0
    %2084 = vmatpush1.bf16.msra.mxu0 %v1973
    %2085 = vmatprep.subr.bf16.mxu0 0
    %2086 = vmatpush1.bf16.msra.mxu0 %v1974
    %2087 = vmatprep.mubr.bf16.mxu0 %v2010
    %2088 = vmatmul.mubr.bf16.gmra.mrb[0].mxu0 %v2009
    %v2089 = vpop.f32.mrb[0].mxu0
    %v2090 = vadd.f32 %v2050, %v2089
    %v2091 = vpop.f32.mrb[0].mxu0
    %v2092 = vpop.f32.mrb[0].mxu0
    %v2093 = vpop.f32.mrb[0].mxu0
    %2094 = vdwg.mxu0
    %2095 = vmatprep.subr.bf16.mxu0 0
    %2096 = vmatpush1.bf16.msra.mxu0 %v1975
    %2097 = vmatprep.subr.bf16.mxu0 0
    %2098 = vmatpush1.bf16.msra.mxu0 %v1976
    %2099 = vmatprep.subr.bf16.mxu0 0
    %2100 = vmatpush1.bf16.msra.mxu0 %v1977
    %2101 = vmatprep.subr.bf16.mxu0 0
    %2102 = vmatpush1.bf16.msra.mxu0 %v1978
    %2103 = vmatprep.subr.bf16.mxu0 0
    %2104 = vmatpush1.bf16.msra.mxu0 %v1979
    %2105 = vmatprep.subr.bf16.mxu0 0
    %2106 = vmatpush1.bf16.msra.mxu0 %v1980
    %2107 = vmatprep.subr.bf16.mxu0 0
    %2108 = vmatpush1.bf16.msra.mxu0 %v1981
    %2109 = vmatprep.subr.bf16.mxu0 0
    %2110 = vmatpush1.bf16.msra.mxu0 %v1982
    %2111 = vmatprep.subr.bf16.mxu0 0
    %2112 = vmatpush1.bf16.msra.mxu0 %v1983
    %2113 = vmatprep.subr.bf16.mxu0 0
    %2114 = vmatpush1.bf16.msra.mxu0 %v1984
    %2115 = vmatprep.subr.bf16.mxu0 0
    %2116 = vmatpush1.bf16.msra.mxu0 %v1985
    %2117 = vmatprep.subr.bf16.mxu0 0
    %2118 = vmatpush1.bf16.msra.mxu0 %v1986
    %2119 = vmatprep.subr.bf16.mxu0 0
    %2120 = vmatpush1.bf16.msra.mxu0 %v1987
    %2121 = vmatprep.subr.bf16.mxu0 0
    %2122 = vmatpush1.bf16.msra.mxu0 %v1988
    %2123 = vmatprep.subr.bf16.mxu0 0
    %2124 = vmatpush1.bf16.msra.mxu0 %v1989
    %2125 = vmatprep.subr.bf16.mxu0 0
    %2126 = vmatpush1.bf16.msra.mxu0 %v1990
    %2127 = vmatprep.mubr.bf16.mxu0 %v2012
    %2128 = vmatmul.mubr.bf16.gmra.mrb[0].mxu0 %v2011
    %v2129 = vpop.f32.mrb[0].mxu0
    %v2130 = vadd.f32 %v2090, %v2129
    %v2131 = vpop.f32.mrb[0].mxu0
    %v2132 = vpop.f32.mrb[0].mxu0
    %v2133 = vpop.f32.mrb[0].mxu0
    %2134 = vdwg.mxu0
    %2135 = vmatprep.subr.bf16.mxu0 0
    %2136 = vmatpush1.bf16.msra.mxu0 %v1991
    %2137 = vmatprep.subr.bf16.mxu0 0
    %2138 = vmatpush1.bf16.msra.mxu0 %v1992
    %2139 = vmatprep.subr.bf16.mxu0 0
    %2140 = vmatpush1.bf16.msra.mxu0 %v1993
    %2141 = vmatprep.subr.bf16.mxu0 0
    %2142 = vmatpush1.bf16.msra.mxu0 %v1994
    %2143 = vmatprep.subr.bf16.mxu0 0
    %2144 = vmatpush1.bf16.msra.mxu0 %v1995
    %2145 = vmatprep.subr.bf16.mxu0 0
    %2146 = vmatpush1.bf16.msra.mxu0 %v1996
    %2147 = vmatprep.subr.bf16.mxu0 0
    %2148 = vmatpush1.bf16.msra.mxu0 %v1997
    %2149 = vmatprep.subr.bf16.mxu0 0
    %2150 = vmatpush1.bf16.msra.mxu0 %v1998
    %2151 = vmatprep.subr.bf16.mxu0 0
    %2152 = vmatpush1.bf16.msra.mxu0 %v1999
    %2153 = vmatprep.subr.bf16.mxu0 0
    %2154 = vmatpush1.bf16.msra.mxu0 %v2000
    %2155 = vmatprep.subr.bf16.mxu0 0
    %2156 = vmatpush1.bf16.msra.mxu0 %v2001
    %2157 = vmatprep.subr.bf16.mxu0 0
    %2158 = vmatpush1.bf16.msra.mxu0 %v2002
    %2159 = vmatprep.subr.bf16.mxu0 0
    %2160 = vmatpush1.bf16.msra.mxu0 %v2003
    %2161 = vmatprep.subr.bf16.mxu0 0
    %2162 = vmatpush1.bf16.msra.mxu0 %v2004
    %2163 = vmatprep.subr.bf16.mxu0 0
    %2164 = vmatpush1.bf16.msra.mxu0 %v2005
    %2165 = vmatprep.subr.bf16.mxu0 0
    %2166 = vmatpush1.bf16.msra.mxu0 %v2006
    %2167 = vmatprep.mubr.bf16.mxu0 %v2014
    %2168 = vmatmul.mubr.bf16.gmra.mrb[0].mxu0 %v2013
    %v2169 = vpop.f32.mrb[0].mxu0
    %v2170 = vadd.f32 %v2130, %v2169
    %v2171 = vpop.f32.mrb[0].mxu0
    %v2172 = vpop.f32.mrb[0].mxu0
    %v2173 = vpop.f32.mrb[0].mxu0
    %2174 = vdwg.mxu0
    %v2175 = vld [vmem:[#allocation10 + $0x14] sm:$0x1]
    %v2177 = vlaneseq
    %v2178 = vshrl.u32 %v2177, 7
    %v2179 = vsub.s32 0, %v2178
    %v2180 = vrot.slane %v2175, %v2179
    %v2182 = vmul.f32 %v2170, %v2180
    %v2183 = vld [vmem:[#allocation11 + $0x14] sm:$0x1]
    %v2185 = vlaneseq
    %v2186 = vshrl.u32 %v2185, 7
    %v2187 = vsub.s32 0, %v2186
    %v2188 = vrot.slane %v2183, %v2187
    %v2190 = vadd.f32 %v2182, %v2188
    %2191 = vadd.xlane.f32.xlu0 %v2190
    %v2192 = vpop.xlane.xlu0 %2191
    %v2193 = vsub.f32 %v2192, %v2190
    %v2194 = vmul.f32 %v2193, 0.25
    %v2195 = vsub.f32 %v2190, %v2194
    %2197 = vset.pattern.permute.xlu0 4
    %2198 = vperm.xlu0 %2197, %v2195
    %v2199 = vpop.permute.xlu0 %2198
    %v2201 = vadd.f32 %v2190, %v2199
    %2202 = vst [vmem:[#allocation13] sm:$0xff] %v2201
    // Predicated region
    $region50: #{tpu_custom_call.1} parent=1 // pred_check
      _
    $region51: #{tpu_custom_call.1} parent=1 // pred_check_branch
      %2204 = sbr.rel (0) target = $region53
    $region52: #{tpu_custom_call.1} parent=1 // pred_region
      %s2206 = ssub.s32 128, 128
      %2207 = vsyncadd [#allocation4], %s2206
      %s2209 = sshll.u32 [#allocation13], 4
      %s2210 = int_to_ptr.vmem [resolvable:$true] %s2209
      %2212 = dma.vmem_to_hbm [thread:$0]  %s2210, 128, %s6, [#allocation4]
    $region53: #{tpu_custom_call.1} parent=1 // pred_fallthru
      _
    // Predicated region
    $region54: #{tpu_custom_call.1} parent=1 // pred_check
      _
    $region55: #{tpu_custom_call.1} parent=1 // pred_check_branch
      %2214 = sbr.rel (0) target = $region57
    $region56: #{tpu_custom_call.1} parent=1 // pred_region
      %2215 = dma.done [#allocation4], 128
    $region57: #{tpu_custom_call.1} parent=1 // pred_fallthru
      _
    %2216 = vsyncpa [#allocation3], 1
    %2217 = vsyncpa [#allocation6], 1
    %2218 = vsyncpa [#allocation9], 1
    %2219 = vsyncpa [#allocation12], 1
    %2220 = vsyncpa [#allocation4], 1

</llo_original>
